<compile_context>
chip_gen: v7x
topology: tpu7x:2x2x1
jax: 0.10.0
libtpu: 0.0.40
codegen_flags: <defaults>
</compile_context>

<pallas_src>
import math
from functools import partial

import jax
import jax.numpy as jnp
from jax import lax
from jax.experimental import pallas as pl
from jax.experimental.pallas import tpu as pltpu

LN_EPS = 1e-5
ATTN_NEG_INF = -10000.0
VMEM_LIMIT = 48 * 1024 * 1024     # leave headroom below the 64 MiB physical VMEM on v7x

# Desired tile sizes (clamped so they always divide the actual dims).
TOKEN_TILE = 512      # rows of the flattened (B*S, ...) activation matrices
N_TILE = 768          # output-feature tile (multiple of 256 -> full MXU width on v6e/v7x)
K_TILE = 768          # contraction tile (= H for real GPT-2)
ATTN_TILE = 256       # flash-attention q/kv tile (all heads processed per step)


def _pick_tile(dim, desired, aligns):
    """Largest tile <= desired that divides dim and is a multiple of one of `aligns`
    (tried in priority order); falls back to the full dim."""
    if dim <= desired:
        return dim
    for align in aligns:
        if align > desired or dim % align != 0:
            continue
        t = (desired // align) * align
        while t >= align:
            if dim % t == 0:
                return t
            t -= align
    return dim


# ---------------------------------------------------------------------------
# In-kernel helpers
# ---------------------------------------------------------------------------
def _gelu_exact(x):
    # nn.GELU() default ('none' approximation): 0.5 * x * (1 + erf(x / sqrt(2)))
    return 0.5 * x * (1.0 + lax.erf(x * (1.0 / math.sqrt(2.0))))


# ---------------------------------------------------------------------------
# Standalone LayerNorm kernel (only used once, on the embedding stream)
# ---------------------------------------------------------------------------
def _layernorm_kernel(x_ref, g_ref, b_ref, o_ref):
    x = x_ref[...].astype(jnp.float32)
    mean = jnp.mean(x, axis=-1, keepdims=True)
    var = jnp.mean(jnp.square(x - mean), axis=-1, keepdims=True)
    y = (x - mean) * lax.rsqrt(var + LN_EPS)
    o_ref[...] = (y * g_ref[...] + b_ref[...]).astype(o_ref.dtype)


def layernorm(x, gamma, beta, out_dtype=jnp.bfloat16):
    M, H = x.shape
    tm = _pick_tile(M, TOKEN_TILE, (8,))
    return pl.pallas_call(
        _layernorm_kernel,
        out_shape=jax.ShapeDtypeStruct((M, H), out_dtype),
        grid=(M // tm,),
        in_specs=[
            pl.BlockSpec((tm, H), lambda i: (i, 0)),
            pl.BlockSpec((1, H), lambda i: (0, 0)),
            pl.BlockSpec((1, H), lambda i: (0, 0)),
        ],
        out_specs=pl.BlockSpec((tm, H), lambda i: (i, 0)),
        compiler_params=pltpu.CompilerParams(
            dimension_semantics=("parallel",),
            vmem_limit_bytes=VMEM_LIMIT),
    )(x, gamma, beta)


# ---------------------------------------------------------------------------
# Tiled linear kernel: y = [gelu](x @ W + b)
# ---------------------------------------------------------------------------
def _linear_kernel(x_ref, w_ref, b_ref, o_ref, acc_ref, *, activation):
    k = pl.program_id(2)

    @pl.when(k == 0)
    def _():
        acc_ref[...] = jnp.zeros(acc_ref.shape, acc_ref.dtype)

    acc_ref[...] += jnp.dot(x_ref[...], w_ref[...],
                            preferred_element_type=jnp.float32)

    @pl.when(k == pl.num_programs(2) - 1)
    def _():
        y = acc_ref[...] + b_ref[...].astype(jnp.float32)
        if activation == "gelu":
            y = _gelu_exact(y)
        o_ref[...] = y.astype(o_ref.dtype)


def linear(x, w, b, *, activation=None, out_dtype=jnp.bfloat16):
    M, K = x.shape
    Kw, N = w.shape
    assert K == Kw
    tm = _pick_tile(M, TOKEN_TILE, (8,))
    tn = _pick_tile(N, N_TILE, (256, 128))
    tk = _pick_tile(K, K_TILE, (256, 128))
    grid = (M // tm, N // tn, K // tk)

    bytes_accessed = (x.size * x.dtype.itemsize + w.size * w.dtype.itemsize
                      + b.size * b.dtype.itemsize
                      + M * N * jnp.dtype(out_dtype).itemsize)
    cost = pl.CostEstimate(
        flops=2 * M * N * K,
        transcendentals=(M * N if activation == "gelu" else 0),
        bytes_accessed=int(bytes_accessed))

    return pl.pallas_call(
        partial(_linear_kernel, activation=activation),
        out_shape=jax.ShapeDtypeStruct((M, N), out_dtype),
        grid=grid,
        in_specs=[
            pl.BlockSpec((tm, tk), lambda i, j, k: (i, k)),
            pl.BlockSpec((tk, tn), lambda i, j, k: (k, j)),
            pl.BlockSpec((1, tn), lambda i, j, k: (0, j)),
        ],
        out_specs=pl.BlockSpec((tm, tn), lambda i, j, k: (i, j)),
        scratch_shapes=[pltpu.VMEM((tm, tn), jnp.float32)],
        compiler_params=pltpu.CompilerParams(
            dimension_semantics=("parallel", "parallel", "arbitrary"),
            vmem_limit_bytes=VMEM_LIMIT),
        cost_estimate=cost,
    )(x, w, b)


# ---------------------------------------------------------------------------
# Fused linear + residual + LayerNorm kernel (output width == H, tn = full H)
#   y  = x @ W + b + residual          (f32 residual stream)
#   h  = LayerNorm(y) * gamma + beta   (bf16, feeds the next matmul)
# ---------------------------------------------------------------------------
def _linear_res_ln_kernel(x_ref, w_ref, b_ref, r_ref, g_ref, bb_ref,
                          y_ref, h_ref, acc_ref):
    k = pl.program_id(1)

    @pl.when(k == 0)
    def _():
        acc_ref[...] = jnp.zeros(acc_ref.shape, acc_ref.dtype)

    acc_ref[...] += jnp.dot(x_ref[...], w_ref[...],
                            preferred_element_type=jnp.float32)

    @pl.when(k == pl.num_programs(1) - 1)
    def _():
        y = acc_ref[...] + b_ref[...].astype(jnp.float32) + r_ref[...]
        y_ref[...] = y
        mean = jnp.mean(y, axis=-1, keepdims=True)
        var = jnp.mean(jnp.square(y - mean), axis=-1, keepdims=True)
        ln = (y - mean) * lax.rsqrt(var + LN_EPS)
        h_ref[...] = (ln * g_ref[...] + bb_ref[...]).astype(h_ref.dtype)


def linear_residual_ln(x, w, b, residual, gamma, beta):
    M, K = x.shape
    Kw, N = w.shape
    assert K == Kw and residual.shape == (M, N)
    tm = _pick_tile(M, TOKEN_TILE, (8,))
    tk = _pick_tile(K, K_TILE, (256, 128))
    grid = (M // tm, K // tk)

    bytes_accessed = (x.size * x.dtype.itemsize + w.size * w.dtype.itemsize
                      + b.size * b.dtype.itemsize + residual.size * 4
                      + M * N * 4 + M * N * 2)
    cost = pl.CostEstimate(flops=2 * M * N * K, transcendentals=0,
                           bytes_accessed=int(bytes_accessed))

    y, h = pl.pallas_call(
        _linear_res_ln_kernel,
        out_shape=(jax.ShapeDtypeStruct((M, N), jnp.float32),
                   jax.ShapeDtypeStruct((M, N), jnp.bfloat16)),
        grid=grid,
        in_specs=[
            pl.BlockSpec((tm, tk), lambda i, k: (i, k)),
            pl.BlockSpec((tk, N), lambda i, k: (k, 0)),
            pl.BlockSpec((1, N), lambda i, k: (0, 0)),
            pl.BlockSpec((tm, N), lambda i, k: (i, 0)),
            pl.BlockSpec((1, N), lambda i, k: (0, 0)),
            pl.BlockSpec((1, N), lambda i, k: (0, 0)),
        ],
        out_specs=(pl.BlockSpec((tm, N), lambda i, k: (i, 0)),
                   pl.BlockSpec((tm, N), lambda i, k: (i, 0))),
        scratch_shapes=[pltpu.VMEM((tm, N), jnp.float32)],
        compiler_params=pltpu.CompilerParams(
            dimension_semantics=("parallel", "arbitrary"),
            vmem_limit_bytes=VMEM_LIMIT),
        cost_estimate=cost,
    )(x, w, b, residual, gamma, beta)
    return y, h


# ---------------------------------------------------------------------------
# Flash-attention kernel (causal, online softmax, all heads per grid step,
# reads q/k/v straight out of the (B*S, 3*D) qkv matrix, no HBM transposes).
# ---------------------------------------------------------------------------
def _flash_attn_kernel(q_ref, k_ref, v_ref, o_ref,
                       q_scr, m_scr, l_scr, acc_scr, *, scale, nh, hs):
    qi = pl.program_id(1)
    ki = pl.program_id(2)
    tq = q_ref.shape[0]
    tk = k_ref.shape[0]

    @pl.when(ki == 0)
    def _():
        q = q_ref[...].reshape(tq, nh, hs)
        q_scr[...] = (jnp.swapaxes(q, 0, 1) * scale).astype(q_scr.dtype)   # (nh, tq, hs)
        m_scr[...] = jnp.full(m_scr.shape, -jnp.inf, m_scr.dtype)
        l_scr[...] = jnp.zeros(l_scr.shape, l_scr.dtype)
        acc_scr[...] = jnp.zeros(acc_scr.shape, acc_scr.dtype)

    def step(masked):
        k = jnp.swapaxes(k_ref[...].reshape(tk, nh, hs), 0, 1)   # (nh, tk, hs)
        v = jnp.swapaxes(v_ref[...].reshape(tk, nh, hs), 0, 1)   # (nh, tk, hs)
        s = jnp.einsum('hqd,hkd->hqk', q_scr[...], k,
                       preferred_element_type=jnp.float32)        # (nh, tq, tk)
        if masked:  # only the diagonal-intersecting tile needs the causal mask
            rows = lax.broadcasted_iota(jnp.int32, s.shape, 1)
            cols = lax.broadcasted_iota(jnp.int32, s.shape, 2)
            s = jnp.where(rows >= cols, s, ATTN_NEG_INF)
        m_prev = m_scr[...]
        m_new = jnp.maximum(m_prev, jnp.max(s, axis=-1, keepdims=True))
        alpha = jnp.exp(m_prev - m_new)
        p = jnp.exp(s - m_new)
        l_scr[...] = alpha * l_scr[...] + jnp.sum(p, axis=-1, keepdims=True)
        acc_scr[...] = alpha * acc_scr[...] + jnp.einsum(
            'hqk,hkd->hqd', p.astype(v.dtype), v,
            preferred_element_type=jnp.float32)
        m_scr[...] = m_new

    @pl.when(ki < qi)          # strictly-below-diagonal tile: no mask needed
    def _():
        step(masked=False)

    @pl.when(ki == qi)         # diagonal tile: mask, then finalize this q tile
    def _():
        step(masked=True)
        out = acc_scr[...] * pl.reciprocal(l_scr[...], approx=True)   # (nh, tq, hs)
        out = jnp.swapaxes(out, 0, 1).reshape(tq, nh * hs)
        o_ref[...] = out.astype(o_ref.dtype)
    # Tiles with ki > qi: nothing to do; the k/v index_map is clamped so no DMA is issued.


def flash_attention(qkv, B, S, num_heads, head_size):
    """qkv: (B*S, 3*D) bf16 -> (B*S, D) bf16, D = num_heads*head_size."""
    D = num_heads * head_size
    M = B * S
    assert qkv.shape == (M, 3 * D)
    T = _pick_tile(S, ATTN_TILE, (256, 128, 8))
    nrb = S // T
    grid = (B, nrb, nrb)
    scale = 1.0 / math.sqrt(head_size)

    def q_map(b, qi, ki):
        return (b * nrb + qi, 0)

    def k_map(b, qi, ki):
        return (b * nrb + jnp.minimum(ki, qi), 1)   # clamp: skipped tiles repeat -> no DMA

    def v_map(b, qi, ki):
        return (b * nrb + jnp.minimum(ki, qi), 2)

    def o_map(b, qi, ki):
        return (b * nrb + qi, 0)

    kernel = partial(_flash_attn_kernel, scale=scale, nh=num_heads, hs=head_size)
    return pl.pallas_call(
        kernel,
        out_shape=jax.ShapeDtypeStruct((M, D), jnp.bfloat16),
        grid=grid,
        in_specs=[
            pl.BlockSpec((T, D), q_map),
            pl.BlockSpec((T, D), k_map),
            pl.BlockSpec((T, D), v_map),
        ],
        out_specs=pl.BlockSpec((T, D), o_map),
        scratch_shapes=[
            pltpu.VMEM((num_heads, T, head_size), jnp.bfloat16),   # pre-scaled q (head-major)
            pltpu.VMEM((num_heads, T, 1), jnp.float32),            # running max
            pltpu.VMEM((num_heads, T, 1), jnp.float32),            # running sum
            pltpu.VMEM((num_heads, T, head_size), jnp.float32),    # output accumulator
        ],
        compiler_params=pltpu.CompilerParams(
            dimension_semantics=("parallel", "parallel", "arbitrary"),
            vmem_limit_bytes=VMEM_LIMIT),
    )(qkv, qkv, qkv)


# ---------------------------------------------------------------------------
# Full forward pass
# ---------------------------------------------------------------------------
def gpt2_forward(tokens, params, *, num_heads, head_size):
    """tokens: (B, S) int32 -> logits (B, S, vocab) float32."""
    B, S = tokens.shape
    V, H = params["wte"].shape
    pos = jnp.arange(S)
    x = params["wte"][tokens] + params["wpe"][pos][None, :, :]   # embedding gather (XLA glue)
    x = x.astype(jnp.float32).reshape(B * S, H)                  # embedding dropout = identity

    blocks = params["blocks"]
    n_layers = len(blocks)

    # Block 0's ln1 applied to the embedding stream; every later LN is fused into a matmul.
    h = layernorm(x, blocks[0]["ln1_w"], blocks[0]["ln1_b"])

    for i, blk in enumerate(blocks):
        # causal self-attention
        qkv = linear(h, blk["w_qkv"], blk["b_qkv"], out_dtype=jnp.bfloat16)   # (M, 3D) bf16
        attn = flash_attention(qkv, B, S, num_heads, head_size)              # (M, D) bf16
        x, h = linear_residual_ln(attn, blk["w_out"], blk["b_out"],
                                  residual=x,
                                  gamma=blk["ln2_w"], beta=blk["ln2_b"])     # x f32, h = ln2(x)
        # MLP
        a = linear(h, blk["w_fc1"], blk["b_fc1"],
                   activation="gelu", out_dtype=jnp.bfloat16)                 # (M, 4H) bf16
        if i + 1 < n_layers:
            ng, nb = blocks[i + 1]["ln1_w"], blocks[i + 1]["ln1_b"]
        else:
            ng, nb = params["ln_w"], params["ln_b"]
        x, h = linear_residual_ln(a, blk["w_fc2"], blk["b_fc2"],
                                  residual=x, gamma=ng, beta=nb)              # h = next LN(x)

    # Unembedding against the pre-transposed, 512-padded bf16 wte (built once at init).
    logits = linear(h, params["wte_t"], params["unembed_bias"],
                    out_dtype=jnp.float32)                                    # (M, Vpad)
    logits = logits.reshape(B, S, -1)[:, :, :V]
    return logits


# ---------------------------------------------------------------------------
# Parameter construction (deterministic, GPT2-style init)
# ---------------------------------------------------------------------------
def init_params(key, *, vocab_size, max_pos, hidden, num_heads, num_layers):
    head_size = hidden // num_heads
    D = num_heads * head_size
    std = 0.02

    def normal(k, shape, dtype=jnp.bfloat16):
        return (std * jax.random.normal(k, shape, dtype=jnp.float32)).astype(dtype)

    keys = jax.random.split(key, 2 + num_layers)
    wte = normal(keys[0], (vocab_size, hidden), jnp.float32)      # token embedding (f32 gather)
    wpe = normal(keys[1], (max_pos, hidden), jnp.float32)         # position embedding
    v_pad = ((vocab_size + 511) // 512) * 512                     # 512-multiple -> lane-dense tn
    wte_t = jnp.zeros((hidden, v_pad), jnp.bfloat16)
    wte_t = wte_t.at[:, :vocab_size].set(wte.T.astype(jnp.bfloat16))  # transpose ONCE at init

    params = {
        "wte": wte, "wpe": wpe, "wte_t": wte_t,
        "unembed_bias": jnp.zeros((1, v_pad), jnp.float32),
        "ln_w": jnp.ones((1, hidden), jnp.float32),
        "ln_b": jnp.zeros((1, hidden), jnp.float32),
        "blocks": [],
    }
    for i in range(num_layers):
        bk = jax.random.split(keys[2 + i], 4)
        params["blocks"].append({
            "ln1_w": jnp.ones((1, hidden), jnp.float32),
            "ln1_b": jnp.zeros((1, hidden), jnp.float32),
            "w_qkv": normal(bk[0], (hidden, 3 * D)),               # pre-transposed (in, out) bf16
            "b_qkv": jnp.zeros((1, 3 * D), jnp.float32),
            "w_out": normal(bk[1], (D, hidden)),
            "b_out": jnp.zeros((1, hidden), jnp.float32),
            "ln2_w": jnp.ones((1, hidden), jnp.float32),
            "ln2_b": jnp.zeros((1, hidden), jnp.float32),
            "w_fc1": normal(bk[2], (hidden, 4 * hidden)),
            "b_fc1": jnp.zeros((1, 4 * hidden), jnp.float32),
            "w_fc2": normal(bk[3], (4 * hidden, hidden)),
            "b_fc2": jnp.zeros((1, hidden), jnp.float32),
        })
    return params, head_size


if __name__ == "__main__":
    # Small config consistent with GPTConfig structure (head-dim blocks stay 128-lane aligned).
    BATCH, SEQ = 2, 8
    HIDDEN, NUM_HEADS, NUM_LAYERS = 128, 4, 2
    VOCAB, MAX_POS = 500, 16

    key = jax.random.PRNGKey(0)
    k_params, k_tok = jax.random.split(key)
    params, head_size = init_params(
        k_params, vocab_size=VOCAB, max_pos=MAX_POS,
        hidden=HIDDEN, num_heads=NUM_HEADS, num_layers=NUM_LAYERS)

    tokens = jax.random.randint(k_tok, (BATCH, SEQ), 0, VOCAB, dtype=jnp.int32)

    fwd = jax.jit(partial(gpt2_forward, num_heads=NUM_HEADS, head_size=head_size))
    logits = fwd(tokens, params)
    logits = jax.block_until_ready(logits)

    assert logits.shape == (BATCH, SEQ, VOCAB)
    assert logits.dtype == jnp.float32
    assert bool(jnp.all(jnp.isfinite(logits)))
    print("KERNEL_OK")
</pallas_src>

<mosaic_0001>
module attributes {stable_mosaic.version = 11 : i64} {
  func.func @_layernorm_kernel(%arg0: i32, %arg1: memref<16x128xf32, #tpu.memory_space<vmem>>, %arg2: memref<1x128xf32, #tpu.memory_space<vmem>>, %arg3: memref<1x128xf32, #tpu.memory_space<vmem>>, %arg4: memref<16x128xbf16, #tpu.memory_space<vmem>>) attributes {dimension_semantics = [#tpu.dimension_semantics<parallel>], iteration_bounds = array<i64: 1>, scalar_prefetch = 0 : i64, scratch_operands = 0 : i64, tpu.core_type = #tpu.core_type<tc>, window_params = [{transform_indices = @transform_0, window_bounds = array<i64: 16, 128>}, {pipeline_mode = #tpu.pipeline_mode<synchronous>, transform_indices = @transform_1, window_bounds = array<i64: 1, 128>}, {pipeline_mode = #tpu.pipeline_mode<synchronous>, transform_indices = @transform_2, window_bounds = array<i64: 1, 128>}, {transform_indices = @transform_3, window_bounds = array<i64: 16, 128>}]} {
    %c0 = arith.constant 0 : index
    %c0_0 = arith.constant 0 : index
    %0 = vector.load %arg1[%c0, %c0_0] : memref<16x128xf32, #tpu.memory_space<vmem>>, vector<16x128xf32>
    %cst = arith.constant dense<0.000000e+00> : vector<16xf32>
    %1 = vector.multi_reduction <add>, %0, %cst [1] : vector<16x128xf32> to vector<16xf32>
    %2 = vector.shape_cast %1 : vector<16xf32> to vector<16x1xf32>
    %cst_1 = arith.constant 1.280000e+02 : f32
    %3 = vector.broadcast %cst_1 : f32 to vector<16x1xf32>
    %4 = arith.divf %2, %3 : vector<16x1xf32>
    %5 = vector.broadcast %4 : vector<16x1xf32> to vector<16x128xf32>
    %6 = arith.subf %0, %5 : vector<16x128xf32>
    %7 = arith.mulf %6, %6 : vector<16x128xf32>
    %cst_2 = arith.constant dense<0.000000e+00> : vector<16xf32>
    %8 = vector.multi_reduction <add>, %7, %cst_2 [1] : vector<16x128xf32> to vector<16xf32>
    %9 = vector.shape_cast %8 : vector<16xf32> to vector<16x1xf32>
    %cst_3 = arith.constant 1.280000e+02 : f32
    %10 = vector.broadcast %cst_3 : f32 to vector<16x1xf32>
    %11 = arith.divf %9, %10 : vector<16x1xf32>
    %12 = vector.broadcast %4 : vector<16x1xf32> to vector<16x128xf32>
    %13 = arith.subf %0, %12 : vector<16x128xf32>
    %cst_4 = arith.constant 9.99999974E-6 : f32
    %14 = vector.broadcast %cst_4 : f32 to vector<16x1xf32>
    %15 = arith.addf %11, %14 : vector<16x1xf32>
    %16 = math.rsqrt %15 : vector<16x1xf32>
    %17 = vector.broadcast %16 : vector<16x1xf32> to vector<16x128xf32>
    %18 = arith.mulf %13, %17 : vector<16x128xf32>
    %c0_5 = arith.constant 0 : index
    %c0_6 = arith.constant 0 : index
    %19 = vector.load %arg2[%c0_5, %c0_6] : memref<1x128xf32, #tpu.memory_space<vmem>>, vector<1x128xf32>
    %20 = vector.broadcast %19 : vector<1x128xf32> to vector<16x128xf32>
    %21 = arith.mulf %18, %20 : vector<16x128xf32>
    %c0_7 = arith.constant 0 : index
    %c0_8 = arith.constant 0 : index
    %22 = vector.load %arg3[%c0_7, %c0_8] : memref<1x128xf32, #tpu.memory_space<vmem>>, vector<1x128xf32>
    %23 = vector.broadcast %22 : vector<1x128xf32> to vector<16x128xf32>
    %24 = arith.addf %21, %23 : vector<16x128xf32>
    %25 = arith.truncf %24 : vector<16x128xf32> to vector<16x128xbf16>
    %c0_9 = arith.constant 0 : index
    %c0_10 = arith.constant 0 : index
    %26 = vector.load %arg4[%c0_9, %c0_10] : memref<16x128xbf16, #tpu.memory_space<vmem>>, vector<16x128xbf16>
    tpu.vector_store %arg4[%c0_9, %c0_10], %25 {strides = array<i32>} : memref<16x128xbf16, #tpu.memory_space<vmem>>, vector<16x128xbf16>,
    return
  }
  func.func @transform_0(%arg0: i32) -> (i32, i32) {
    %c0_i32 = arith.constant 0 : i32
    %c0_i32_0 = arith.constant 0 : i32
    return %arg0, %c0_i32 : i32, i32
  }
  func.func @transform_1(%arg0: i32) -> (i32, i32) {
    %c0_i32 = arith.constant 0 : i32
    %c0_i32_0 = arith.constant 0 : i32
    %c0_i32_1 = arith.constant 0 : i32
    return %c0_i32, %c0_i32_0 : i32, i32
  }
  func.func @transform_2(%arg0: i32) -> (i32, i32) {
    %c0_i32 = arith.constant 0 : i32
    %c0_i32_0 = arith.constant 0 : i32
    %c0_i32_1 = arith.constant 0 : i32
    return %c0_i32, %c0_i32_0 : i32, i32
  }
  func.func @transform_3(%arg0: i32) -> (i32, i32) {
    %c0_i32 = arith.constant 0 : i32
    %c0_i32_0 = arith.constant 0 : i32
    return %arg0, %c0_i32 : i32, i32
  }
}

module attributes {stable_mosaic.version = 11 : i64} {
  func.func @_linear_kernel(%arg0: i32, %arg1: i32, %arg2: i32, %arg3: memref<16x128xbf16, #tpu.memory_space<vmem>>, %arg4: memref<128x384xbf16, #tpu.memory_space<vmem>>, %arg5: memref<1x384xf32, #tpu.memory_space<vmem>>, %arg6: memref<16x384xbf16, #tpu.memory_space<vmem>>, %arg7: memref<16x384xf32, #tpu.memory_space<vmem>>) attributes {dimension_semantics = [#tpu.dimension_semantics<parallel>, #tpu.dimension_semantics<parallel>, #tpu.dimension_semantics<arbitrary>], iteration_bounds = array<i64: 1, 1, 1>, scalar_prefetch = 0 : i64, scratch_operands = 1 : i64, tpu.core_type = #tpu.core_type<tc>, window_params = [{transform_indices = @transform_0, window_bounds = array<i64: 16, 128>}, {transform_indices = @transform_1, window_bounds = array<i64: 128, 384>}, {transform_indices = @transform_2, window_bounds = array<i64: 1, 384>}, {transform_indices = @transform_3, window_bounds = array<i64: 16, 384>}]} {
    %c0_i32 = arith.constant 0 : i32
    %0 = arith.cmpi eq, %arg2, %c0_i32 : i32
    %1 = arith.extui %0 : i1 to i32
    %c0_i32_0 = arith.constant 0 : i32
    %2 = arith.cmpi ne, %1, %c0_i32_0 : i32
    scf.if %2 {
      %cst_10 = arith.constant 0.000000e+00 : f32
      %12 = vector.broadcast %cst_10 : f32 to vector<16x384xf32>
      %c0_11 = arith.constant 0 : index
      %c0_12 = arith.constant 0 : index
      %13 = vector.load %arg7[%c0_11, %c0_12] : memref<16x384xf32, #tpu.memory_space<vmem>>, vector<16x384xf32>
      tpu.vector_store %arg7[%c0_11, %c0_12], %12 {strides = array<i32>} : memref<16x384xf32, #tpu.memory_space<vmem>>, vector<16x384xf32>,
    } else {
    }
    %c0 = arith.constant 0 : index
    %c0_1 = arith.constant 0 : index
    %3 = vector.load %arg7[%c0, %c0_1] : memref<16x384xf32, #tpu.memory_space<vmem>>, vector<16x384xf32>
    %c0_2 = arith.constant 0 : index
    %c0_3 = arith.constant 0 : index
    %4 = vector.load %arg3[%c0_2, %c0_3] : memref<16x128xbf16, #tpu.memory_space<vmem>>, vector<16x128xbf16>
    %c0_4 = arith.constant 0 : index
    %c0_5 = arith.constant 0 : index
    %5 = vector.load %arg4[%c0_4, %c0_5] : memref<128x384xbf16, #tpu.memory_space<vmem>>, vector<128x384xbf16>
    %cst = arith.constant dense<0.000000e+00> : vector<16x384xf32>
    %6 = tpu.matmul %4, %5, %cst {dimension_numbers = #tpu.dot_dimension_numbers<[1], [0], [0], [1], [0, 0, 1, 1], [], []>} : vector<16x128xbf16>, vector<128x384xbf16>, vector<16x384xf32> -> vector<16x384xf32>
    %7 = arith.addf %3, %6 : vector<16x384xf32>
    %c0_6 = arith.constant 0 : index
    %c0_7 = arith.constant 0 : index
    %8 = vector.load %arg7[%c0_6, %c0_7] : memref<16x384xf32, #tpu.memory_space<vmem>>, vector<16x384xf32>
    tpu.vector_store %arg7[%c0_6, %c0_7], %7 {strides = array<i32>} : memref<16x384xf32, #tpu.memory_space<vmem>>, vector<16x384xf32>,
    %c0_i32_8 = arith.constant 0 : i32
    %9 = arith.cmpi eq, %arg2, %c0_i32_8 : i32
    %10 = arith.extui %9 : i1 to i32
    %c0_i32_9 = arith.constant 0 : i32
    %11 = arith.cmpi ne, %10, %c0_i32_9 : i32
    scf.if %11 {
      %c0_10 = arith.constant 0 : index
      %c0_11 = arith.constant 0 : index
      %12 = vector.load %arg7[%c0_10, %c0_11] : memref<16x384xf32, #tpu.memory_space<vmem>>, vector<16x384xf32>
      %c0_12 = arith.constant 0 : index
      %c0_13 = arith.constant 0 : index
      %13 = vector.load %arg5[%c0_12, %c0_13] : memref<1x384xf32, #tpu.memory_space<vmem>>, vector<1x384xf32>
      %14 = vector.broadcast %13 : vector<1x384xf32> to vector<16x384xf32>
      %15 = arith.addf %12, %14 : vector<16x384xf32>
      %16 = arith.truncf %15 : vector<16x384xf32> to vector<16x384xbf16>
      %c0_14 = arith.constant 0 : index
      %c0_15 = arith.constant 0 : index
      %17 = vector.load %arg6[%c0_14, %c0_15] : memref<16x384xbf16, #tpu.memory_space<vmem>>, vector<16x384xbf16>
      tpu.vector_store %arg6[%c0_14, %c0_15], %16 {strides = array<i32>} : memref<16x384xbf16, #tpu.memory_space<vmem>>, vector<16x384xbf16>,
    } else {
    }
    return
  }
  func.func @transform_0(%arg0: i32, %arg1: i32, %arg2: i32) -> (i32, i32) {
    %c0_i32 = arith.constant 0 : i32
    return %arg0, %arg2 : i32, i32
  }
  func.func @transform_1(%arg0: i32, %arg1: i32, %arg2: i32) -> (i32, i32) {
    %c0_i32 = arith.constant 0 : i32
    return %arg2, %arg1 : i32, i32
  }
  func.func @transform_2(%arg0: i32, %arg1: i32, %arg2: i32) -> (i32, i32) {
    %c0_i32 = arith.constant 0 : i32
    %c0_i32_0 = arith.constant 0 : i32
    return %c0_i32, %arg1 : i32, i32
  }
  func.func @transform_3(%arg0: i32, %arg1: i32, %arg2: i32) -> (i32, i32) {
    %c0_i32 = arith.constant 0 : i32
    return %arg0, %arg1 : i32, i32
  }
}

module attributes {stable_mosaic.version = 11 : i64} {
  func.func @_linear_res_ln_kernel(%arg0: i32, %arg1: i32, %arg2: memref<16x128xbf16, #tpu.memory_space<vmem>>, %arg3: memref<128x128xbf16, #tpu.memory_space<vmem>>, %arg4: memref<1x128xf32, #tpu.memory_space<vmem>>, %arg5: memref<16x128xf32, #tpu.memory_space<vmem>>, %arg6: memref<1x128xf32, #tpu.memory_space<vmem>>, %arg7: memref<1x128xf32, #tpu.memory_space<vmem>>, %arg8: memref<16x128xf32, #tpu.memory_space<vmem>>, %arg9: memref<16x128xbf16, #tpu.memory_space<vmem>>, %arg10: memref<16x128xf32, #tpu.memory_space<vmem>>) attributes {dimension_semantics = [#tpu.dimension_semantics<parallel>, #tpu.dimension_semantics<arbitrary>], iteration_bounds = array<i64: 1, 1>, scalar_prefetch = 0 : i64, scratch_operands = 1 : i64, tpu.core_type = #tpu.core_type<tc>, window_params = [{transform_indices = @transform_0, window_bounds = array<i64: 16, 128>}, {transform_indices = @transform_1, window_bounds = array<i64: 128, 128>}, {pipeline_mode = #tpu.pipeline_mode<synchronous>, transform_indices = @transform_2, window_bounds = array<i64: 1, 128>}, {transform_indices = @transform_3, window_bounds = array<i64: 16, 128>}, {pipeline_mode = #tpu.pipeline_mode<synchronous>, transform_indices = @transform_4, window_bounds = array<i64: 1, 128>}, {pipeline_mode = #tpu.pipeline_mode<synchronous>, transform_indices = @transform_5, window_bounds = array<i64: 1, 128>}, {transform_indices = @transform_6, window_bounds = array<i64: 16, 128>}, {transform_indices = @transform_7, window_bounds = array<i64: 16, 128>}]} {
    %c0_i32 = arith.constant 0 : i32
    %0 = arith.cmpi eq, %arg1, %c0_i32 : i32
    %1 = arith.extui %0 : i1 to i32
    %c0_i32_0 = arith.constant 0 : i32
    %2 = arith.cmpi ne, %1, %c0_i32_0 : i32
    scf.if %2 {
      %cst_10 = arith.constant 0.000000e+00 : f32
      %12 = vector.broadcast %cst_10 : f32 to vector<16x128xf32>
      %c0_11 = arith.constant 0 : index
      %c0_12 = arith.constant 0 : index
      %13 = vector.load %arg10[%c0_11, %c0_12] : memref<16x128xf32, #tpu.memory_space<vmem>>, vector<16x128xf32>
      tpu.vector_store %arg10[%c0_11, %c0_12], %12 {strides = array<i32>} : memref<16x128xf32, #tpu.memory_space<vmem>>, vector<16x128xf32>,
    } else {
    }
    %c0 = arith.constant 0 : index
    %c0_1 = arith.constant 0 : index
    %3 = vector.load %arg10[%c0, %c0_1] : memref<16x128xf32, #tpu.memory_space<vmem>>, vector<16x128xf32>
    %c0_2 = arith.constant 0 : index
    %c0_3 = arith.constant 0 : index
    %4 = vector.load %arg2[%c0_2, %c0_3] : memref<16x128xbf16, #tpu.memory_space<vmem>>, vector<16x128xbf16>
    %c0_4 = arith.constant 0 : index
    %c0_5 = arith.constant 0 : index
    %5 = vector.load %arg3[%c0_4, %c0_5] : memref<128x128xbf16, #tpu.memory_space<vmem>>, vector<128x128xbf16>
    %cst = arith.constant dense<0.000000e+00> : vector<16x128xf32>
    %6 = tpu.matmul %4, %5, %cst {dimension_numbers = #tpu.dot_dimension_numbers<[1], [0], [0], [1], [0, 0, 1, 1], [], []>} : vector<16x128xbf16>, vector<128x128xbf16>, vector<16x128xf32> -> vector<16x128xf32>
    %7 = arith.addf %3, %6 : vector<16x128xf32>
    %c0_6 = arith.constant 0 : index
    %c0_7 = arith.constant 0 : index
    %8 = vector.load %arg10[%c0_6, %c0_7] : memref<16x128xf32, #tpu.memory_space<vmem>>, vector<16x128xf32>
    tpu.vector_store %arg10[%c0_6, %c0_7], %7 {strides = array<i32>} : memref<16x128xf32, #tpu.memory_space<vmem>>, vector<16x128xf32>,
    %c0_i32_8 = arith.constant 0 : i32
    %9 = arith.cmpi eq, %arg1, %c0_i32_8 : i32
    %10 = arith.extui %9 : i1 to i32
    %c0_i32_9 = arith.constant 0 : i32
    %11 = arith.cmpi ne, %10, %c0_i32_9 : i32
    scf.if %11 {
      %c0_10 = arith.constant 0 : index
      %c0_11 = arith.constant 0 : index
      %12 = vector.load %arg10[%c0_10, %c0_11] : memref<16x128xf32, #tpu.memory_space<vmem>>, vector<16x128xf32>
      %c0_12 = arith.constant 0 : index
      %c0_13 = arith.constant 0 : index
      %13 = vector.load %arg4[%c0_12, %c0_13] : memref<1x128xf32, #tpu.memory_space<vmem>>, vector<1x128xf32>
      %14 = vector.broadcast %13 : vector<1x128xf32> to vector<16x128xf32>
      %15 = arith.addf %12, %14 : vector<16x128xf32>
      %c0_14 = arith.constant 0 : index
      %c0_15 = arith.constant 0 : index
      %16 = vector.load %arg5[%c0_14, %c0_15] : memref<16x128xf32, #tpu.memory_space<vmem>>, vector<16x128xf32>
      %17 = arith.addf %15, %16 : vector<16x128xf32>
      %c0_16 = arith.constant 0 : index
      %c0_17 = arith.constant 0 : index
      %18 = vector.load %arg8[%c0_16, %c0_17] : memref<16x128xf32, #tpu.memory_space<vmem>>, vector<16x128xf32>
      tpu.vector_store %arg8[%c0_16, %c0_17], %17 {strides = array<i32>} : memref<16x128xf32, #tpu.memory_space<vmem>>, vector<16x128xf32>,
      %cst_18 = arith.constant dense<0.000000e+00> : vector<16xf32>
      %19 = vector.multi_reduction <add>, %17, %cst_18 [1] : vector<16x128xf32> to vector<16xf32>
      %20 = vector.shape_cast %19 : vector<16xf32> to vector<16x1xf32>
      %cst_19 = arith.constant 1.280000e+02 : f32
      %21 = vector.broadcast %cst_19 : f32 to vector<16x1xf32>
      %22 = arith.divf %20, %21 : vector<16x1xf32>
      %23 = vector.broadcast %22 : vector<16x1xf32> to vector<16x128xf32>
      %24 = arith.subf %17, %23 : vector<16x128xf32>
      %25 = arith.mulf %24, %24 : vector<16x128xf32>
      %cst_20 = arith.constant dense<0.000000e+00> : vector<16xf32>
      %26 = vector.multi_reduction <add>, %25, %cst_20 [1] : vector<16x128xf32> to vector<16xf32>
      %27 = vector.shape_cast %26 : vector<16xf32> to vector<16x1xf32>
      %cst_21 = arith.constant 1.280000e+02 : f32
      %28 = vector.broadcast %cst_21 : f32 to vector<16x1xf32>
      %29 = arith.divf %27, %28 : vector<16x1xf32>
      %30 = vector.broadcast %22 : vector<16x1xf32> to vector<16x128xf32>
      %31 = arith.subf %17, %30 : vector<16x128xf32>
      %cst_22 = arith.constant 9.99999974E-6 : f32
      %32 = vector.broadcast %cst_22 : f32 to vector<16x1xf32>
      %33 = arith.addf %29, %32 : vector<16x1xf32>
      %34 = math.rsqrt %33 : vector<16x1xf32>
      %35 = vector.broadcast %34 : vector<16x1xf32> to vector<16x128xf32>
      %36 = arith.mulf %31, %35 : vector<16x128xf32>
      %c0_23 = arith.constant 0 : index
      %c0_24 = arith.constant 0 : index
      %37 = vector.load %arg6[%c0_23, %c0_24] : memref<1x128xf32, #tpu.memory_space<vmem>>, vector<1x128xf32>
      %38 = vector.broadcast %37 : vector<1x128xf32> to vector<16x128xf32>
      %39 = arith.mulf %36, %38 : vector<16x128xf32>
      %c0_25 = arith.constant 0 : index
      %c0_26 = arith.constant 0 : index
      %40 = vector.load %arg7[%c0_25, %c0_26] : memref<1x128xf32, #tpu.memory_space<vmem>>, vector<1x128xf32>
      %41 = vector.broadcast %40 : vector<1x128xf32> to vector<16x128xf32>
      %42 = arith.addf %39, %41 : vector<16x128xf32>
      %43 = arith.truncf %42 : vector<16x128xf32> to vector<16x128xbf16>
      %c0_27 = arith.constant 0 : index
      %c0_28 = arith.constant 0 : index
      %44 = vector.load %arg9[%c0_27, %c0_28] : memref<16x128xbf16, #tpu.memory_space<vmem>>, vector<16x128xbf16>
      tpu.vector_store %arg9[%c0_27, %c0_28], %43 {strides = array<i32>} : memref<16x128xbf16, #tpu.memory_space<vmem>>, vector<16x128xbf16>,
    } else {
    }
    return
  }
  func.func @transform_0(%arg0: i32, %arg1: i32) -> (i32, i32) {
    %c0_i32 = arith.constant 0 : i32
    return %arg0, %arg1 : i32, i32
  }
  func.func @transform_1(%arg0: i32, %arg1: i32) -> (i32, i32) {
    %c0_i32 = arith.constant 0 : i32
    %c0_i32_0 = arith.constant 0 : i32
    return %arg1, %c0_i32 : i32, i32
  }
  func.func @transform_2(%arg0: i32, %arg1: i32) -> (i32, i32) {
    %c0_i32 = arith.constant 0 : i32
    %c0_i32_0 = arith.constant 0 : i32
    %c0_i32_1 = arith.constant 0 : i32
    return %c0_i32, %c0_i32_0 : i32, i32
  }
  func.func @transform_3(%arg0: i32, %arg1: i32) -> (i32, i32) {
    %c0_i32 = arith.constant 0 : i32
    %c0_i32_0 = arith.constant 0 : i32
    return %arg0, %c0_i32 : i32, i32
  }
  func.func @transform_4(%arg0: i32, %arg1: i32) -> (i32, i32) {
    %c0_i32 = arith.constant 0 : i32
    %c0_i32_0 = arith.constant 0 : i32
    %c0_i32_1 = arith.constant 0 : i32
    return %c0_i32, %c0_i32_0 : i32, i32
  }
  func.func @transform_5(%arg0: i32, %arg1: i32) -> (i32, i32) {
    %c0_i32 = arith.constant 0 : i32
    %c0_i32_0 = arith.constant 0 : i32
    %c0_i32_1 = arith.constant 0 : i32
    return %c0_i32, %c0_i32_0 : i32, i32
  }
  func.func @transform_6(%arg0: i32, %arg1: i32) -> (i32, i32) {
    %c0_i32 = arith.constant 0 : i32
    %c0_i32_0 = arith.constant 0 : i32
    return %arg0, %c0_i32 : i32, i32
  }
  func.func @transform_7(%arg0: i32, %arg1: i32) -> (i32, i32) {
    %c0_i32 = arith.constant 0 : i32
    %c0_i32_0 = arith.constant 0 : i32
    return %arg0, %c0_i32 : i32, i32
  }
}

module attributes {stable_mosaic.version = 11 : i64} {
  func.func @_flash_attn_kernel(%arg0: i32, %arg1: i32, %arg2: i32, %arg3: memref<8x128xbf16, #tpu.memory_space<vmem>>, %arg4: memref<8x128xbf16, #tpu.memory_space<vmem>>, %arg5: memref<8x128xbf16, #tpu.memory_space<vmem>>, %arg6: memref<8x128xbf16, #tpu.memory_space<vmem>>, %arg7: memref<4x8x32xbf16, #tpu.memory_space<vmem>>, %arg8: memref<4x8x1xf32, #tpu.memory_space<vmem>>, %arg9: memref<4x8x1xf32, #tpu.memory_space<vmem>>, %arg10: memref<4x8x32xf32, #tpu.memory_space<vmem>>) attributes {dimension_semantics = [#tpu.dimension_semantics<parallel>, #tpu.dimension_semantics<parallel>, #tpu.dimension_semantics<arbitrary>], iteration_bounds = array<i64: 2, 1, 1>, scalar_prefetch = 0 : i64, scratch_operands = 4 : i64, tpu.core_type = #tpu.core_type<tc>, window_params = [{transform_indices = @transform_0, window_bounds = array<i64: 8, 128>}, {transform_indices = @transform_1, window_bounds = array<i64: 8, 128>}, {transform_indices = @transform_2, window_bounds = array<i64: 8, 128>}, {transform_indices = @transform_3, window_bounds = array<i64: 8, 128>}]} {
    %c0_i32 = arith.constant 0 : i32
    %0 = arith.cmpi eq, %arg2, %c0_i32 : i32
    %1 = arith.extui %0 : i1 to i32
    %c0_i32_0 = arith.constant 0 : i32
    %2 = arith.cmpi ne, %1, %c0_i32_0 : i32
    scf.if %2 {
      %c0 = arith.constant 0 : index
      %c0_3 = arith.constant 0 : index
      %9 = vector.load %arg3[%c0, %c0_3] : memref<8x128xbf16, #tpu.memory_space<vmem>>, vector<8x128xbf16>
      %10 = vector.shape_cast %9 : vector<8x128xbf16> to vector<8x4x32xbf16>
      %11 = tpu.transpose %10, [1, 0, 2] : vector<8x4x32xbf16> -> vector<4x8x32xbf16>
      %cst = arith.constant 1.767580e-01 : bf16
      %12 = vector.broadcast %cst : bf16 to vector<4x8x32xbf16>
      %13 = arith.mulf %11, %12 : vector<4x8x32xbf16>
      %c0_4 = arith.constant 0 : index
      %c0_5 = arith.constant 0 : index
      %c0_6 = arith.constant 0 : index
      %14 = vector.load %arg7[%c0_4, %c0_5, %c0_6] : memref<4x8x32xbf16, #tpu.memory_space<vmem>>, vector<4x8x32xbf16>
      tpu.vector_store %arg7[%c0_4, %c0_5, %c0_6], %13 {strides = array<i32>} : memref<4x8x32xbf16, #tpu.memory_space<vmem>>, vector<4x8x32xbf16>,
      %cst_7 = arith.constant 0xFF800000 : f32
      %15 = vector.broadcast %cst_7 : f32 to vector<4x8x1xf32>
      %c0_8 = arith.constant 0 : index
      %c0_9 = arith.constant 0 : index
      %c0_10 = arith.constant 0 : index
      %16 = vector.load %arg8[%c0_8, %c0_9, %c0_10] : memref<4x8x1xf32, #tpu.memory_space<vmem>>, vector<4x8x1xf32>
      tpu.vector_store %arg8[%c0_8, %c0_9, %c0_10], %15 {strides = array<i32>} : memref<4x8x1xf32, #tpu.memory_space<vmem>>, vector<4x8x1xf32>,
      %cst_11 = arith.constant 0.000000e+00 : f32
      %17 = vector.broadcast %cst_11 : f32 to vector<4x8x1xf32>
      %c0_12 = arith.constant 0 : index
      %c0_13 = arith.constant 0 : index
      %c0_14 = arith.constant 0 : index
      %18 = vector.load %arg9[%c0_12, %c0_13, %c0_14] : memref<4x8x1xf32, #tpu.memory_space<vmem>>, vector<4x8x1xf32>
      tpu.vector_store %arg9[%c0_12, %c0_13, %c0_14], %17 {strides = array<i32>} : memref<4x8x1xf32, #tpu.memory_space<vmem>>, vector<4x8x1xf32>,
      %cst_15 = arith.constant 0.000000e+00 : f32
      %19 = vector.broadcast %cst_15 : f32 to vector<4x8x32xf32>
      %c0_16 = arith.constant 0 : index
      %c0_17 = arith.constant 0 : index
      %c0_18 = arith.constant 0 : index
      %20 = vector.load %arg10[%c0_16, %c0_17, %c0_18] : memref<4x8x32xf32, #tpu.memory_space<vmem>>, vector<4x8x32xf32>
      tpu.vector_store %arg10[%c0_16, %c0_17, %c0_18], %19 {strides = array<i32>} : memref<4x8x32xf32, #tpu.memory_space<vmem>>, vector<4x8x32xf32>,
    } else {
    }
    %3 = arith.cmpi slt, %arg2, %arg1 : i32
    %4 = arith.extui %3 : i1 to i32
    %c0_i32_1 = arith.constant 0 : i32
    %5 = arith.cmpi ne, %4, %c0_i32_1 : i32
    scf.if %5 {
      %c0 = arith.constant 0 : index
      %c0_3 = arith.constant 0 : index
      %9 = vector.load %arg4[%c0, %c0_3] : memref<8x128xbf16, #tpu.memory_space<vmem>>, vector<8x128xbf16>
      %10 = vector.shape_cast %9 : vector<8x128xbf16> to vector<8x4x32xbf16>
      %11 = tpu.transpose %10, [1, 0, 2] : vector<8x4x32xbf16> -> vector<4x8x32xbf16>
      %c0_4 = arith.constant 0 : index
      %c0_5 = arith.constant 0 : index
      %12 = vector.load %arg5[%c0_4, %c0_5] : memref<8x128xbf16, #tpu.memory_space<vmem>>, vector<8x128xbf16>
      %13 = vector.shape_cast %12 : vector<8x128xbf16> to vector<8x4x32xbf16>
      %14 = tpu.transpose %13, [1, 0, 2] : vector<8x4x32xbf16> -> vector<4x8x32xbf16>
      %c0_6 = arith.constant 0 : index
      %c0_7 = arith.constant 0 : index
      %c0_8 = arith.constant 0 : index
      %15 = vector.load %arg7[%c0_6, %c0_7, %c0_8] : memref<4x8x32xbf16, #tpu.memory_space<vmem>>, vector<4x8x32xbf16>
      "tpu.trace_start"() <{level = 10 : i32, message = "hqd,hkd->hqk"}> : () -> ()
      %cst = arith.constant dense<0.000000e+00> : vector<4x8x8xf32>
      %16 = tpu.matmul %15, %11, %cst {dimension_numbers = #tpu.dot_dimension_numbers<[2], [2], [1], [1], [0, 0, 0, 1, 1, 1], [0], [0]>} : vector<4x8x32xbf16>, vector<4x8x32xbf16>, vector<4x8x8xf32> -> vector<4x8x8xf32>
      "tpu.trace_stop"() : () -> ()
      %c0_9 = arith.constant 0 : index
      %c0_10 = arith.constant 0 : index
      %c0_11 = arith.constant 0 : index
      %17 = vector.load %arg8[%c0_9, %c0_10, %c0_11] : memref<4x8x1xf32, #tpu.memory_space<vmem>>, vector<4x8x1xf32>
      %cst_12 = arith.constant dense<0xFF800000> : vector<4x8xf32>
      %18 = vector.multi_reduction <maximumf>, %16, %cst_12 [2] : vector<4x8x8xf32> to vector<4x8xf32>
      %19 = vector.shape_cast %18 : vector<4x8xf32> to vector<4x8x1xf32>
      %20 = arith.maximumf %17, %19 : vector<4x8x1xf32>
      %21 = arith.subf %17, %20 : vector<4x8x1xf32>
      %22 = math.exp %21 : vector<4x8x1xf32>
      %23 = vector.broadcast %20 : vector<4x8x1xf32> to vector<4x8x8xf32>
      %24 = arith.subf %16, %23 : vector<4x8x8xf32>
      %25 = math.exp %24 : vector<4x8x8xf32>
      %c0_13 = arith.constant 0 : index
      %c0_14 = arith.constant 0 : index
      %c0_15 = arith.constant 0 : index
      %26 = vector.load %arg9[%c0_13, %c0_14, %c0_15] : memref<4x8x1xf32, #tpu.memory_space<vmem>>, vector<4x8x1xf32>
      %27 = arith.mulf %22, %26 : vector<4x8x1xf32>
      %cst_16 = arith.constant dense<0.000000e+00> : vector<4x8xf32>
      %28 = vector.multi_reduction <add>, %25, %cst_16 [2] : vector<4x8x8xf32> to vector<4x8xf32>
      %29 = vector.shape_cast %28 : vector<4x8xf32> to vector<4x8x1xf32>
      %30 = arith.addf %27, %29 : vector<4x8x1xf32>
      %c0_17 = arith.constant 0 : index
      %c0_18 = arith.constant 0 : index
      %c0_19 = arith.constant 0 : index
      %31 = vector.load %arg9[%c0_17, %c0_18, %c0_19] : memref<4x8x1xf32, #tpu.memory_space<vmem>>, vector<4x8x1xf32>
      tpu.vector_store %arg9[%c0_17, %c0_18, %c0_19], %30 {strides = array<i32>} : memref<4x8x1xf32, #tpu.memory_space<vmem>>, vector<4x8x1xf32>,
      %c0_20 = arith.constant 0 : index
      %c0_21 = arith.constant 0 : index
      %c0_22 = arith.constant 0 : index
      %32 = vector.load %arg10[%c0_20, %c0_21, %c0_22] : memref<4x8x32xf32, #tpu.memory_space<vmem>>, vector<4x8x32xf32>
      %33 = vector.broadcast %22 : vector<4x8x1xf32> to vector<4x8x32xf32>
      %34 = arith.mulf %33, %32 : vector<4x8x32xf32>
      %35 = arith.truncf %25 : vector<4x8x8xf32> to vector<4x8x8xbf16>
      "tpu.trace_start"() <{level = 10 : i32, message = "hqk,hkd->hqd"}> : () -> ()
      %cst_23 = arith.constant dense<0.000000e+00> : vector<4x8x32xf32>
      %36 = tpu.matmul %35, %14, %cst_23 {dimension_numbers = #tpu.dot_dimension_numbers<[2], [1], [1], [2], [0, 0, 0, 1, 1, 2], [0], [0]>} : vector<4x8x8xbf16>, vector<4x8x32xbf16>, vector<4x8x32xf32> -> vector<4x8x32xf32>
      "tpu.trace_stop"() : () -> ()
      %37 = arith.addf %34, %36 : vector<4x8x32xf32>
      %c0_24 = arith.constant 0 : index
      %c0_25 = arith.constant 0 : index
      %c0_26 = arith.constant 0 : index
      %38 = vector.load %arg10[%c0_24, %c0_25, %c0_26] : memref<4x8x32xf32, #tpu.memory_space<vmem>>, vector<4x8x32xf32>
      tpu.vector_store %arg10[%c0_24, %c0_25, %c0_26], %37 {strides = array<i32>} : memref<4x8x32xf32, #tpu.memory_space<vmem>>, vector<4x8x32xf32>,
      %c0_27 = arith.constant 0 : index
      %c0_28 = arith.constant 0 : index
      %c0_29 = arith.constant 0 : index
      %39 = vector.load %arg8[%c0_27, %c0_28, %c0_29] : memref<4x8x1xf32, #tpu.memory_space<vmem>>, vector<4x8x1xf32>
      tpu.vector_store %arg8[%c0_27, %c0_28, %c0_29], %20 {strides = array<i32>} : memref<4x8x1xf32, #tpu.memory_space<vmem>>, vector<4x8x1xf32>,
    } else {
    }
    %6 = arith.cmpi eq, %arg2, %arg1 : i32
    %7 = arith.extui %6 : i1 to i32
    %c0_i32_2 = arith.constant 0 : i32
    %8 = arith.cmpi ne, %7, %c0_i32_2 : i32
    scf.if %8 {
      %c0 = arith.constant 0 : index
      %c0_3 = arith.constant 0 : index
      %9 = vector.load %arg4[%c0, %c0_3] : memref<8x128xbf16, #tpu.memory_space<vmem>>, vector<8x128xbf16>
      %10 = vector.shape_cast %9 : vector<8x128xbf16> to vector<8x4x32xbf16>
      %11 = tpu.transpose %10, [1, 0, 2] : vector<8x4x32xbf16> -> vector<4x8x32xbf16>
      %c0_4 = arith.constant 0 : index
      %c0_5 = arith.constant 0 : index
      %12 = vector.load %arg5[%c0_4, %c0_5] : memref<8x128xbf16, #tpu.memory_space<vmem>>, vector<8x128xbf16>
      %13 = vector.shape_cast %12 : vector<8x128xbf16> to vector<8x4x32xbf16>
      %14 = tpu.transpose %13, [1, 0, 2] : vector<8x4x32xbf16> -> vector<4x8x32xbf16>
      %c0_6 = arith.constant 0 : index
      %c0_7 = arith.constant 0 : index
      %c0_8 = arith.constant 0 : index
      %15 = vector.load %arg7[%c0_6, %c0_7, %c0_8] : memref<4x8x32xbf16, #tpu.memory_space<vmem>>, vector<4x8x32xbf16>
      "tpu.trace_start"() <{level = 10 : i32, message = "hqd,hkd->hqk"}> : () -> ()
      %cst = arith.constant dense<0.000000e+00> : vector<4x8x8xf32>
      %16 = tpu.matmul %15, %11, %cst {dimension_numbers = #tpu.dot_dimension_numbers<[2], [2], [1], [1], [0, 0, 0, 1, 1, 1], [0], [0]>} : vector<4x8x32xbf16>, vector<4x8x32xbf16>, vector<4x8x8xf32> -> vector<4x8x8xf32>
      "tpu.trace_stop"() : () -> ()
      %17 = tpu.iota {dimensions = array<i32: 1>} : vector<4x8x8xi32>
      %18 = tpu.iota {dimensions = array<i32: 2>} : vector<4x8x8xi32>
      %19 = arith.cmpi sge, %17, %18 : vector<4x8x8xi32>
      %cst_9 = arith.constant -1.000000e+04 : f32
      %20 = vector.broadcast %cst_9 : f32 to vector<4x8x8xf32>
      %21 = arith.select %19, %16, %20 : vector<4x8x8xi1>, vector<4x8x8xf32>
      %c0_10 = arith.constant 0 : index
      %c0_11 = arith.constant 0 : index
      %c0_12 = arith.constant 0 : index
      %22 = vector.load %arg8[%c0_10, %c0_11, %c0_12] : memref<4x8x1xf32, #tpu.memory_space<vmem>>, vector<4x8x1xf32>
      %cst_13 = arith.constant dense<0xFF800000> : vector<4x8xf32>
      %23 = vector.multi_reduction <maximumf>, %21, %cst_13 [2] : vector<4x8x8xf32> to vector<4x8xf32>
      %24 = vector.shape_cast %23 : vector<4x8xf32> to vector<4x8x1xf32>
      %25 = arith.maximumf %22, %24 : vector<4x8x1xf32>
      %26 = arith.subf %22, %25 : vector<4x8x1xf32>
      %27 = math.exp %26 : vector<4x8x1xf32>
      %28 = vector.broadcast %25 : vector<4x8x1xf32> to vector<4x8x8xf32>
      %29 = arith.subf %21, %28 : vector<4x8x8xf32>
      %30 = math.exp %29 : vector<4x8x8xf32>
      %c0_14 = arith.constant 0 : index
      %c0_15 = arith.constant 0 : index
      %c0_16 = arith.constant 0 : index
      %31 = vector.load %arg9[%c0_14, %c0_15, %c0_16] : memref<4x8x1xf32, #tpu.memory_space<vmem>>, vector<4x8x1xf32>
      %32 = arith.mulf %27, %31 : vector<4x8x1xf32>
      %cst_17 = arith.constant dense<0.000000e+00> : vector<4x8xf32>
      %33 = vector.multi_reduction <add>, %30, %cst_17 [2] : vector<4x8x8xf32> to vector<4x8xf32>
      %34 = vector.shape_cast %33 : vector<4x8xf32> to vector<4x8x1xf32>
      %35 = arith.addf %32, %34 : vector<4x8x1xf32>
      %c0_18 = arith.constant 0 : index
      %c0_19 = arith.constant 0 : index
      %c0_20 = arith.constant 0 : index
      %36 = vector.load %arg9[%c0_18, %c0_19, %c0_20] : memref<4x8x1xf32, #tpu.memory_space<vmem>>, vector<4x8x1xf32>
      tpu.vector_store %arg9[%c0_18, %c0_19, %c0_20], %35 {strides = array<i32>} : memref<4x8x1xf32, #tpu.memory_space<vmem>>, vector<4x8x1xf32>,
      %c0_21 = arith.constant 0 : index
      %c0_22 = arith.constant 0 : index
      %c0_23 = arith.constant 0 : index
      %37 = vector.load %arg10[%c0_21, %c0_22, %c0_23] : memref<4x8x32xf32, #tpu.memory_space<vmem>>, vector<4x8x32xf32>
      %38 = vector.broadcast %27 : vector<4x8x1xf32> to vector<4x8x32xf32>
      %39 = arith.mulf %38, %37 : vector<4x8x32xf32>
      %40 = arith.truncf %30 : vector<4x8x8xf32> to vector<4x8x8xbf16>
      "tpu.trace_start"() <{level = 10 : i32, message = "hqk,hkd->hqd"}> : () -> ()
      %cst_24 = arith.constant dense<0.000000e+00> : vector<4x8x32xf32>
      %41 = tpu.matmul %40, %14, %cst_24 {dimension_numbers = #tpu.dot_dimension_numbers<[2], [1], [1], [2], [0, 0, 0, 1, 1, 2], [0], [0]>} : vector<4x8x8xbf16>, vector<4x8x32xbf16>, vector<4x8x32xf32> -> vector<4x8x32xf32>
      "tpu.trace_stop"() : () -> ()
      %42 = arith.addf %39, %41 : vector<4x8x32xf32>
      %c0_25 = arith.constant 0 : index
      %c0_26 = arith.constant 0 : index
      %c0_27 = arith.constant 0 : index
      %43 = vector.load %arg10[%c0_25, %c0_26, %c0_27] : memref<4x8x32xf32, #tpu.memory_space<vmem>>, vector<4x8x32xf32>
      tpu.vector_store %arg10[%c0_25, %c0_26, %c0_27], %42 {strides = array<i32>} : memref<4x8x32xf32, #tpu.memory_space<vmem>>, vector<4x8x32xf32>,
      %c0_28 = arith.constant 0 : index
      %c0_29 = arith.constant 0 : index
      %c0_30 = arith.constant 0 : index
      %44 = vector.load %arg8[%c0_28, %c0_29, %c0_30] : memref<4x8x1xf32, #tpu.memory_space<vmem>>, vector<4x8x1xf32>
      tpu.vector_store %arg8[%c0_28, %c0_29, %c0_30], %25 {strides = array<i32>} : memref<4x8x1xf32, #tpu.memory_space<vmem>>, vector<4x8x1xf32>,
      %c0_31 = arith.constant 0 : index
      %c0_32 = arith.constant 0 : index
      %c0_33 = arith.constant 0 : index
      %45 = vector.load %arg10[%c0_31, %c0_32, %c0_33] : memref<4x8x32xf32, #tpu.memory_space<vmem>>, vector<4x8x32xf32>
      %c0_34 = arith.constant 0 : index
      %c0_35 = arith.constant 0 : index
      %c0_36 = arith.constant 0 : index
      %46 = vector.load %arg9[%c0_34, %c0_35, %c0_36] : memref<4x8x1xf32, #tpu.memory_space<vmem>>, vector<4x8x1xf32>
      %47 = tpu.reciprocal %46 {approx = true} : vector<4x8x1xf32> -> vector<4x8x1xf32>
      %48 = vector.broadcast %47 : vector<4x8x1xf32> to vector<4x8x32xf32>
      %49 = arith.mulf %45, %48 : vector<4x8x32xf32>
      %50 = tpu.transpose %49, [1, 0, 2] : vector<4x8x32xf32> -> vector<8x4x32xf32>
      %51 = vector.shape_cast %50 : vector<8x4x32xf32> to vector<8x128xf32>
      %52 = arith.truncf %51 : vector<8x128xf32> to vector<8x128xbf16>
      %c0_37 = arith.constant 0 : index
      %c0_38 = arith.constant 0 : index
      %53 = vector.load %arg6[%c0_37, %c0_38] : memref<8x128xbf16, #tpu.memory_space<vmem>>, vector<8x128xbf16>
      tpu.vector_store %arg6[%c0_37, %c0_38], %52 {strides = array<i32>} : memref<8x128xbf16, #tpu.memory_space<vmem>>, vector<8x128xbf16>,
    } else {
    }
    return
  }
  func.func @transform_0(%arg0: i32, %arg1: i32, %arg2: i32) -> (i32, i32) {
    %c1_i32 = arith.constant 1 : i32
    %0 = arith.muli %arg0, %c1_i32 : i32
    %1 = arith.addi %0, %arg1 : i32
    %c0_i32 = arith.constant 0 : i32
    %c0_i32_0 = arith.constant 0 : i32
    return %1, %c0_i32 : i32, i32
  }
  func.func @transform_1(%arg0: i32, %arg1: i32, %arg2: i32) -> (i32, i32) {
    %c1_i32 = arith.constant 1 : i32
    %0 = arith.muli %arg0, %c1_i32 : i32
    %1 = arith.minsi %arg2, %arg1 : i32
    %2 = arith.addi %0, %1 : i32
    %c1_i32_0 = arith.constant 1 : i32
    %c0_i32 = arith.constant 0 : i32
    return %2, %c1_i32_0 : i32, i32
  }
  func.func @transform_2(%arg0: i32, %arg1: i32, %arg2: i32) -> (i32, i32) {
    %c1_i32 = arith.constant 1 : i32
    %0 = arith.muli %arg0, %c1_i32 : i32
    %1 = arith.minsi %arg2, %arg1 : i32
    %2 = arith.addi %0, %1 : i32
    %c2_i32 = arith.constant 2 : i32
    %c0_i32 = arith.constant 0 : i32
    return %2, %c2_i32 : i32, i32
  }
  func.func @transform_3(%arg0: i32, %arg1: i32, %arg2: i32) -> (i32, i32) {
    %c1_i32 = arith.constant 1 : i32
    %0 = arith.muli %arg0, %c1_i32 : i32
    %1 = arith.addi %0, %arg1 : i32
    %c0_i32 = arith.constant 0 : i32
    %c0_i32_0 = arith.constant 0 : i32
    return %1, %c0_i32 : i32, i32
  }
}

module attributes {stable_mosaic.version = 11 : i64} {
  func.func @_linear_kernel(%arg0: i32, %arg1: i32, %arg2: i32, %arg3: memref<16x128xbf16, #tpu.memory_space<vmem>>, %arg4: memref<128x512xbf16, #tpu.memory_space<vmem>>, %arg5: memref<1x512xf32, #tpu.memory_space<vmem>>, %arg6: memref<16x512xbf16, #tpu.memory_space<vmem>>, %arg7: memref<16x512xf32, #tpu.memory_space<vmem>>) attributes {dimension_semantics = [#tpu.dimension_semantics<parallel>, #tpu.dimension_semantics<parallel>, #tpu.dimension_semantics<arbitrary>], iteration_bounds = array<i64: 1, 1, 1>, scalar_prefetch = 0 : i64, scratch_operands = 1 : i64, tpu.core_type = #tpu.core_type<tc>, window_params = [{transform_indices = @transform_0, window_bounds = array<i64: 16, 128>}, {transform_indices = @transform_1, window_bounds = array<i64: 128, 512>}, {transform_indices = @transform_2, window_bounds = array<i64: 1, 512>}, {transform_indices = @transform_3, window_bounds = array<i64: 16, 512>}]} {
    %c0_i32 = arith.constant 0 : i32
    %0 = arith.cmpi eq, %arg2, %c0_i32 : i32
    %1 = arith.extui %0 : i1 to i32
    %c0_i32_0 = arith.constant 0 : i32
    %2 = arith.cmpi ne, %1, %c0_i32_0 : i32
    scf.if %2 {
      %cst_10 = arith.constant 0.000000e+00 : f32
      %12 = vector.broadcast %cst_10 : f32 to vector<16x512xf32>
      %c0_11 = arith.constant 0 : index
      %c0_12 = arith.constant 0 : index
      %13 = vector.load %arg7[%c0_11, %c0_12] : memref<16x512xf32, #tpu.memory_space<vmem>>, vector<16x512xf32>
      tpu.vector_store %arg7[%c0_11, %c0_12], %12 {strides = array<i32>} : memref<16x512xf32, #tpu.memory_space<vmem>>, vector<16x512xf32>,
    } else {
    }
    %c0 = arith.constant 0 : index
    %c0_1 = arith.constant 0 : index
    %3 = vector.load %arg7[%c0, %c0_1] : memref<16x512xf32, #tpu.memory_space<vmem>>, vector<16x512xf32>
    %c0_2 = arith.constant 0 : index
    %c0_3 = arith.constant 0 : index
    %4 = vector.load %arg3[%c0_2, %c0_3] : memref<16x128xbf16, #tpu.memory_space<vmem>>, vector<16x128xbf16>
    %c0_4 = arith.constant 0 : index
    %c0_5 = arith.constant 0 : index
    %5 = vector.load %arg4[%c0_4, %c0_5] : memref<128x512xbf16, #tpu.memory_space<vmem>>, vector<128x512xbf16>
    %cst = arith.constant dense<0.000000e+00> : vector<16x512xf32>
    %6 = tpu.matmul %4, %5, %cst {dimension_numbers = #tpu.dot_dimension_numbers<[1], [0], [0], [1], [0, 0, 1, 1], [], []>} : vector<16x128xbf16>, vector<128x512xbf16>, vector<16x512xf32> -> vector<16x512xf32>
    %7 = arith.addf %3, %6 : vector<16x512xf32>
    %c0_6 = arith.constant 0 : index
    %c0_7 = arith.constant 0 : index
    %8 = vector.load %arg7[%c0_6, %c0_7] : memref<16x512xf32, #tpu.memory_space<vmem>>, vector<16x512xf32>
    tpu.vector_store %arg7[%c0_6, %c0_7], %7 {strides = array<i32>} : memref<16x512xf32, #tpu.memory_space<vmem>>, vector<16x512xf32>,
    %c0_i32_8 = arith.constant 0 : i32
    %9 = arith.cmpi eq, %arg2, %c0_i32_8 : i32
    %10 = arith.extui %9 : i1 to i32
    %c0_i32_9 = arith.constant 0 : i32
    %11 = arith.cmpi ne, %10, %c0_i32_9 : i32
    scf.if %11 {
      %c0_10 = arith.constant 0 : index
      %c0_11 = arith.constant 0 : index
      %12 = vector.load %arg7[%c0_10, %c0_11] : memref<16x512xf32, #tpu.memory_space<vmem>>, vector<16x512xf32>
      %c0_12 = arith.constant 0 : index
      %c0_13 = arith.constant 0 : index
      %13 = vector.load %arg5[%c0_12, %c0_13] : memref<1x512xf32, #tpu.memory_space<vmem>>, vector<1x512xf32>
      %14 = vector.broadcast %13 : vector<1x512xf32> to vector<16x512xf32>
      %15 = arith.addf %12, %14 : vector<16x512xf32>
      %cst_14 = arith.constant 5.000000e-01 : f32
      %16 = vector.broadcast %cst_14 : f32 to vector<16x512xf32>
      %17 = arith.mulf %16, %15 : vector<16x512xf32>
      %cst_15 = arith.constant 0.707106769 : f32
      %18 = vector.broadcast %cst_15 : f32 to vector<16x512xf32>
      %19 = arith.mulf %15, %18 : vector<16x512xf32>
      %20 = math.erf %19 : vector<16x512xf32>
      %cst_16 = arith.constant 1.000000e+00 : f32
      %21 = vector.broadcast %cst_16 : f32 to vector<16x512xf32>
      %22 = arith.addf %21, %20 : vector<16x512xf32>
      %23 = arith.mulf %17, %22 : vector<16x512xf32>
      %24 = arith.truncf %23 : vector<16x512xf32> to vector<16x512xbf16>
      %c0_17 = arith.constant 0 : index
      %c0_18 = arith.constant 0 : index
      %25 = vector.load %arg6[%c0_17, %c0_18] : memref<16x512xbf16, #tpu.memory_space<vmem>>, vector<16x512xbf16>
      tpu.vector_store %arg6[%c0_17, %c0_18], %24 {strides = array<i32>} : memref<16x512xbf16, #tpu.memory_space<vmem>>, vector<16x512xbf16>,
    } else {
    }
    return
  }
  func.func @transform_0(%arg0: i32, %arg1: i32, %arg2: i32) -> (i32, i32) {
    %c0_i32 = arith.constant 0 : i32
    return %arg0, %arg2 : i32, i32
  }
  func.func @transform_1(%arg0: i32, %arg1: i32, %arg2: i32) -> (i32, i32) {
    %c0_i32 = arith.constant 0 : i32
    return %arg2, %arg1 : i32, i32
  }
  func.func @transform_2(%arg0: i32, %arg1: i32, %arg2: i32) -> (i32, i32) {
    %c0_i32 = arith.constant 0 : i32
    %c0_i32_0 = arith.constant 0 : i32
    return %c0_i32, %arg1 : i32, i32
  }
  func.func @transform_3(%arg0: i32, %arg1: i32, %arg2: i32) -> (i32, i32) {
    %c0_i32 = arith.constant 0 : i32
    return %arg0, %arg1 : i32, i32
  }
}

module attributes {stable_mosaic.version = 11 : i64} {
  func.func @_linear_res_ln_kernel(%arg0: i32, %arg1: i32, %arg2: memref<16x512xbf16, #tpu.memory_space<vmem>>, %arg3: memref<512x128xbf16, #tpu.memory_space<vmem>>, %arg4: memref<1x128xf32, #tpu.memory_space<vmem>>, %arg5: memref<16x128xf32, #tpu.memory_space<vmem>>, %arg6: memref<1x128xf32, #tpu.memory_space<vmem>>, %arg7: memref<1x128xf32, #tpu.memory_space<vmem>>, %arg8: memref<16x128xf32, #tpu.memory_space<vmem>>, %arg9: memref<16x128xbf16, #tpu.memory_space<vmem>>, %arg10: memref<16x128xf32, #tpu.memory_space<vmem>>) attributes {dimension_semantics = [#tpu.dimension_semantics<parallel>, #tpu.dimension_semantics<arbitrary>], iteration_bounds = array<i64: 1, 1>, scalar_prefetch = 0 : i64, scratch_operands = 1 : i64, tpu.core_type = #tpu.core_type<tc>, window_params = [{transform_indices = @transform_0, window_bounds = array<i64: 16, 512>}, {transform_indices = @transform_1, window_bounds = array<i64: 512, 128>}, {pipeline_mode = #tpu.pipeline_mode<synchronous>, transform_indices = @transform_2, window_bounds = array<i64: 1, 128>}, {transform_indices = @transform_3, window_bounds = array<i64: 16, 128>}, {pipeline_mode = #tpu.pipeline_mode<synchronous>, transform_indices = @transform_4, window_bounds = array<i64: 1, 128>}, {pipeline_mode = #tpu.pipeline_mode<synchronous>, transform_indices = @transform_5, window_bounds = array<i64: 1, 128>}, {transform_indices = @transform_6, window_bounds = array<i64: 16, 128>}, {transform_indices = @transform_7, window_bounds = array<i64: 16, 128>}]} {
    %c0_i32 = arith.constant 0 : i32
    %0 = arith.cmpi eq, %arg1, %c0_i32 : i32
    %1 = arith.extui %0 : i1 to i32
    %c0_i32_0 = arith.constant 0 : i32
    %2 = arith.cmpi ne, %1, %c0_i32_0 : i32
    scf.if %2 {
      %cst_10 = arith.constant 0.000000e+00 : f32
      %12 = vector.broadcast %cst_10 : f32 to vector<16x128xf32>
      %c0_11 = arith.constant 0 : index
      %c0_12 = arith.constant 0 : index
      %13 = vector.load %arg10[%c0_11, %c0_12] : memref<16x128xf32, #tpu.memory_space<vmem>>, vector<16x128xf32>
      tpu.vector_store %arg10[%c0_11, %c0_12], %12 {strides = array<i32>} : memref<16x128xf32, #tpu.memory_space<vmem>>, vector<16x128xf32>,
    } else {
    }
    %c0 = arith.constant 0 : index
    %c0_1 = arith.constant 0 : index
    %3 = vector.load %arg10[%c0, %c0_1] : memref<16x128xf32, #tpu.memory_space<vmem>>, vector<16x128xf32>
    %c0_2 = arith.constant 0 : index
    %c0_3 = arith.constant 0 : index
    %4 = vector.load %arg2[%c0_2, %c0_3] : memref<16x512xbf16, #tpu.memory_space<vmem>>, vector<16x512xbf16>
    %c0_4 = arith.constant 0 : index
    %c0_5 = arith.constant 0 : index
    %5 = vector.load %arg3[%c0_4, %c0_5] : memref<512x128xbf16, #tpu.memory_space<vmem>>, vector<512x128xbf16>
    %cst = arith.constant dense<0.000000e+00> : vector<16x128xf32>
    %6 = tpu.matmul %4, %5, %cst {dimension_numbers = #tpu.dot_dimension_numbers<[1], [0], [0], [1], [0, 0, 1, 1], [], []>} : vector<16x512xbf16>, vector<512x128xbf16>, vector<16x128xf32> -> vector<16x128xf32>
    %7 = arith.addf %3, %6 : vector<16x128xf32>
    %c0_6 = arith.constant 0 : index
    %c0_7 = arith.constant 0 : index
    %8 = vector.load %arg10[%c0_6, %c0_7] : memref<16x128xf32, #tpu.memory_space<vmem>>, vector<16x128xf32>
    tpu.vector_store %arg10[%c0_6, %c0_7], %7 {strides = array<i32>} : memref<16x128xf32, #tpu.memory_space<vmem>>, vector<16x128xf32>,
    %c0_i32_8 = arith.constant 0 : i32
    %9 = arith.cmpi eq, %arg1, %c0_i32_8 : i32
    %10 = arith.extui %9 : i1 to i32
    %c0_i32_9 = arith.constant 0 : i32
    %11 = arith.cmpi ne, %10, %c0_i32_9 : i32
    scf.if %11 {
      %c0_10 = arith.constant 0 : index
      %c0_11 = arith.constant 0 : index
      %12 = vector.load %arg10[%c0_10, %c0_11] : memref<16x128xf32, #tpu.memory_space<vmem>>, vector<16x128xf32>
      %c0_12 = arith.constant 0 : index
      %c0_13 = arith.constant 0 : index
      %13 = vector.load %arg4[%c0_12, %c0_13] : memref<1x128xf32, #tpu.memory_space<vmem>>, vector<1x128xf32>
      %14 = vector.broadcast %13 : vector<1x128xf32> to vector<16x128xf32>
      %15 = arith.addf %12, %14 : vector<16x128xf32>
      %c0_14 = arith.constant 0 : index
      %c0_15 = arith.constant 0 : index
      %16 = vector.load %arg5[%c0_14, %c0_15] : memref<16x128xf32, #tpu.memory_space<vmem>>, vector<16x128xf32>
      %17 = arith.addf %15, %16 : vector<16x128xf32>
      %c0_16 = arith.constant 0 : index
      %c0_17 = arith.constant 0 : index
      %18 = vector.load %arg8[%c0_16, %c0_17] : memref<16x128xf32, #tpu.memory_space<vmem>>, vector<16x128xf32>
      tpu.vector_store %arg8[%c0_16, %c0_17], %17 {strides = array<i32>} : memref<16x128xf32, #tpu.memory_space<vmem>>, vector<16x128xf32>,
      %cst_18 = arith.constant dense<0.000000e+00> : vector<16xf32>
      %19 = vector.multi_reduction <add>, %17, %cst_18 [1] : vector<16x128xf32> to vector<16xf32>
      %20 = vector.shape_cast %19 : vector<16xf32> to vector<16x1xf32>
      %cst_19 = arith.constant 1.280000e+02 : f32
      %21 = vector.broadcast %cst_19 : f32 to vector<16x1xf32>
      %22 = arith.divf %20, %21 : vector<16x1xf32>
      %23 = vector.broadcast %22 : vector<16x1xf32> to vector<16x128xf32>
      %24 = arith.subf %17, %23 : vector<16x128xf32>
      %25 = arith.mulf %24, %24 : vector<16x128xf32>
      %cst_20 = arith.constant dense<0.000000e+00> : vector<16xf32>
      %26 = vector.multi_reduction <add>, %25, %cst_20 [1] : vector<16x128xf32> to vector<16xf32>
      %27 = vector.shape_cast %26 : vector<16xf32> to vector<16x1xf32>
      %cst_21 = arith.constant 1.280000e+02 : f32
      %28 = vector.broadcast %cst_21 : f32 to vector<16x1xf32>
      %29 = arith.divf %27, %28 : vector<16x1xf32>
      %30 = vector.broadcast %22 : vector<16x1xf32> to vector<16x128xf32>
      %31 = arith.subf %17, %30 : vector<16x128xf32>
      %cst_22 = arith.constant 9.99999974E-6 : f32
      %32 = vector.broadcast %cst_22 : f32 to vector<16x1xf32>
      %33 = arith.addf %29, %32 : vector<16x1xf32>
      %34 = math.rsqrt %33 : vector<16x1xf32>
      %35 = vector.broadcast %34 : vector<16x1xf32> to vector<16x128xf32>
      %36 = arith.mulf %31, %35 : vector<16x128xf32>
      %c0_23 = arith.constant 0 : index
      %c0_24 = arith.constant 0 : index
      %37 = vector.load %arg6[%c0_23, %c0_24] : memref<1x128xf32, #tpu.memory_space<vmem>>, vector<1x128xf32>
      %38 = vector.broadcast %37 : vector<1x128xf32> to vector<16x128xf32>
      %39 = arith.mulf %36, %38 : vector<16x128xf32>
      %c0_25 = arith.constant 0 : index
      %c0_26 = arith.constant 0 : index
      %40 = vector.load %arg7[%c0_25, %c0_26] : memref<1x128xf32, #tpu.memory_space<vmem>>, vector<1x128xf32>
      %41 = vector.broadcast %40 : vector<1x128xf32> to vector<16x128xf32>
      %42 = arith.addf %39, %41 : vector<16x128xf32>
      %43 = arith.truncf %42 : vector<16x128xf32> to vector<16x128xbf16>
      %c0_27 = arith.constant 0 : index
      %c0_28 = arith.constant 0 : index
      %44 = vector.load %arg9[%c0_27, %c0_28] : memref<16x128xbf16, #tpu.memory_space<vmem>>, vector<16x128xbf16>
      tpu.vector_store %arg9[%c0_27, %c0_28], %43 {strides = array<i32>} : memref<16x128xbf16, #tpu.memory_space<vmem>>, vector<16x128xbf16>,
    } else {
    }
    return
  }
  func.func @transform_0(%arg0: i32, %arg1: i32) -> (i32, i32) {
    %c0_i32 = arith.constant 0 : i32
    return %arg0, %arg1 : i32, i32
  }
  func.func @transform_1(%arg0: i32, %arg1: i32) -> (i32, i32) {
    %c0_i32 = arith.constant 0 : i32
    %c0_i32_0 = arith.constant 0 : i32
    return %arg1, %c0_i32 : i32, i32
  }
  func.func @transform_2(%arg0: i32, %arg1: i32) -> (i32, i32) {
    %c0_i32 = arith.constant 0 : i32
    %c0_i32_0 = arith.constant 0 : i32
    %c0_i32_1 = arith.constant 0 : i32
    return %c0_i32, %c0_i32_0 : i32, i32
  }
  func.func @transform_3(%arg0: i32, %arg1: i32) -> (i32, i32) {
    %c0_i32 = arith.constant 0 : i32
    %c0_i32_0 = arith.constant 0 : i32
    return %arg0, %c0_i32 : i32, i32
  }
  func.func @transform_4(%arg0: i32, %arg1: i32) -> (i32, i32) {
    %c0_i32 = arith.constant 0 : i32
    %c0_i32_0 = arith.constant 0 : i32
    %c0_i32_1 = arith.constant 0 : i32
    return %c0_i32, %c0_i32_0 : i32, i32
  }
  func.func @transform_5(%arg0: i32, %arg1: i32) -> (i32, i32) {
    %c0_i32 = arith.constant 0 : i32
    %c0_i32_0 = arith.constant 0 : i32
    %c0_i32_1 = arith.constant 0 : i32
    return %c0_i32, %c0_i32_0 : i32, i32
  }
  func.func @transform_6(%arg0: i32, %arg1: i32) -> (i32, i32) {
    %c0_i32 = arith.constant 0 : i32
    %c0_i32_0 = arith.constant 0 : i32
    return %arg0, %c0_i32 : i32, i32
  }
  func.func @transform_7(%arg0: i32, %arg1: i32) -> (i32, i32) {
    %c0_i32 = arith.constant 0 : i32
    %c0_i32_0 = arith.constant 0 : i32
    return %arg0, %c0_i32 : i32, i32
  }
}

module attributes {stable_mosaic.version = 11 : i64} {
  func.func @_linear_res_ln_kernel(%arg0: i32, %arg1: i32, %arg2: memref<16x512xbf16, #tpu.memory_space<vmem>>, %arg3: memref<512x128xbf16, #tpu.memory_space<vmem>>, %arg4: memref<1x128xf32, #tpu.memory_space<vmem>>, %arg5: memref<16x128xf32, #tpu.memory_space<vmem>>, %arg6: memref<1x128xf32, #tpu.memory_space<vmem>>, %arg7: memref<1x128xf32, #tpu.memory_space<vmem>>, %arg8: memref<16x128xf32, #tpu.memory_space<vmem>>, %arg9: memref<16x128xbf16, #tpu.memory_space<vmem>>, %arg10: memref<16x128xf32, #tpu.memory_space<vmem>>) attributes {dimension_semantics = [#tpu.dimension_semantics<parallel>, #tpu.dimension_semantics<arbitrary>], iteration_bounds = array<i64: 1, 1>, scalar_prefetch = 0 : i64, scratch_operands = 1 : i64, tpu.core_type = #tpu.core_type<tc>, window_params = [{transform_indices = @transform_0, window_bounds = array<i64: 16, 512>}, {transform_indices = @transform_1, window_bounds = array<i64: 512, 128>}, {pipeline_mode = #tpu.pipeline_mode<synchronous>, transform_indices = @transform_2, window_bounds = array<i64: 1, 128>}, {transform_indices = @transform_3, window_bounds = array<i64: 16, 128>}, {pipeline_mode = #tpu.pipeline_mode<synchronous>, transform_indices = @transform_4, window_bounds = array<i64: 1, 128>}, {pipeline_mode = #tpu.pipeline_mode<synchronous>, transform_indices = @transform_5, window_bounds = array<i64: 1, 128>}, {transform_indices = @transform_6, window_bounds = array<i64: 16, 128>}, {transform_indices = @transform_7, window_bounds = array<i64: 16, 128>}]} {
    %c0_i32 = arith.constant 0 : i32
    %0 = arith.cmpi eq, %arg1, %c0_i32 : i32
    %1 = arith.extui %0 : i1 to i32
    %c0_i32_0 = arith.constant 0 : i32
    %2 = arith.cmpi ne, %1, %c0_i32_0 : i32
    scf.if %2 {
      %cst_10 = arith.constant 0.000000e+00 : f32
      %12 = vector.broadcast %cst_10 : f32 to vector<16x128xf32>
      %c0_11 = arith.constant 0 : index
      %c0_12 = arith.constant 0 : index
      %13 = vector.load %arg10[%c0_11, %c0_12] : memref<16x128xf32, #tpu.memory_space<vmem>>, vector<16x128xf32>
      tpu.vector_store %arg10[%c0_11, %c0_12], %12 {strides = array<i32>} : memref<16x128xf32, #tpu.memory_space<vmem>>, vector<16x128xf32>,
    } else {
    }
    %c0 = arith.constant 0 : index
    %c0_1 = arith.constant 0 : index
    %3 = vector.load %arg10[%c0, %c0_1] : memref<16x128xf32, #tpu.memory_space<vmem>>, vector<16x128xf32>
    %c0_2 = arith.constant 0 : index
    %c0_3 = arith.constant 0 : index
    %4 = vector.load %arg2[%c0_2, %c0_3] : memref<16x512xbf16, #tpu.memory_space<vmem>>, vector<16x512xbf16>
    %c0_4 = arith.constant 0 : index
    %c0_5 = arith.constant 0 : index
    %5 = vector.load %arg3[%c0_4, %c0_5] : memref<512x128xbf16, #tpu.memory_space<vmem>>, vector<512x128xbf16>
    %cst = arith.constant dense<0.000000e+00> : vector<16x128xf32>
    %6 = tpu.matmul %4, %5, %cst {dimension_numbers = #tpu.dot_dimension_numbers<[1], [0], [0], [1], [0, 0, 1, 1], [], []>} : vector<16x512xbf16>, vector<512x128xbf16>, vector<16x128xf32> -> vector<16x128xf32>
    %7 = arith.addf %3, %6 : vector<16x128xf32>
    %c0_6 = arith.constant 0 : index
    %c0_7 = arith.constant 0 : index
    %8 = vector.load %arg10[%c0_6, %c0_7] : memref<16x128xf32, #tpu.memory_space<vmem>>, vector<16x128xf32>
    tpu.vector_store %arg10[%c0_6, %c0_7], %7 {strides = array<i32>} : memref<16x128xf32, #tpu.memory_space<vmem>>, vector<16x128xf32>,
    %c0_i32_8 = arith.constant 0 : i32
    %9 = arith.cmpi eq, %arg1, %c0_i32_8 : i32
    %10 = arith.extui %9 : i1 to i32
    %c0_i32_9 = arith.constant 0 : i32
    %11 = arith.cmpi ne, %10, %c0_i32_9 : i32
    scf.if %11 {
      %c0_10 = arith.constant 0 : index
      %c0_11 = arith.constant 0 : index
      %12 = vector.load %arg10[%c0_10, %c0_11] : memref<16x128xf32, #tpu.memory_space<vmem>>, vector<16x128xf32>
      %c0_12 = arith.constant 0 : index
      %c0_13 = arith.constant 0 : index
      %13 = vector.load %arg4[%c0_12, %c0_13] : memref<1x128xf32, #tpu.memory_space<vmem>>, vector<1x128xf32>
      %14 = vector.broadcast %13 : vector<1x128xf32> to vector<16x128xf32>
      %15 = arith.addf %12, %14 : vector<16x128xf32>
      %c0_14 = arith.constant 0 : index
      %c0_15 = arith.constant 0 : index
      %16 = vector.load %arg5[%c0_14, %c0_15] : memref<16x128xf32, #tpu.memory_space<vmem>>, vector<16x128xf32>
      %17 = arith.addf %15, %16 : vector<16x128xf32>
      %c0_16 = arith.constant 0 : index
      %c0_17 = arith.constant 0 : index
      %18 = vector.load %arg8[%c0_16, %c0_17] : memref<16x128xf32, #tpu.memory_space<vmem>>, vector<16x128xf32>
      tpu.vector_store %arg8[%c0_16, %c0_17], %17 {strides = array<i32>} : memref<16x128xf32, #tpu.memory_space<vmem>>, vector<16x128xf32>,
      %cst_18 = arith.constant dense<0.000000e+00> : vector<16xf32>
      %19 = vector.multi_reduction <add>, %17, %cst_18 [1] : vector<16x128xf32> to vector<16xf32>
      %20 = vector.shape_cast %19 : vector<16xf32> to vector<16x1xf32>
      %cst_19 = arith.constant 1.280000e+02 : f32
      %21 = vector.broadcast %cst_19 : f32 to vector<16x1xf32>
      %22 = arith.divf %20, %21 : vector<16x1xf32>
      %23 = vector.broadcast %22 : vector<16x1xf32> to vector<16x128xf32>
      %24 = arith.subf %17, %23 : vector<16x128xf32>
      %25 = arith.mulf %24, %24 : vector<16x128xf32>
      %cst_20 = arith.constant dense<0.000000e+00> : vector<16xf32>
      %26 = vector.multi_reduction <add>, %25, %cst_20 [1] : vector<16x128xf32> to vector<16xf32>
      %27 = vector.shape_cast %26 : vector<16xf32> to vector<16x1xf32>
      %cst_21 = arith.constant 1.280000e+02 : f32
      %28 = vector.broadcast %cst_21 : f32 to vector<16x1xf32>
      %29 = arith.divf %27, %28 : vector<16x1xf32>
      %30 = vector.broadcast %22 : vector<16x1xf32> to vector<16x128xf32>
      %31 = arith.subf %17, %30 : vector<16x128xf32>
      %cst_22 = arith.constant 9.99999974E-6 : f32
      %32 = vector.broadcast %cst_22 : f32 to vector<16x1xf32>
      %33 = arith.addf %29, %32 : vector<16x1xf32>
      %34 = math.rsqrt %33 : vector<16x1xf32>
      %35 = vector.broadcast %34 : vector<16x1xf32> to vector<16x128xf32>
      %36 = arith.mulf %31, %35 : vector<16x128xf32>
      %c0_23 = arith.constant 0 : index
      %c0_24 = arith.constant 0 : index
      %37 = vector.load %arg6[%c0_23, %c0_24] : memref<1x128xf32, #tpu.memory_space<vmem>>, vector<1x128xf32>
      %38 = vector.broadcast %37 : vector<1x128xf32> to vector<16x128xf32>
      %39 = arith.mulf %36, %38 : vector<16x128xf32>
      %c0_25 = arith.constant 0 : index
      %c0_26 = arith.constant 0 : index
      %40 = vector.load %arg7[%c0_25, %c0_26] : memref<1x128xf32, #tpu.memory_space<vmem>>, vector<1x128xf32>
      %41 = vector.broadcast %40 : vector<1x128xf32> to vector<16x128xf32>
      %42 = arith.addf %39, %41 : vector<16x128xf32>
      %43 = arith.truncf %42 : vector<16x128xf32> to vector<16x128xbf16>
      %c0_27 = arith.constant 0 : index
      %c0_28 = arith.constant 0 : index
      %44 = vector.load %arg9[%c0_27, %c0_28] : memref<16x128xbf16, #tpu.memory_space<vmem>>, vector<16x128xbf16>
      tpu.vector_store %arg9[%c0_27, %c0_28], %43 {strides = array<i32>} : memref<16x128xbf16, #tpu.memory_space<vmem>>, vector<16x128xbf16>,
    } else {
    }
    return
  }
  func.func @transform_0(%arg0: i32, %arg1: i32) -> (i32, i32) {
    %c0_i32 = arith.constant 0 : i32
    return %arg0, %arg1 : i32, i32
  }
  func.func @transform_1(%arg0: i32, %arg1: i32) -> (i32, i32) {
    %c0_i32 = arith.constant 0 : i32
    %c0_i32_0 = arith.constant 0 : i32
    return %arg1, %c0_i32 : i32, i32
  }
  func.func @transform_2(%arg0: i32, %arg1: i32) -> (i32, i32) {
    %c0_i32 = arith.constant 0 : i32
    %c0_i32_0 = arith.constant 0 : i32
    %c0_i32_1 = arith.constant 0 : i32
    return %c0_i32, %c0_i32_0 : i32, i32
  }
  func.func @transform_3(%arg0: i32, %arg1: i32) -> (i32, i32) {
    %c0_i32 = arith.constant 0 : i32
    %c0_i32_0 = arith.constant 0 : i32
    return %arg0, %c0_i32 : i32, i32
  }
  func.func @transform_4(%arg0: i32, %arg1: i32) -> (i32, i32) {
    %c0_i32 = arith.constant 0 : i32
    %c0_i32_0 = arith.constant 0 : i32
    %c0_i32_1 = arith.constant 0 : i32
    return %c0_i32, %c0_i32_0 : i32, i32
  }
  func.func @transform_5(%arg0: i32, %arg1: i32) -> (i32, i32) {
    %c0_i32 = arith.constant 0 : i32
    %c0_i32_0 = arith.constant 0 : i32
    %c0_i32_1 = arith.constant 0 : i32
    return %c0_i32, %c0_i32_0 : i32, i32
  }
  func.func @transform_6(%arg0: i32, %arg1: i32) -> (i32, i32) {
    %c0_i32 = arith.constant 0 : i32
    %c0_i32_0 = arith.constant 0 : i32
    return %arg0, %c0_i32 : i32, i32
  }
  func.func @transform_7(%arg0: i32, %arg1: i32) -> (i32, i32) {
    %c0_i32 = arith.constant 0 : i32
    %c0_i32_0 = arith.constant 0 : i32
    return %arg0, %c0_i32 : i32, i32
  }
}

module attributes {stable_mosaic.version = 11 : i64} {
  func.func @_linear_kernel(%arg0: i32, %arg1: i32, %arg2: i32, %arg3: memref<16x128xbf16, #tpu.memory_space<vmem>>, %arg4: memref<128x512xbf16, #tpu.memory_space<vmem>>, %arg5: memref<1x512xf32, #tpu.memory_space<vmem>>, %arg6: memref<16x512xf32, #tpu.memory_space<vmem>>, %arg7: memref<16x512xf32, #tpu.memory_space<vmem>>) attributes {dimension_semantics = [#tpu.dimension_semantics<parallel>, #tpu.dimension_semantics<parallel>, #tpu.dimension_semantics<arbitrary>], iteration_bounds = array<i64: 1, 1, 1>, scalar_prefetch = 0 : i64, scratch_operands = 1 : i64, tpu.core_type = #tpu.core_type<tc>, window_params = [{transform_indices = @transform_0, window_bounds = array<i64: 16, 128>}, {transform_indices = @transform_1, window_bounds = array<i64: 128, 512>}, {transform_indices = @transform_2, window_bounds = array<i64: 1, 512>}, {transform_indices = @transform_3, window_bounds = array<i64: 16, 512>}]} {
    %c0_i32 = arith.constant 0 : i32
    %0 = arith.cmpi eq, %arg2, %c0_i32 : i32
    %1 = arith.extui %0 : i1 to i32
    %c0_i32_0 = arith.constant 0 : i32
    %2 = arith.cmpi ne, %1, %c0_i32_0 : i32
    scf.if %2 {
      %cst_10 = arith.constant 0.000000e+00 : f32
      %12 = vector.broadcast %cst_10 : f32 to vector<16x512xf32>
      %c0_11 = arith.constant 0 : index
      %c0_12 = arith.constant 0 : index
      %13 = vector.load %arg7[%c0_11, %c0_12] : memref<16x512xf32, #tpu.memory_space<vmem>>, vector<16x512xf32>
      tpu.vector_store %arg7[%c0_11, %c0_12], %12 {strides = array<i32>} : memref<16x512xf32, #tpu.memory_space<vmem>>, vector<16x512xf32>,
    } else {
    }
    %c0 = arith.constant 0 : index
    %c0_1 = arith.constant 0 : index
    %3 = vector.load %arg7[%c0, %c0_1] : memref<16x512xf32, #tpu.memory_space<vmem>>, vector<16x512xf32>
    %c0_2 = arith.constant 0 : index
    %c0_3 = arith.constant 0 : index
    %4 = vector.load %arg3[%c0_2, %c0_3] : memref<16x128xbf16, #tpu.memory_space<vmem>>, vector<16x128xbf16>
    %c0_4 = arith.constant 0 : index
    %c0_5 = arith.constant 0 : index
    %5 = vector.load %arg4[%c0_4, %c0_5] : memref<128x512xbf16, #tpu.memory_space<vmem>>, vector<128x512xbf16>
    %cst = arith.constant dense<0.000000e+00> : vector<16x512xf32>
    %6 = tpu.matmul %4, %5, %cst {dimension_numbers = #tpu.dot_dimension_numbers<[1], [0], [0], [1], [0, 0, 1, 1], [], []>} : vector<16x128xbf16>, vector<128x512xbf16>, vector<16x512xf32> -> vector<16x512xf32>
    %7 = arith.addf %3, %6 : vector<16x512xf32>
    %c0_6 = arith.constant 0 : index
    %c0_7 = arith.constant 0 : index
    %8 = vector.load %arg7[%c0_6, %c0_7] : memref<16x512xf32, #tpu.memory_space<vmem>>, vector<16x512xf32>
    tpu.vector_store %arg7[%c0_6, %c0_7], %7 {strides = array<i32>} : memref<16x512xf32, #tpu.memory_space<vmem>>, vector<16x512xf32>,
    %c0_i32_8 = arith.constant 0 : i32
    %9 = arith.cmpi eq, %arg2, %c0_i32_8 : i32
    %10 = arith.extui %9 : i1 to i32
    %c0_i32_9 = arith.constant 0 : i32
    %11 = arith.cmpi ne, %10, %c0_i32_9 : i32
    scf.if %11 {
      %c0_10 = arith.constant 0 : index
      %c0_11 = arith.constant 0 : index
      %12 = vector.load %arg7[%c0_10, %c0_11] : memref<16x512xf32, #tpu.memory_space<vmem>>, vector<16x512xf32>
      %c0_12 = arith.constant 0 : index
      %c0_13 = arith.constant 0 : index
      %13 = vector.load %arg5[%c0_12, %c0_13] : memref<1x512xf32, #tpu.memory_space<vmem>>, vector<1x512xf32>
      %14 = vector.broadcast %13 : vector<1x512xf32> to vector<16x512xf32>
      %15 = arith.addf %12, %14 : vector<16x512xf32>
      %c0_14 = arith.constant 0 : index
      %c0_15 = arith.constant 0 : index
      %16 = vector.load %arg6[%c0_14, %c0_15] : memref<16x512xf32, #tpu.memory_space<vmem>>, vector<16x512xf32>
      tpu.vector_store %arg6[%c0_14, %c0_15], %15 {strides = array<i32>} : memref<16x512xf32, #tpu.memory_space<vmem>>, vector<16x512xf32>,
    } else {
    }
    return
  }
  func.func @transform_0(%arg0: i32, %arg1: i32, %arg2: i32) -> (i32, i32) {
    %c0_i32 = arith.constant 0 : i32
    return %arg0, %arg2 : i32, i32
  }
  func.func @transform_1(%arg0: i32, %arg1: i32, %arg2: i32) -> (i32, i32) {
    %c0_i32 = arith.constant 0 : i32
    return %arg2, %arg1 : i32, i32
  }
  func.func @transform_2(%arg0: i32, %arg1: i32, %arg2: i32) -> (i32, i32) {
    %c0_i32 = arith.constant 0 : i32
    %c0_i32_0 = arith.constant 0 : i32
    return %c0_i32, %arg1 : i32, i32
  }
  func.func @transform_3(%arg0: i32, %arg1: i32, %arg2: i32) -> (i32, i32) {
    %c0_i32 = arith.constant 0 : i32
    return %arg0, %arg1 : i32, i32
  }
}

</mosaic_0001>

<llo_original>
// kernel: gpt2_forward.12
$region0: #{gpt2_forward.12}
  #allocation0 [shape = 'u32[]', space=smem, size = 0x4, offset = 0x4, fixed_abs, tag = 'smem constant byte address 0x4 - core index']
  #allocation1 [shape = 'u32[144,128]{1,0:T(1,128)}', space=vmem, size = 0x12000, scoped, tag = 'internal scratch']
  %s0 = inlined_call_operand.vmem [shape: f32[16,128], index: 0, kind: input, shape index: {}]
  %s1 = inlined_call_operand.vmem [shape: f32[1,128], index: 1, kind: input, shape index: {}]
  %s2 = inlined_call_operand.vmem [shape: f32[1,128], index: 2, kind: input, shape index: {}]
  %s3 = inlined_call_operand.vmem [shape: bf16[16,128], index: 3, kind: output, shape index: {}]
  %s4 = sld [smem:[#allocation0]]
  $region22: #{gpt2_forward.12} parent=0
    _
  %s6 = ssub.s32 1, %s4
  %s7 = scalar_select 0, %s6, %s4
  // Predicated region
  $region2: #{gpt2_forward.12} parent=0 // pred_check
    _
  $region3: #{gpt2_forward.12} parent=0 // pred_check_branch
    %9 = sbr.rel (0) target = $region5
  $region4: #{gpt2_forward.12} parent=0 // pred_region
    _
  $region5: #{gpt2_forward.12} parent=0 // pred_fallthru
    _
  // Predicated region
  $region6: #{gpt2_forward.12} parent=0 // pred_check
    _
  $region7: #{gpt2_forward.12} parent=0 // pred_check_branch
    %11 = sbr.rel (0) target = $region9
  $region8: #{gpt2_forward.12} parent=0 // pred_region
    _
  $region9: #{gpt2_forward.12} parent=0 // pred_fallthru
    _
  // Predicated region
  $region10: #{gpt2_forward.12} parent=0 // pred_check
    _
  $region11: #{gpt2_forward.12} parent=0 // pred_check_branch
    %13 = sbr.rel (0) target = $region13
  $region12: #{gpt2_forward.12} parent=0 // pred_region
    _
  $region13: #{gpt2_forward.12} parent=0 // pred_fallthru
    _
  %v14 = vld [vmem:[%s0] sm:$0xff]
  %v15 = vld [vmem:[%s0 + $0x8] sm:$0xff]
  %16 = vadd.xlane.f32.xlu0 %v14
  %v17 = vpop.xlane.xlu0 %16
  %18 = vadd.xlane.f32.xlu0 %v15
  %v19 = vpop.xlane.xlu0 %18
  %v20 = vrcp.pop 128.0
  %v21 = vmul.f32 %v17, %v20
  %v22 = vmul.f32 %v19, %v20
  %v23 = vsub.f32 %v14, %v21
  %v24 = vsub.f32 %v15, %v22
  %v25 = vmul.f32 %v23, %v23
  %v26 = vmul.f32 %v24, %v24
  %27 = vadd.xlane.f32.xlu0 %v25
  %v28 = vpop.xlane.xlu0 %27
  %29 = vadd.xlane.f32.xlu0 %v26
  %v30 = vpop.xlane.xlu0 %29
  %v31 = vmul.f32 %v28, %v20
  %v32 = vmul.f32 %v30, %v20
  %v33 = vadd.f32 %v31, 1e-05
  %v34 = vadd.f32 %v32, 1e-05
  %v35 = vrsqrt.pop %v33
  %v36 = vrsqrt.pop %v34
  %v37 = vmul.f32 %v23, %v35
  %v38 = vmul.f32 %v24, %v36
  %v39 = vld [vmem:[%s1] sm:$0x1]
  %v41 = vlaneseq
  %v42 = vshrl.u32 %v41, 7
  %v43 = vsub.s32 0, %v42
  %v44 = vrot.slane %v39, %v43
  %v46 = vmul.f32 %v37, %v44
  %v47 = vmul.f32 %v38, %v44
  %v48 = vld [vmem:[%s2] sm:$0x1]
  %v50 = vlaneseq
  %v51 = vshrl.u32 %v50, 7
  %v52 = vsub.s32 0, %v51
  %v53 = vrot.slane %v48, %v52
  %v55 = vadd.f32 %v46, %v53
  %v56 = vadd.f32 %v47, %v53
  %v57 = vpack.c.bf16 %v56, %v55
  %v59 = vunpack.c.l.b16 %v57
  %v60 = vunpack.c.h.b16 %v57
  %v61 = vpack.c.b16 %v59, %v59
  %v62 = vpack.c.b16 %v60, %v60
  %65 = vst [vmem:[%s3] sm:$0xf] %v61
  %66 = vst [vmem:[%s3 + $0x4] sm:$0xf] %v62
  // Predicated region
  $region14: #{gpt2_forward.12} parent=0 // pred_check
    _
  $region15: #{gpt2_forward.12} parent=0 // pred_check_branch
    %68 = sbr.rel (0) target = $region17
  $region16: #{gpt2_forward.12} parent=0 // pred_region
    _
  $region17: #{gpt2_forward.12} parent=0 // pred_fallthru
    _
  // Predicated region
  $region18: #{gpt2_forward.12} parent=0 // pred_check
    _
  $region19: #{gpt2_forward.12} parent=0 // pred_check_branch
    %70 = sbr.rel (0) target = $region21
  $region20: #{gpt2_forward.12} parent=0 // pred_region
    _
  $region21: #{gpt2_forward.12} parent=0 // pred_fallthru
    _

// kernel: gpt2_forward.15
$region0: #{gpt2_forward.15}
  #allocation0 [shape = 'u32[]', space=smem, size = 0x4, offset = 0x4, fixed_abs, tag = 'smem constant byte address 0x4 - core index']
  #allocation1 [shape = 'u32[144,128]{1,0:T(1,128)}', space=vmem, size = 0x12000, scoped, tag = 'internal scratch']
  #allocation2 [shape = 'f32[16,128]{1,0:T(8,128)}', space=vmem, size = 0x2000, scoped, tag = 'scratch operand']
  %s0 = inlined_call_operand.vmem [shape: bf16[16,128], index: 0, kind: input, shape index: {}]
  %s1 = inlined_call_operand.vmem [shape: bf16[128,128], index: 1, kind: input, shape index: {}]
  %s2 = inlined_call_operand.vmem [shape: f32[1,128], index: 2, kind: input, shape index: {}]
  %s3 = inlined_call_operand.vmem [shape: f32[16,128], index: 3, kind: input, shape index: {}]
  %s4 = inlined_call_operand.vmem [shape: f32[1,128], index: 4, kind: input, shape index: {}]
  %s5 = inlined_call_operand.vmem [shape: f32[1,128], index: 5, kind: input, shape index: {}]
  %s6 = inlined_call_operand.vmem [shape: f32[16,128], index: 6, kind: output, shape index: {0}]
  %s7 = inlined_call_operand.vmem [shape: bf16[16,128], index: 7, kind: output, shape index: {1}]
  %8 = xla_tuple %s6, %s7
  %s9 = sld [smem:[#allocation0]]
  $region50: #{gpt2_forward.15} parent=0
    _
  %s11 = ssub.s32 1, %s9
  %s12 = scalar_select 0, %s11, %s9
  // Predicated region
  $region2: #{gpt2_forward.15} parent=0 // pred_check
    _
  $region3: #{gpt2_forward.15} parent=0 // pred_check_branch
    %14 = sbr.rel (0) target = $region5
  $region4: #{gpt2_forward.15} parent=0 // pred_region
    _
  $region5: #{gpt2_forward.15} parent=0 // pred_fallthru
    _
  // Predicated region
  $region6: #{gpt2_forward.15} parent=0 // pred_check
    _
  $region7: #{gpt2_forward.15} parent=0 // pred_check_branch
    %16 = sbr.rel (0) target = $region9
  $region8: #{gpt2_forward.15} parent=0 // pred_region
    _
  $region9: #{gpt2_forward.15} parent=0 // pred_fallthru
    _
  // Predicated region
  $region10: #{gpt2_forward.15} parent=0 // pred_check
    _
  $region11: #{gpt2_forward.15} parent=0 // pred_check_branch
    %18 = sbr.rel (0) target = $region13
  $region12: #{gpt2_forward.15} parent=0 // pred_region
    _
  $region13: #{gpt2_forward.15} parent=0 // pred_fallthru
    _
  // Predicated region
  $region14: #{gpt2_forward.15} parent=0 // pred_check
    _
  $region15: #{gpt2_forward.15} parent=0 // pred_check_branch
    %20 = sbr.rel (0) target = $region17
  $region16: #{gpt2_forward.15} parent=0 // pred_region
    _
  $region17: #{gpt2_forward.15} parent=0 // pred_fallthru
    _
  // Predicated region
  $region18: #{gpt2_forward.15} parent=0 // pred_check
    _
  $region19: #{gpt2_forward.15} parent=0 // pred_check_branch
    %22 = sbr.rel (0) target = $region21
  $region20: #{gpt2_forward.15} parent=0 // pred_region
    _
  $region21: #{gpt2_forward.15} parent=0 // pred_fallthru
    _
  // Predicated region
  $region22: #{gpt2_forward.15} parent=0 // pred_check
    _
  $region23: #{gpt2_forward.15} parent=0 // pred_check_branch
    %24 = sbr.rel (0) target = $region25
  $region24: #{gpt2_forward.15} parent=0 // pred_region
    _
  $region25: #{gpt2_forward.15} parent=0 // pred_fallthru
    _
  %p26 = scmp.eq.s32.totalorder 0, 0
  // Predicated region
  $region26: #{gpt2_forward.15} parent=0 // pred_check
    %p27 = pneg %p26
  $region27: #{gpt2_forward.15} parent=0 // pred_check_branch
    %29 = sbr.rel (%p27) target = $region29
  $region28: #{gpt2_forward.15} parent=0 // pred_region
    %30 = vst [vmem:[#allocation2] sm:$0xff] 0.0
    %31 = vst [vmem:[#allocation2 + $0x8] sm:$0xff] 0.0
  $region29: #{gpt2_forward.15} parent=0 // pred_fallthru
    _
  %v32 = vld [vmem:[#allocation2] sm:$0xff]
  %v33 = vld [vmem:[#allocation2 + $0x8] sm:$0xff]
  %v34 = vld [vmem:[%s0] sm:$0xf]
  %v35 = vld [vmem:[%s0 + $0x4] sm:$0xf]
  %v36 = vld [vmem:[%s1] sm:$0xf]
  %v37 = vld [vmem:[%s1 + $0x4] sm:$0xf]
  %v38 = vld [vmem:[%s1 + $0x8] sm:$0xf]
  %v39 = vld [vmem:[%s1 + $0xc] sm:$0xf]
  %v40 = vld [vmem:[%s1 + $0x10] sm:$0xf]
  %v41 = vld [vmem:[%s1 + $0x14] sm:$0xf]
  %v42 = vld [vmem:[%s1 + $0x18] sm:$0xf]
  %v43 = vld [vmem:[%s1 + $0x1c] sm:$0xf]
  %v44 = vld [vmem:[%s1 + $0x20] sm:$0xf]
  %v45 = vld [vmem:[%s1 + $0x24] sm:$0xf]
  %v46 = vld [vmem:[%s1 + $0x28] sm:$0xf]
  %v47 = vld [vmem:[%s1 + $0x2c] sm:$0xf]
  %v48 = vld [vmem:[%s1 + $0x30] sm:$0xf]
  %v49 = vld [vmem:[%s1 + $0x34] sm:$0xf]
  %v50 = vld [vmem:[%s1 + $0x38] sm:$0xf]
  %v51 = vld [vmem:[%s1 + $0x3c] sm:$0xf]
  %v54 = vunpack.c.l.b16 %v34
  %v55 = vunpack.c.l.b16 %v35
  %v56 = vpack.c.b16 %v55, %v54
  %v74 = vunpack.c.l.b16 %v36
  %v75 = vunpack.c.l.b16 %v37
  %v76 = vunpack.c.l.b16 %v38
  %v77 = vunpack.c.l.b16 %v39
  %v78 = vunpack.c.l.b16 %v40
  %v79 = vunpack.c.l.b16 %v41
  %v80 = vunpack.c.l.b16 %v42
  %v81 = vunpack.c.l.b16 %v43
  %v82 = vunpack.c.l.b16 %v44
  %v83 = vunpack.c.l.b16 %v45
  %v84 = vunpack.c.l.b16 %v46
  %v85 = vunpack.c.l.b16 %v47
  %v86 = vunpack.c.l.b16 %v48
  %v87 = vunpack.c.l.b16 %v49
  %v88 = vunpack.c.l.b16 %v50
  %v89 = vunpack.c.l.b16 %v51
  %v90 = vpack.c.b16 %v75, %v74
  %v91 = vpack.c.b16 %v77, %v76
  %v92 = vpack.c.b16 %v79, %v78
  %v93 = vpack.c.b16 %v81, %v80
  %v94 = vpack.c.b16 %v83, %v82
  %v95 = vpack.c.b16 %v85, %v84
  %v96 = vpack.c.b16 %v87, %v86
  %v97 = vpack.c.b16 %v89, %v88
  %106 = vmatprep.subr.bf16.mxu0 0
  %107 = vmatpush1.bf16.msra.mxu0 %v90
  %108 = vmatprep.subr.bf16.mxu0 0
  %109 = vmatpush1.bf16.msra.mxu0 %v91
  %110 = vmatprep.subr.bf16.mxu0 0
  %111 = vmatpush1.bf16.msra.mxu0 %v92
  %112 = vmatprep.subr.bf16.mxu0 0
  %113 = vmatpush1.bf16.msra.mxu0 %v93
  %114 = vmatprep.subr.bf16.mxu0 0
  %115 = vmatpush1.bf16.msra.mxu0 %v94
  %116 = vmatprep.subr.bf16.mxu0 0
  %117 = vmatpush1.bf16.msra.mxu0 %v95
  %118 = vmatprep.subr.bf16.mxu0 0
  %119 = vmatpush1.bf16.msra.mxu0 %v96
  %120 = vmatprep.subr.bf16.mxu0 0
  %121 = vmatpush1.bf16.msra.mxu0 %v97
  %122 = vmatprep.subr.bf16.mxu0 0
  %123 = vmatpush1.bf16.msra.mxu0 0
  %124 = vmatprep.subr.bf16.mxu0 0
  %125 = vmatpush1.bf16.msra.mxu0 0
  %126 = vmatprep.subr.bf16.mxu0 0
  %127 = vmatpush1.bf16.msra.mxu0 0
  %128 = vmatprep.subr.bf16.mxu0 0
  %129 = vmatpush1.bf16.msra.mxu0 0
  %130 = vmatprep.subr.bf16.mxu0 0
  %131 = vmatpush1.bf16.msra.mxu0 0
  %132 = vmatprep.subr.bf16.mxu0 0
  %133 = vmatpush1.bf16.msra.mxu0 0
  %134 = vmatprep.subr.bf16.mxu0 0
  %135 = vmatpush1.bf16.msra.mxu0 0
  %136 = vmatprep.subr.bf16.mxu0 0
  %137 = vmatpush1.bf16.msra.mxu0 0
  %138 = vmatprep.mubr.bf16.mxu0 0
  %139 = vmatmul.mubr.bf16.gmra.mrb[0].mxu0 %v56
  %v140 = vpop.f32.mrb[0].mxu0
  %v141 = vadd.f32 0.0, %v140
  %v142 = vpop.f32.mrb[0].mxu0
  %v143 = vpop.f32.mrb[0].mxu0
  %v144 = vadd.f32 0.0, %v143
  %v145 = vpop.f32.mrb[0].mxu0
  %146 = vdwg.mxu0
  %v147 = vadd.f32 %v32, %v141
  %v148 = vadd.f32 %v33, %v144
  %149 = vst [vmem:[#allocation2] sm:$0xff] %v147
  %150 = vst [vmem:[#allocation2 + $0x8] sm:$0xff] %v148
  // Predicated region
  $region30: #{gpt2_forward.15} parent=0 // pred_check
    %p151 = pneg %p26
  $region31: #{gpt2_forward.15} parent=0 // pred_check_branch
    %153 = sbr.rel (%p151) target = $region33
  $region32: #{gpt2_forward.15} parent=0 // pred_region
    %v154 = vld [vmem:[#allocation2] sm:$0xff]
    %v155 = vld [vmem:[#allocation2 + $0x8] sm:$0xff]
    %v156 = vld [vmem:[%s2] sm:$0x1]
    %v158 = vlaneseq
    %v159 = vshrl.u32 %v158, 7
    %v160 = vsub.s32 0, %v159
    %v161 = vrot.slane %v156, %v160
    %v163 = vadd.f32 %v154, %v161
    %v164 = vadd.f32 %v155, %v161
    %v165 = vld [vmem:[%s3] sm:$0xff]
    %v166 = vld [vmem:[%s3 + $0x8] sm:$0xff]
    %v167 = vadd.f32 %v163, %v165
    %v168 = vadd.f32 %v164, %v166
    %169 = vst [vmem:[%s6] sm:$0xff] %v167
    %170 = vst [vmem:[%s6 + $0x8] sm:$0xff] %v168
    %171 = vadd.xlane.f32.xlu0 %v167
    %v172 = vpop.xlane.xlu0 %171
    %173 = vadd.xlane.f32.xlu0 %v168
    %v174 = vpop.xlane.xlu0 %173
    %v175 = vrcp.pop 128.0
    %v176 = vmul.f32 %v172, %v175
    %v177 = vmul.f32 %v174, %v175
    %v178 = vsub.f32 %v167, %v176
    %v179 = vsub.f32 %v168, %v177
    %v180 = vmul.f32 %v178, %v178
    %v181 = vmul.f32 %v179, %v179
    %182 = vadd.xlane.f32.xlu0 %v180
    %v183 = vpop.xlane.xlu0 %182
    %184 = vadd.xlane.f32.xlu0 %v181
    %v185 = vpop.xlane.xlu0 %184
    %v186 = vmul.f32 %v183, %v175
    %v187 = vmul.f32 %v185, %v175
    %v188 = vadd.f32 %v186, 1e-05
    %v189 = vadd.f32 %v187, 1e-05
    %v190 = vrsqrt.pop %v188
    %v191 = vrsqrt.pop %v189
    %v192 = vmul.f32 %v178, %v190
    %v193 = vmul.f32 %v179, %v191
    %v194 = vld [vmem:[%s4] sm:$0x1]
    %v196 = vlaneseq
    %v197 = vshrl.u32 %v196, 7
    %v198 = vsub.s32 0, %v197
    %v199 = vrot.slane %v194, %v198
    %v201 = vmul.f32 %v192, %v199
    %v202 = vmul.f32 %v193, %v199
    %v203 = vld [vmem:[%s5] sm:$0x1]
    %v205 = vlaneseq
    %v206 = vshrl.u32 %v205, 7
    %v207 = vsub.s32 0, %v206
    %v208 = vrot.slane %v203, %v207
    %v210 = vadd.f32 %v201, %v208
    %v211 = vadd.f32 %v202, %v208
    %v212 = vpack.c.bf16 %v211, %v210
    %v214 = vunpack.c.l.b16 %v212
    %v215 = vunpack.c.h.b16 %v212
    %v216 = vpack.c.b16 %v214, %v214
    %v217 = vpack.c.b16 %v215, %v215
    %220 = vst [vmem:[%s7] sm:$0xf] %v216
    %221 = vst [vmem:[%s7 + $0x4] sm:$0xf] %v217
  $region33: #{gpt2_forward.15} parent=0 // pred_fallthru
    _
  // Predicated region
  $region34: #{gpt2_forward.15} parent=0 // pred_check
    _
  $region35: #{gpt2_forward.15} parent=0 // pred_check_branch
    %223 = sbr.rel (0) target = $region37
  $region36: #{gpt2_forward.15} parent=0 // pred_region
    _
  $region37: #{gpt2_forward.15} parent=0 // pred_fallthru
    _
  // Predicated region
  $region38: #{gpt2_forward.15} parent=0 // pred_check
    _
  $region39: #{gpt2_forward.15} parent=0 // pred_check_branch
    %225 = sbr.rel (0) target = $region41
  $region40: #{gpt2_forward.15} parent=0 // pred_region
    _
  $region41: #{gpt2_forward.15} parent=0 // pred_fallthru
    _
  // Predicated region
  $region42: #{gpt2_forward.15} parent=0 // pred_check
    _
  $region43: #{gpt2_forward.15} parent=0 // pred_check_branch
    %227 = sbr.rel (0) target = $region45
  $region44: #{gpt2_forward.15} parent=0 // pred_region
    _
  $region45: #{gpt2_forward.15} parent=0 // pred_fallthru
    _
  // Predicated region
  $region46: #{gpt2_forward.15} parent=0 // pred_check
    _
  $region47: #{gpt2_forward.15} parent=0 // pred_check_branch
    %229 = sbr.rel (0) target = $region49
  $region48: #{gpt2_forward.15} parent=0 // pred_region
    _
  $region49: #{gpt2_forward.15} parent=0 // pred_fallthru
    _

// kernel: gpt2_forward.13
$region0: #{gpt2_forward.13}
  #allocation0 [shape = 'u32[]', space=smem, size = 0x4, offset = 0x4, fixed_abs, tag = 'smem constant byte address 0x4 - core index']
  #allocation1 [shape = 'u32[144,128]{1,0:T(1,128)}', space=vmem, size = 0x12000, scoped, tag = 'internal scratch']
  #allocation2 [shape = 'f32[16,384]{1,0:T(8,128)}', space=vmem, size = 0x6000, scoped, tag = 'scratch operand']
  %s0 = inlined_call_operand.vmem [shape: bf16[16,128], index: 0, kind: input, shape index: {}]
  %s1 = inlined_call_operand.vmem [shape: bf16[128,384], index: 1, kind: input, shape index: {}]
  %s2 = inlined_call_operand.vmem [shape: f32[1,384], index: 2, kind: input, shape index: {}]
  %s3 = inlined_call_operand.vmem [shape: bf16[16,384], index: 3, kind: output, shape index: {}]
  %s4 = sld [smem:[#allocation0]]
  $region30: #{gpt2_forward.13} parent=0
    _
  %s6 = ssub.s32 1, %s4
  %s7 = scalar_select 0, %s6, %s4
  // Predicated region
  $region2: #{gpt2_forward.13} parent=0 // pred_check
    _
  $region3: #{gpt2_forward.13} parent=0 // pred_check_branch
    %9 = sbr.rel (0) target = $region5
  $region4: #{gpt2_forward.13} parent=0 // pred_region
    _
  $region5: #{gpt2_forward.13} parent=0 // pred_fallthru
    _
  // Predicated region
  $region6: #{gpt2_forward.13} parent=0 // pred_check
    _
  $region7: #{gpt2_forward.13} parent=0 // pred_check_branch
    %11 = sbr.rel (0) target = $region9
  $region8: #{gpt2_forward.13} parent=0 // pred_region
    _
  $region9: #{gpt2_forward.13} parent=0 // pred_fallthru
    _
  // Predicated region
  $region10: #{gpt2_forward.13} parent=0 // pred_check
    _
  $region11: #{gpt2_forward.13} parent=0 // pred_check_branch
    %13 = sbr.rel (0) target = $region13
  $region12: #{gpt2_forward.13} parent=0 // pred_region
    _
  $region13: #{gpt2_forward.13} parent=0 // pred_fallthru
    _
  %p15 = scmp.eq.s32.totalorder 0, 0
  // Predicated region
  $region14: #{gpt2_forward.13} parent=0 // pred_check
    %p16 = pneg %p15
  $region15: #{gpt2_forward.13} parent=0 // pred_check_branch
    %18 = sbr.rel (%p16) target = $region17
  $region16: #{gpt2_forward.13} parent=0 // pred_region
    %19 = vst [vmem:[#allocation2] sm:$0xff] 0.0
    %20 = vst [vmem:[#allocation2 + $0x8] sm:$0xff] 0.0
    %21 = vst [vmem:[#allocation2 + $0x10] sm:$0xff] 0.0
    %22 = vst [vmem:[#allocation2 + $0x18] sm:$0xff] 0.0
    %23 = vst [vmem:[#allocation2 + $0x20] sm:$0xff] 0.0
    %24 = vst [vmem:[#allocation2 + $0x28] sm:$0xff] 0.0
  $region17: #{gpt2_forward.13} parent=0 // pred_fallthru
    _
  %v25 = vld [vmem:[#allocation2] sm:$0xff]
  %v26 = vld [vmem:[#allocation2 + $0x8] sm:$0xff]
  %v27 = vld [vmem:[#allocation2 + $0x10] sm:$0xff]
  %v28 = vld [vmem:[#allocation2 + $0x18] sm:$0xff]
  %v29 = vld [vmem:[#allocation2 + $0x20] sm:$0xff]
  %v30 = vld [vmem:[#allocation2 + $0x28] sm:$0xff]
  %v31 = vld [vmem:[%s0] sm:$0xf]
  %v32 = vld [vmem:[%s0 + $0x4] sm:$0xf]
  %v33 = vld [vmem:[%s1] sm:$0xff]
  %v34 = vld [vmem:[%s1 + $0x8] sm:$0xf]
  %v35 = vld [vmem:[%s1 + $0xc] sm:$0xff]
  %v36 = vld [vmem:[%s1 + $0x14] sm:$0xf]
  %v37 = vld [vmem:[%s1 + $0x18] sm:$0xff]
  %v38 = vld [vmem:[%s1 + $0x20] sm:$0xf]
  %v39 = vld [vmem:[%s1 + $0x24] sm:$0xff]
  %v40 = vld [vmem:[%s1 + $0x2c] sm:$0xf]
  %v41 = vld [vmem:[%s1 + $0x30] sm:$0xff]
  %v42 = vld [vmem:[%s1 + $0x38] sm:$0xf]
  %v43 = vld [vmem:[%s1 + $0x3c] sm:$0xff]
  %v44 = vld [vmem:[%s1 + $0x44] sm:$0xf]
  %v45 = vld [vmem:[%s1 + $0x48] sm:$0xff]
  %v46 = vld [vmem:[%s1 + $0x50] sm:$0xf]
  %v47 = vld [vmem:[%s1 + $0x54] sm:$0xff]
  %v48 = vld [vmem:[%s1 + $0x5c] sm:$0xf]
  %v49 = vld [vmem:[%s1 + $0x60] sm:$0xff]
  %v50 = vld [vmem:[%s1 + $0x68] sm:$0xf]
  %v51 = vld [vmem:[%s1 + $0x6c] sm:$0xff]
  %v52 = vld [vmem:[%s1 + $0x74] sm:$0xf]
  %v53 = vld [vmem:[%s1 + $0x78] sm:$0xff]
  %v54 = vld [vmem:[%s1 + $0x80] sm:$0xf]
  %v55 = vld [vmem:[%s1 + $0x84] sm:$0xff]
  %v56 = vld [vmem:[%s1 + $0x8c] sm:$0xf]
  %v57 = vld [vmem:[%s1 + $0x90] sm:$0xff]
  %v58 = vld [vmem:[%s1 + $0x98] sm:$0xf]
  %v59 = vld [vmem:[%s1 + $0x9c] sm:$0xff]
  %v60 = vld [vmem:[%s1 + $0xa4] sm:$0xf]
  %v61 = vld [vmem:[%s1 + $0xa8] sm:$0xff]
  %v62 = vld [vmem:[%s1 + $0xb0] sm:$0xf]
  %v63 = vld [vmem:[%s1 + $0xb4] sm:$0xff]
  %v64 = vld [vmem:[%s1 + $0xbc] sm:$0xf]
  %v67 = vunpack.c.l.b16 %v31
  %v68 = vunpack.c.l.b16 %v32
  %v69 = vpack.c.b16 %v68, %v67
  %v103 = vunpack.c.l.b16 %v33
  %v104 = vunpack.c.h.b16 %v33
  %v105 = vunpack.c.l.b16 %v34
  %v106 = vunpack.c.l.b16 %v35
  %v107 = vunpack.c.h.b16 %v35
  %v108 = vunpack.c.l.b16 %v36
  %v109 = vunpack.c.l.b16 %v37
  %v110 = vunpack.c.h.b16 %v37
  %v111 = vunpack.c.l.b16 %v38
  %v112 = vunpack.c.l.b16 %v39
  %v113 = vunpack.c.h.b16 %v39
  %v114 = vunpack.c.l.b16 %v40
  %v115 = vunpack.c.l.b16 %v41
  %v116 = vunpack.c.h.b16 %v41
  %v117 = vunpack.c.l.b16 %v42
  %v118 = vunpack.c.l.b16 %v43
  %v119 = vunpack.c.h.b16 %v43
  %v120 = vunpack.c.l.b16 %v44
  %v121 = vunpack.c.l.b16 %v45
  %v122 = vunpack.c.h.b16 %v45
  %v123 = vunpack.c.l.b16 %v46
  %v124 = vunpack.c.l.b16 %v47
  %v125 = vunpack.c.h.b16 %v47
  %v126 = vunpack.c.l.b16 %v48
  %v127 = vunpack.c.l.b16 %v49
  %v128 = vunpack.c.h.b16 %v49
  %v129 = vunpack.c.l.b16 %v50
  %v130 = vunpack.c.l.b16 %v51
  %v131 = vunpack.c.h.b16 %v51
  %v132 = vunpack.c.l.b16 %v52
  %v133 = vunpack.c.l.b16 %v53
  %v134 = vunpack.c.h.b16 %v53
  %v135 = vunpack.c.l.b16 %v54
  %v136 = vunpack.c.l.b16 %v55
  %v137 = vunpack.c.h.b16 %v55
  %v138 = vunpack.c.l.b16 %v56
  %v139 = vunpack.c.l.b16 %v57
  %v140 = vunpack.c.h.b16 %v57
  %v141 = vunpack.c.l.b16 %v58
  %v142 = vunpack.c.l.b16 %v59
  %v143 = vunpack.c.h.b16 %v59
  %v144 = vunpack.c.l.b16 %v60
  %v145 = vunpack.c.l.b16 %v61
  %v146 = vunpack.c.h.b16 %v61
  %v147 = vunpack.c.l.b16 %v62
  %v148 = vunpack.c.l.b16 %v63
  %v149 = vunpack.c.h.b16 %v63
  %v150 = vunpack.c.l.b16 %v64
  %v151 = vpack.c.b16 %v106, %v103
  %v152 = vpack.c.b16 %v107, %v104
  %v153 = vpack.c.b16 %v108, %v105
  %v154 = vpack.c.b16 %v112, %v109
  %v155 = vpack.c.b16 %v113, %v110
  %v156 = vpack.c.b16 %v114, %v111
  %v157 = vpack.c.b16 %v118, %v115
  %v158 = vpack.c.b16 %v119, %v116
  %v159 = vpack.c.b16 %v120, %v117
  %v160 = vpack.c.b16 %v124, %v121
  %v161 = vpack.c.b16 %v125, %v122
  %v162 = vpack.c.b16 %v126, %v123
  %v163 = vpack.c.b16 %v130, %v127
  %v164 = vpack.c.b16 %v131, %v128
  %v165 = vpack.c.b16 %v132, %v129
  %v166 = vpack.c.b16 %v136, %v133
  %v167 = vpack.c.b16 %v137, %v134
  %v168 = vpack.c.b16 %v138, %v135
  %v169 = vpack.c.b16 %v142, %v139
  %v170 = vpack.c.b16 %v143, %v140
  %v171 = vpack.c.b16 %v144, %v141
  %v172 = vpack.c.b16 %v148, %v145
  %v173 = vpack.c.b16 %v149, %v146
  %v174 = vpack.c.b16 %v150, %v147
  %199 = vmatprep.subr.bf16.mxu0 %v152
  %200 = vmatpush1.bf16.msra.mxu0 %v151
  %201 = vmatprep.subr.bf16.mxu0 %v155
  %202 = vmatpush1.bf16.msra.mxu0 %v154
  %203 = vmatprep.subr.bf16.mxu0 %v158
  %204 = vmatpush1.bf16.msra.mxu0 %v157
  %205 = vmatprep.subr.bf16.mxu0 %v161
  %206 = vmatpush1.bf16.msra.mxu0 %v160
  %207 = vmatprep.subr.bf16.mxu0 %v164
  %208 = vmatpush1.bf16.msra.mxu0 %v163
  %209 = vmatprep.subr.bf16.mxu0 %v167
  %210 = vmatpush1.bf16.msra.mxu0 %v166
  %211 = vmatprep.subr.bf16.mxu0 %v170
  %212 = vmatpush1.bf16.msra.mxu0 %v169
  %213 = vmatprep.subr.bf16.mxu0 %v173
  %214 = vmatpush1.bf16.msra.mxu0 %v172
  %215 = vmatprep.subr.bf16.mxu0 0
  %216 = vmatpush1.bf16.msra.mxu0 0
  %217 = vmatprep.subr.bf16.mxu0 0
  %218 = vmatpush1.bf16.msra.mxu0 0
  %219 = vmatprep.subr.bf16.mxu0 0
  %220 = vmatpush1.bf16.msra.mxu0 0
  %221 = vmatprep.subr.bf16.mxu0 0
  %222 = vmatpush1.bf16.msra.mxu0 0
  %223 = vmatprep.subr.bf16.mxu0 0
  %224 = vmatpush1.bf16.msra.mxu0 0
  %225 = vmatprep.subr.bf16.mxu0 0
  %226 = vmatpush1.bf16.msra.mxu0 0
  %227 = vmatprep.subr.bf16.mxu0 0
  %228 = vmatpush1.bf16.msra.mxu0 0
  %229 = vmatprep.subr.bf16.mxu0 0
  %230 = vmatpush1.bf16.msra.mxu0 0
  %231 = vmatprep.mubr.bf16.mxu0 0
  %232 = vmatmul.mubr.bf16.gmra.mrb[0].mxu0 %v69
  %v233 = vpop.f32.mrb[0].mxu0
  %v234 = vadd.f32 0.0, %v233
  %v235 = vpop.f32.mrb[0].mxu0
  %v236 = vadd.f32 0.0, %v235
  %v237 = vpop.f32.mrb[0].mxu0
  %v238 = vadd.f32 0.0, %v237
  %v239 = vpop.f32.mrb[0].mxu0
  %v240 = vadd.f32 0.0, %v239
  %241 = vdwg.mxu0
  %242 = vmatprep.subr.bf16.mxu0 0
  %243 = vmatpush1.bf16.msra.mxu0 %v153
  %244 = vmatprep.subr.bf16.mxu0 0
  %245 = vmatpush1.bf16.msra.mxu0 %v156
  %246 = vmatprep.subr.bf16.mxu0 0
  %247 = vmatpush1.bf16.msra.mxu0 %v159
  %248 = vmatprep.subr.bf16.mxu0 0
  %249 = vmatpush1.bf16.msra.mxu0 %v162
  %250 = vmatprep.subr.bf16.mxu0 0
  %251 = vmatpush1.bf16.msra.mxu0 %v165
  %252 = vmatprep.subr.bf16.mxu0 0
  %253 = vmatpush1.bf16.msra.mxu0 %v168
  %254 = vmatprep.subr.bf16.mxu0 0
  %255 = vmatpush1.bf16.msra.mxu0 %v171
  %256 = vmatprep.subr.bf16.mxu0 0
  %257 = vmatpush1.bf16.msra.mxu0 %v174
  %258 = vmatprep.subr.bf16.mxu0 0
  %259 = vmatpush1.bf16.msra.mxu0 0
  %260 = vmatprep.subr.bf16.mxu0 0
  %261 = vmatpush1.bf16.msra.mxu0 0
  %262 = vmatprep.subr.bf16.mxu0 0
  %263 = vmatpush1.bf16.msra.mxu0 0
  %264 = vmatprep.subr.bf16.mxu0 0
  %265 = vmatpush1.bf16.msra.mxu0 0
  %266 = vmatprep.subr.bf16.mxu0 0
  %267 = vmatpush1.bf16.msra.mxu0 0
  %268 = vmatprep.subr.bf16.mxu0 0
  %269 = vmatpush1.bf16.msra.mxu0 0
  %270 = vmatprep.subr.bf16.mxu0 0
  %271 = vmatpush1.bf16.msra.mxu0 0
  %272 = vmatprep.subr.bf16.mxu0 0
  %273 = vmatpush1.bf16.msra.mxu0 0
  %274 = vmatprep.mubr.bf16.mxu0 0
  %275 = vmatmul.mubr.bf16.gmra.mrb[0].mxu0 %v69
  %v276 = vpop.f32.mrb[0].mxu0
  %v277 = vadd.f32 0.0, %v276
  %v278 = vpop.f32.mrb[0].mxu0
  %v279 = vpop.f32.mrb[0].mxu0
  %v280 = vadd.f32 0.0, %v279
  %v281 = vpop.f32.mrb[0].mxu0
  %282 = vdwg.mxu0
  %v283 = vadd.f32 %v25, %v234
  %v284 = vadd.f32 %v26, %v236
  %v285 = vadd.f32 %v27, %v277
  %v286 = vadd.f32 %v28, %v238
  %v287 = vadd.f32 %v29, %v240
  %v288 = vadd.f32 %v30, %v280
  %289 = vst [vmem:[#allocation2] sm:$0xff] %v283
  %290 = vst [vmem:[#allocation2 + $0x8] sm:$0xff] %v284
  %291 = vst [vmem:[#allocation2 + $0x10] sm:$0xff] %v285
  %292 = vst [vmem:[#allocation2 + $0x18] sm:$0xff] %v286
  %293 = vst [vmem:[#allocation2 + $0x20] sm:$0xff] %v287
  %294 = vst [vmem:[#allocation2 + $0x28] sm:$0xff] %v288
  // Predicated region
  $region18: #{gpt2_forward.13} parent=0 // pred_check
    %p295 = pneg %p15
  $region19: #{gpt2_forward.13} parent=0 // pred_check_branch
    %297 = sbr.rel (%p295) target = $region21
  $region20: #{gpt2_forward.13} parent=0 // pred_region
    %v298 = vld [vmem:[#allocation2] sm:$0xff]
    %v299 = vld [vmem:[#allocation2 + $0x8] sm:$0xff]
    %v300 = vld [vmem:[#allocation2 + $0x10] sm:$0xff]
    %v301 = vld [vmem:[#allocation2 + $0x18] sm:$0xff]
    %v302 = vld [vmem:[#allocation2 + $0x20] sm:$0xff]
    %v303 = vld [vmem:[#allocation2 + $0x28] sm:$0xff]
    %v304 = vld [vmem:[%s2] sm:$0x7]
    %v306 = vlaneseq
    %v307 = vshrl.u32 %v306, 7
    %v308 = vsub.s32 0, %v307
    %v309 = vrot.slane %v304, %v308
    %v310 = vlaneseq
    %v311 = vshrl.u32 %v310, 7
    %v312 = vsub.s32 1, %v311
    %v313 = vrot.slane %v304, %v312
    %v314 = vlaneseq
    %v315 = vshrl.u32 %v314, 7
    %v316 = vsub.s32 2, %v315
    %v317 = vrot.slane %v304, %v316
    %v321 = vadd.f32 %v298, %v309
    %v322 = vadd.f32 %v299, %v313
    %v323 = vadd.f32 %v300, %v317
    %v324 = vadd.f32 %v301, %v309
    %v325 = vadd.f32 %v302, %v313
    %v326 = vadd.f32 %v303, %v317
    %v327 = vpack.c.bf16 %v324, %v321
    %v328 = vpack.c.bf16 %v325, %v322
    %v329 = vpack.c.bf16 %v326, %v323
    %v333 = vunpack.c.l.b16 %v327
    %v334 = vunpack.c.l.b16 %v328
    %v335 = vunpack.c.l.b16 %v329
    %v336 = vunpack.c.h.b16 %v327
    %v337 = vunpack.c.h.b16 %v328
    %v338 = vunpack.c.h.b16 %v329
    %v339 = vpack.c.b16 %v334, %v333
    %v340 = vpack.c.b16 %v335, %v335
    %v341 = vpack.c.b16 %v337, %v336
    %v342 = vpack.c.b16 %v338, %v338
    %347 = vst [vmem:[%s3] sm:$0xff] %v339
    %348 = vst [vmem:[%s3 + $0x8] sm:$0xf] %v340
    %349 = vst [vmem:[%s3 + $0xc] sm:$0xff] %v341
    %350 = vst [vmem:[%s3 + $0x14] sm:$0xf] %v342
  $region21: #{gpt2_forward.13} parent=0 // pred_fallthru
    _
  // Predicated region
  $region22: #{gpt2_forward.13} parent=0 // pred_check
    _
  $region23: #{gpt2_forward.13} parent=0 // pred_check_branch
    %352 = sbr.rel (0) target = $region25
  $region24: #{gpt2_forward.13} parent=0 // pred_region
    _
  $region25: #{gpt2_forward.13} parent=0 // pred_fallthru
    _
  // Predicated region
  $region26: #{gpt2_forward.13} parent=0 // pred_check
    _
  $region27: #{gpt2_forward.13} parent=0 // pred_check_branch
    %354 = sbr.rel (0) target = $region29
  $region28: #{gpt2_forward.13} parent=0 // pred_region
    _
  $region29: #{gpt2_forward.13} parent=0 // pred_fallthru
    _

// kernel: gpt2_forward.16
$region0: #{gpt2_forward.16}
  #allocation0 [shape = 'u32[]', space=smem, size = 0x4, offset = 0x4, fixed_abs, tag = 'smem constant byte address 0x4 - core index']
  #allocation1 [shape = 'u32[144,128]{1,0:T(1,128)}', space=vmem, size = 0x12000, scoped, tag = 'internal scratch']
  #allocation2 [shape = 'f32[16,512]{1,0:T(8,128)}', space=vmem, size = 0x8000, scoped, tag = 'scratch operand']
  %s0 = inlined_call_operand.vmem [shape: bf16[16,128], index: 0, kind: input, shape index: {}]
  %s1 = inlined_call_operand.vmem [shape: bf16[128,512], index: 1, kind: input, shape index: {}]
  %s2 = inlined_call_operand.vmem [shape: f32[1,512], index: 2, kind: input, shape index: {}]
  %s3 = inlined_call_operand.vmem [shape: bf16[16,512], index: 3, kind: output, shape index: {}]
  %s4 = sld [smem:[#allocation0]]
  $region30: #{gpt2_forward.16} parent=0
    _
  %s6 = ssub.s32 1, %s4
  %s7 = scalar_select 0, %s6, %s4
  // Predicated region
  $region2: #{gpt2_forward.16} parent=0 // pred_check
    _
  $region3: #{gpt2_forward.16} parent=0 // pred_check_branch
    %9 = sbr.rel (0) target = $region5
  $region4: #{gpt2_forward.16} parent=0 // pred_region
    _
  $region5: #{gpt2_forward.16} parent=0 // pred_fallthru
    _
  // Predicated region
  $region6: #{gpt2_forward.16} parent=0 // pred_check
    _
  $region7: #{gpt2_forward.16} parent=0 // pred_check_branch
    %11 = sbr.rel (0) target = $region9
  $region8: #{gpt2_forward.16} parent=0 // pred_region
    _
  $region9: #{gpt2_forward.16} parent=0 // pred_fallthru
    _
  // Predicated region
  $region10: #{gpt2_forward.16} parent=0 // pred_check
    _
  $region11: #{gpt2_forward.16} parent=0 // pred_check_branch
    %13 = sbr.rel (0) target = $region13
  $region12: #{gpt2_forward.16} parent=0 // pred_region
    _
  $region13: #{gpt2_forward.16} parent=0 // pred_fallthru
    _
  %p15 = scmp.eq.s32.totalorder 0, 0
  // Predicated region
  $region14: #{gpt2_forward.16} parent=0 // pred_check
    %p16 = pneg %p15
  $region15: #{gpt2_forward.16} parent=0 // pred_check_branch
    %18 = sbr.rel (%p16) target = $region17
  $region16: #{gpt2_forward.16} parent=0 // pred_region
    %19 = vst [vmem:[#allocation2] sm:$0xff] 0.0
    %20 = vst [vmem:[#allocation2 + $0x8] sm:$0xff] 0.0
    %21 = vst [vmem:[#allocation2 + $0x10] sm:$0xff] 0.0
    %22 = vst [vmem:[#allocation2 + $0x18] sm:$0xff] 0.0
    %23 = vst [vmem:[#allocation2 + $0x20] sm:$0xff] 0.0
    %24 = vst [vmem:[#allocation2 + $0x28] sm:$0xff] 0.0
    %25 = vst [vmem:[#allocation2 + $0x30] sm:$0xff] 0.0
    %26 = vst [vmem:[#allocation2 + $0x38] sm:$0xff] 0.0
  $region17: #{gpt2_forward.16} parent=0 // pred_fallthru
    _
  %v27 = vld [vmem:[#allocation2] sm:$0xff]
  %v28 = vld [vmem:[#allocation2 + $0x8] sm:$0xff]
  %v29 = vld [vmem:[#allocation2 + $0x10] sm:$0xff]
  %v30 = vld [vmem:[#allocation2 + $0x18] sm:$0xff]
  %v31 = vld [vmem:[#allocation2 + $0x20] sm:$0xff]
  %v32 = vld [vmem:[#allocation2 + $0x28] sm:$0xff]
  %v33 = vld [vmem:[#allocation2 + $0x30] sm:$0xff]
  %v34 = vld [vmem:[#allocation2 + $0x38] sm:$0xff]
  %v35 = vld [vmem:[%s0] sm:$0xf]
  %v36 = vld [vmem:[%s0 + $0x4] sm:$0xf]
  %v37 = vld [vmem:[%s1] sm:$0xff]
  %v38 = vld [vmem:[%s1 + $0x8] sm:$0xff]
  %v39 = vld [vmem:[%s1 + $0x10] sm:$0xff]
  %v40 = vld [vmem:[%s1 + $0x18] sm:$0xff]
  %v41 = vld [vmem:[%s1 + $0x20] sm:$0xff]
  %v42 = vld [vmem:[%s1 + $0x28] sm:$0xff]
  %v43 = vld [vmem:[%s1 + $0x30] sm:$0xff]
  %v44 = vld [vmem:[%s1 + $0x38] sm:$0xff]
  %v45 = vld [vmem:[%s1 + $0x40] sm:$0xff]
  %v46 = vld [vmem:[%s1 + $0x48] sm:$0xff]
  %v47 = vld [vmem:[%s1 + $0x50] sm:$0xff]
  %v48 = vld [vmem:[%s1 + $0x58] sm:$0xff]
  %v49 = vld [vmem:[%s1 + $0x60] sm:$0xff]
  %v50 = vld [vmem:[%s1 + $0x68] sm:$0xff]
  %v51 = vld [vmem:[%s1 + $0x70] sm:$0xff]
  %v52 = vld [vmem:[%s1 + $0x78] sm:$0xff]
  %v53 = vld [vmem:[%s1 + $0x80] sm:$0xff]
  %v54 = vld [vmem:[%s1 + $0x88] sm:$0xff]
  %v55 = vld [vmem:[%s1 + $0x90] sm:$0xff]
  %v56 = vld [vmem:[%s1 + $0x98] sm:$0xff]
  %v57 = vld [vmem:[%s1 + $0xa0] sm:$0xff]
  %v58 = vld [vmem:[%s1 + $0xa8] sm:$0xff]
  %v59 = vld [vmem:[%s1 + $0xb0] sm:$0xff]
  %v60 = vld [vmem:[%s1 + $0xb8] sm:$0xff]
  %v61 = vld [vmem:[%s1 + $0xc0] sm:$0xff]
  %v62 = vld [vmem:[%s1 + $0xc8] sm:$0xff]
  %v63 = vld [vmem:[%s1 + $0xd0] sm:$0xff]
  %v64 = vld [vmem:[%s1 + $0xd8] sm:$0xff]
  %v65 = vld [vmem:[%s1 + $0xe0] sm:$0xff]
  %v66 = vld [vmem:[%s1 + $0xe8] sm:$0xff]
  %v67 = vld [vmem:[%s1 + $0xf0] sm:$0xff]
  %v68 = vld [vmem:[%s1 + $0xf8] sm:$0xff]
  %v71 = vunpack.c.l.b16 %v35
  %v72 = vunpack.c.l.b16 %v36
  %v73 = vpack.c.b16 %v72, %v71
  %v107 = vunpack.c.l.b16 %v37
  %v108 = vunpack.c.h.b16 %v37
  %v109 = vunpack.c.l.b16 %v38
  %v110 = vunpack.c.h.b16 %v38
  %v111 = vunpack.c.l.b16 %v39
  %v112 = vunpack.c.h.b16 %v39
  %v113 = vunpack.c.l.b16 %v40
  %v114 = vunpack.c.h.b16 %v40
  %v115 = vunpack.c.l.b16 %v41
  %v116 = vunpack.c.h.b16 %v41
  %v117 = vunpack.c.l.b16 %v42
  %v118 = vunpack.c.h.b16 %v42
  %v119 = vunpack.c.l.b16 %v43
  %v120 = vunpack.c.h.b16 %v43
  %v121 = vunpack.c.l.b16 %v44
  %v122 = vunpack.c.h.b16 %v44
  %v123 = vunpack.c.l.b16 %v45
  %v124 = vunpack.c.h.b16 %v45
  %v125 = vunpack.c.l.b16 %v46
  %v126 = vunpack.c.h.b16 %v46
  %v127 = vunpack.c.l.b16 %v47
  %v128 = vunpack.c.h.b16 %v47
  %v129 = vunpack.c.l.b16 %v48
  %v130 = vunpack.c.h.b16 %v48
  %v131 = vunpack.c.l.b16 %v49
  %v132 = vunpack.c.h.b16 %v49
  %v133 = vunpack.c.l.b16 %v50
  %v134 = vunpack.c.h.b16 %v50
  %v135 = vunpack.c.l.b16 %v51
  %v136 = vunpack.c.h.b16 %v51
  %v137 = vunpack.c.l.b16 %v52
  %v138 = vunpack.c.h.b16 %v52
  %v139 = vunpack.c.l.b16 %v53
  %v140 = vunpack.c.h.b16 %v53
  %v141 = vunpack.c.l.b16 %v54
  %v142 = vunpack.c.h.b16 %v54
  %v143 = vunpack.c.l.b16 %v55
  %v144 = vunpack.c.h.b16 %v55
  %v145 = vunpack.c.l.b16 %v56
  %v146 = vunpack.c.h.b16 %v56
  %v147 = vunpack.c.l.b16 %v57
  %v148 = vunpack.c.h.b16 %v57
  %v149 = vunpack.c.l.b16 %v58
  %v150 = vunpack.c.h.b16 %v58
  %v151 = vunpack.c.l.b16 %v59
  %v152 = vunpack.c.h.b16 %v59
  %v153 = vunpack.c.l.b16 %v60
  %v154 = vunpack.c.h.b16 %v60
  %v155 = vunpack.c.l.b16 %v61
  %v156 = vunpack.c.h.b16 %v61
  %v157 = vunpack.c.l.b16 %v62
  %v158 = vunpack.c.h.b16 %v62
  %v159 = vunpack.c.l.b16 %v63
  %v160 = vunpack.c.h.b16 %v63
  %v161 = vunpack.c.l.b16 %v64
  %v162 = vunpack.c.h.b16 %v64
  %v163 = vunpack.c.l.b16 %v65
  %v164 = vunpack.c.h.b16 %v65
  %v165 = vunpack.c.l.b16 %v66
  %v166 = vunpack.c.h.b16 %v66
  %v167 = vunpack.c.l.b16 %v67
  %v168 = vunpack.c.h.b16 %v67
  %v169 = vunpack.c.l.b16 %v68
  %v170 = vunpack.c.h.b16 %v68
  %v171 = vpack.c.b16 %v111, %v107
  %v172 = vpack.c.b16 %v112, %v108
  %v173 = vpack.c.b16 %v113, %v109
  %v174 = vpack.c.b16 %v114, %v110
  %v175 = vpack.c.b16 %v119, %v115
  %v176 = vpack.c.b16 %v120, %v116
  %v177 = vpack.c.b16 %v121, %v117
  %v178 = vpack.c.b16 %v122, %v118
  %v179 = vpack.c.b16 %v127, %v123
  %v180 = vpack.c.b16 %v128, %v124
  %v181 = vpack.c.b16 %v129, %v125
  %v182 = vpack.c.b16 %v130, %v126
  %v183 = vpack.c.b16 %v135, %v131
  %v184 = vpack.c.b16 %v136, %v132
  %v185 = vpack.c.b16 %v137, %v133
  %v186 = vpack.c.b16 %v138, %v134
  %v187 = vpack.c.b16 %v143, %v139
  %v188 = vpack.c.b16 %v144, %v140
  %v189 = vpack.c.b16 %v145, %v141
  %v190 = vpack.c.b16 %v146, %v142
  %v191 = vpack.c.b16 %v151, %v147
  %v192 = vpack.c.b16 %v152, %v148
  %v193 = vpack.c.b16 %v153, %v149
  %v194 = vpack.c.b16 %v154, %v150
  %v195 = vpack.c.b16 %v159, %v155
  %v196 = vpack.c.b16 %v160, %v156
  %v197 = vpack.c.b16 %v161, %v157
  %v198 = vpack.c.b16 %v162, %v158
  %v199 = vpack.c.b16 %v167, %v163
  %v200 = vpack.c.b16 %v168, %v164
  %v201 = vpack.c.b16 %v169, %v165
  %v202 = vpack.c.b16 %v170, %v166
  %235 = vmatprep.subr.bf16.mxu0 %v172
  %236 = vmatpush1.bf16.msra.mxu0 %v171
  %237 = vmatprep.subr.bf16.mxu0 %v176
  %238 = vmatpush1.bf16.msra.mxu0 %v175
  %239 = vmatprep.subr.bf16.mxu0 %v180
  %240 = vmatpush1.bf16.msra.mxu0 %v179
  %241 = vmatprep.subr.bf16.mxu0 %v184
  %242 = vmatpush1.bf16.msra.mxu0 %v183
  %243 = vmatprep.subr.bf16.mxu0 %v188
  %244 = vmatpush1.bf16.msra.mxu0 %v187
  %245 = vmatprep.subr.bf16.mxu0 %v192
  %246 = vmatpush1.bf16.msra.mxu0 %v191
  %247 = vmatprep.subr.bf16.mxu0 %v196
  %248 = vmatpush1.bf16.msra.mxu0 %v195
  %249 = vmatprep.subr.bf16.mxu0 %v200
  %250 = vmatpush1.bf16.msra.mxu0 %v199
  %251 = vmatprep.subr.bf16.mxu0 0
  %252 = vmatpush1.bf16.msra.mxu0 0
  %253 = vmatprep.subr.bf16.mxu0 0
  %254 = vmatpush1.bf16.msra.mxu0 0
  %255 = vmatprep.subr.bf16.mxu0 0
  %256 = vmatpush1.bf16.msra.mxu0 0
  %257 = vmatprep.subr.bf16.mxu0 0
  %258 = vmatpush1.bf16.msra.mxu0 0
  %259 = vmatprep.subr.bf16.mxu0 0
  %260 = vmatpush1.bf16.msra.mxu0 0
  %261 = vmatprep.subr.bf16.mxu0 0
  %262 = vmatpush1.bf16.msra.mxu0 0
  %263 = vmatprep.subr.bf16.mxu0 0
  %264 = vmatpush1.bf16.msra.mxu0 0
  %265 = vmatprep.subr.bf16.mxu0 0
  %266 = vmatpush1.bf16.msra.mxu0 0
  %267 = vmatprep.mubr.bf16.mxu0 0
  %268 = vmatmul.mubr.bf16.gmra.mrb[0].mxu0 %v73
  %v269 = vpop.f32.mrb[0].mxu0
  %v270 = vadd.f32 0.0, %v269
  %v271 = vpop.f32.mrb[0].mxu0
  %v272 = vadd.f32 0.0, %v271
  %v273 = vpop.f32.mrb[0].mxu0
  %v274 = vadd.f32 0.0, %v273
  %v275 = vpop.f32.mrb[0].mxu0
  %v276 = vadd.f32 0.0, %v275
  %277 = vdwg.mxu0
  %278 = vmatprep.subr.bf16.mxu0 %v174
  %279 = vmatpush1.bf16.msra.mxu0 %v173
  %280 = vmatprep.subr.bf16.mxu0 %v178
  %281 = vmatpush1.bf16.msra.mxu0 %v177
  %282 = vmatprep.subr.bf16.mxu0 %v182
  %283 = vmatpush1.bf16.msra.mxu0 %v181
  %284 = vmatprep.subr.bf16.mxu0 %v186
  %285 = vmatpush1.bf16.msra.mxu0 %v185
  %286 = vmatprep.subr.bf16.mxu0 %v190
  %287 = vmatpush1.bf16.msra.mxu0 %v189
  %288 = vmatprep.subr.bf16.mxu0 %v194
  %289 = vmatpush1.bf16.msra.mxu0 %v193
  %290 = vmatprep.subr.bf16.mxu0 %v198
  %291 = vmatpush1.bf16.msra.mxu0 %v197
  %292 = vmatprep.subr.bf16.mxu0 %v202
  %293 = vmatpush1.bf16.msra.mxu0 %v201
  %294 = vmatprep.subr.bf16.mxu0 0
  %295 = vmatpush1.bf16.msra.mxu0 0
  %296 = vmatprep.subr.bf16.mxu0 0
  %297 = vmatpush1.bf16.msra.mxu0 0
  %298 = vmatprep.subr.bf16.mxu0 0
  %299 = vmatpush1.bf16.msra.mxu0 0
  %300 = vmatprep.subr.bf16.mxu0 0
  %301 = vmatpush1.bf16.msra.mxu0 0
  %302 = vmatprep.subr.bf16.mxu0 0
  %303 = vmatpush1.bf16.msra.mxu0 0
  %304 = vmatprep.subr.bf16.mxu0 0
  %305 = vmatpush1.bf16.msra.mxu0 0
  %306 = vmatprep.subr.bf16.mxu0 0
  %307 = vmatpush1.bf16.msra.mxu0 0
  %308 = vmatprep.subr.bf16.mxu0 0
  %309 = vmatpush1.bf16.msra.mxu0 0
  %310 = vmatprep.mubr.bf16.mxu0 0
  %311 = vmatmul.mubr.bf16.gmra.mrb[0].mxu0 %v73
  %v312 = vpop.f32.mrb[0].mxu0
  %v313 = vadd.f32 0.0, %v312
  %v314 = vpop.f32.mrb[0].mxu0
  %v315 = vadd.f32 0.0, %v314
  %v316 = vpop.f32.mrb[0].mxu0
  %v317 = vadd.f32 0.0, %v316
  %v318 = vpop.f32.mrb[0].mxu0
  %v319 = vadd.f32 0.0, %v318
  %320 = vdwg.mxu0
  %v321 = vadd.f32 %v27, %v270
  %v322 = vadd.f32 %v28, %v272
  %v323 = vadd.f32 %v29, %v313
  %v324 = vadd.f32 %v30, %v315
  %v325 = vadd.f32 %v31, %v274
  %v326 = vadd.f32 %v32, %v276
  %v327 = vadd.f32 %v33, %v317
  %v328 = vadd.f32 %v34, %v319
  %329 = vst [vmem:[#allocation2] sm:$0xff] %v321
  %330 = vst [vmem:[#allocation2 + $0x8] sm:$0xff] %v322
  %331 = vst [vmem:[#allocation2 + $0x10] sm:$0xff] %v323
  %332 = vst [vmem:[#allocation2 + $0x18] sm:$0xff] %v324
  %333 = vst [vmem:[#allocation2 + $0x20] sm:$0xff] %v325
  %334 = vst [vmem:[#allocation2 + $0x28] sm:$0xff] %v326
  %335 = vst [vmem:[#allocation2 + $0x30] sm:$0xff] %v327
  %336 = vst [vmem:[#allocation2 + $0x38] sm:$0xff] %v328
  // Predicated region
  $region18: #{gpt2_forward.16} parent=0 // pred_check
    %p337 = pneg %p15
  $region19: #{gpt2_forward.16} parent=0 // pred_check_branch
    %339 = sbr.rel (%p337) target = $region21
  $region20: #{gpt2_forward.16} parent=0 // pred_region
    %v340 = vld [vmem:[#allocation2] sm:$0xff]
    %v341 = vld [vmem:[#allocation2 + $0x8] sm:$0xff]
    %v342 = vld [vmem:[#allocation2 + $0x10] sm:$0xff]
    %v343 = vld [vmem:[#allocation2 + $0x18] sm:$0xff]
    %v344 = vld [vmem:[#allocation2 + $0x20] sm:$0xff]
    %v345 = vld [vmem:[#allocation2 + $0x28] sm:$0xff]
    %v346 = vld [vmem:[#allocation2 + $0x30] sm:$0xff]
    %v347 = vld [vmem:[#allocation2 + $0x38] sm:$0xff]
    %v348 = vld [vmem:[%s2] sm:$0xf]
    %v350 = vlaneseq
    %v351 = vshrl.u32 %v350, 7
    %v352 = vsub.s32 0, %v351
    %v353 = vrot.slane %v348, %v352
    %v354 = vlaneseq
    %v355 = vshrl.u32 %v354, 7
    %v356 = vsub.s32 1, %v355
    %v357 = vrot.slane %v348, %v356
    %v358 = vlaneseq
    %v359 = vshrl.u32 %v358, 7
    %v360 = vsub.s32 2, %v359
    %v361 = vrot.slane %v348, %v360
    %v362 = vlaneseq
    %v363 = vshrl.u32 %v362, 7
    %v364 = vsub.s32 3, %v363
    %v365 = vrot.slane %v348, %v364
    %v370 = vadd.f32 %v340, %v353
    %v371 = vadd.f32 %v341, %v357
    %v372 = vadd.f32 %v342, %v361
    %v373 = vadd.f32 %v343, %v365
    %v374 = vadd.f32 %v344, %v353
    %v375 = vadd.f32 %v345, %v357
    %v376 = vadd.f32 %v346, %v361
    %v377 = vadd.f32 %v347, %v365
    %v378 = vmul.f32 %v370, 0.5
    %v379 = vmul.f32 %v371, 0.5
    %v380 = vmul.f32 %v372, 0.5
    %v381 = vmul.f32 %v373, 0.5
    %v382 = vmul.f32 %v374, 0.5
    %v383 = vmul.f32 %v375, 0.5
    %v384 = vmul.f32 %v376, 0.5
    %v385 = vmul.f32 %v377, 0.5
    %v386 = vmul.f32 %v370, 0.70710677
    %v387 = vmul.f32 %v371, 0.70710677
    %v388 = vmul.f32 %v372, 0.70710677
    %v389 = vmul.f32 %v373, 0.70710677
    %v390 = vmul.f32 %v374, 0.70710677
    %v391 = vmul.f32 %v375, 0.70710677
    %v392 = vmul.f32 %v376, 0.70710677
    %v393 = vmul.f32 %v377, 0.70710677
    %v394 = verf.f32.pop %v386
    %v395 = verf.f32.pop %v387
    %v396 = verf.f32.pop %v388
    %v397 = verf.f32.pop %v389
    %v398 = verf.f32.pop %v390
    %v399 = verf.f32.pop %v391
    %v400 = verf.f32.pop %v392
    %v401 = verf.f32.pop %v393
    %v402 = vadd.f32 %v394, 1.0
    %v403 = vadd.f32 %v395, 1.0
    %v404 = vadd.f32 %v396, 1.0
    %v405 = vadd.f32 %v397, 1.0
    %v406 = vadd.f32 %v398, 1.0
    %v407 = vadd.f32 %v399, 1.0
    %v408 = vadd.f32 %v400, 1.0
    %v409 = vadd.f32 %v401, 1.0
    %v410 = vmul.f32 %v378, %v402
    %v411 = vmul.f32 %v379, %v403
    %v412 = vmul.f32 %v380, %v404
    %v413 = vmul.f32 %v381, %v405
    %v414 = vmul.f32 %v382, %v406
    %v415 = vmul.f32 %v383, %v407
    %v416 = vmul.f32 %v384, %v408
    %v417 = vmul.f32 %v385, %v409
    %v418 = vpack.c.bf16 %v414, %v410
    %v419 = vpack.c.bf16 %v415, %v411
    %v420 = vpack.c.bf16 %v416, %v412
    %v421 = vpack.c.bf16 %v417, %v413
    %v426 = vunpack.c.l.b16 %v418
    %v427 = vunpack.c.l.b16 %v419
    %v428 = vunpack.c.l.b16 %v420
    %v429 = vunpack.c.l.b16 %v421
    %v430 = vunpack.c.h.b16 %v418
    %v431 = vunpack.c.h.b16 %v419
    %v432 = vunpack.c.h.b16 %v420
    %v433 = vunpack.c.h.b16 %v421
    %v434 = vpack.c.b16 %v427, %v426
    %v435 = vpack.c.b16 %v429, %v428
    %v436 = vpack.c.b16 %v431, %v430
    %v437 = vpack.c.b16 %v433, %v432
    %442 = vst [vmem:[%s3] sm:$0xff] %v434
    %443 = vst [vmem:[%s3 + $0x8] sm:$0xff] %v435
    %444 = vst [vmem:[%s3 + $0x10] sm:$0xff] %v436
    %445 = vst [vmem:[%s3 + $0x18] sm:$0xff] %v437
  $region21: #{gpt2_forward.16} parent=0 // pred_fallthru
    _
  // Predicated region
  $region22: #{gpt2_forward.16} parent=0 // pred_check
    _
  $region23: #{gpt2_forward.16} parent=0 // pred_check_branch
    %447 = sbr.rel (0) target = $region25
  $region24: #{gpt2_forward.16} parent=0 // pred_region
    _
  $region25: #{gpt2_forward.16} parent=0 // pred_fallthru
    _
  // Predicated region
  $region26: #{gpt2_forward.16} parent=0 // pred_check
    _
  $region27: #{gpt2_forward.16} parent=0 // pred_check_branch
    %449 = sbr.rel (0) target = $region29
  $region28: #{gpt2_forward.16} parent=0 // pred_region
    _
  $region29: #{gpt2_forward.16} parent=0 // pred_fallthru
    _

// kernel: gpt2_forward.14
$region0: #{gpt2_forward.14}
  #allocation0 [shape = 'u32[]', space=smem, size = 0x4, offset = 0x4, fixed_abs, tag = 'smem constant byte address 0x4 - core index']
  #allocation1 [shape = 'u32[144,128]{1,0:T(1,128)}', space=vmem, size = 0x12000, scoped, tag = 'internal scratch']
  #allocation2 [shape = 'bf16[4,8,32]{2,1,0:T(8,128)(2,1)}', space=vmem, size = 0x2000, scoped, tag = 'scratch operand']
  #allocation3 [shape = 'f32[4,8,1]{2,1,0:T(8,128)}', space=vmem, size = 0x4000, scoped, tag = 'scratch operand']
  #allocation4 [shape = 'f32[4,8,1]{2,1,0:T(8,128)}', space=vmem, size = 0x4000, scoped, tag = 'scratch operand']
  #allocation5 [shape = 'f32[4,8,32]{2,1,0:T(8,128)}', space=vmem, size = 0x4000, scoped, tag = 'scratch operand']
  %s0 = inlined_call_operand.vmem [shape: bf16[16,384], index: 0, kind: input, shape index: {}, may-alias: {0,1,2}]
  %s1 = inlined_call_operand.vmem [shape: bf16[16,384], index: 1, kind: input, shape index: {}, may-alias: {0,1,2}]
  %s2 = inlined_call_operand.vmem [shape: bf16[16,384], index: 2, kind: input, shape index: {}, may-alias: {0,1,2}]
  %s3 = inlined_call_operand.vmem [shape: bf16[16,128], index: 3, kind: output, shape index: {}]
  %s4 = sld [smem:[#allocation0]]
  $region57: #{gpt2_forward.14} parent=0
    _
  %s6 = ssub.s32 1, %s4
  %s7 = scalar_select 0, %s6, %s4
  loop: start=0, step=1, limit=4
  $region2: #{gpt2_forward.14} parent=0 // loop_pre_header
    _
  $region3: #{gpt2_forward.14} parent=0 // loop_header
    %s9 = sphi 0, %s13
    %p10 = scmp.ge.s32.totalorder %s9, 4
    %s16 = sphi 0, %s35
    %s17 = sphi 0, %s31
    %s18 = sphi 0, %s27
    %s19 = sphi 0, %s16
    %s20 = sphi 0, %s17
    %s21 = sphi 0, %s18
    %s22 = sphi 0, %s19
    %s23 = sphi 0, %s20
    %s24 = sphi 0, %s21
    %s40 = sphi 0, %s42
    %s43 = sphi 0, %s40
    %s44 = sphi 0, %s43
    %s60 = sphi 0, %s44
    %s72 = sphi 0, %s74
    %s75 = sphi 0, %s72
    %s76 = sphi 0, %s75
    %s92 = sphi 0, %s76
    %s104 = sphi 0, %s106
    %s107 = sphi 0, %s104
    %s108 = sphi 0, %s107
    %s124 = sphi 0, %s108
    %s132 = sphi 0, %s134
    %s135 = sphi 0, %s132
    %s136 = sphi 0, %s135
    %s152 = sphi 0, %s136
  $region4: #{gpt2_forward.14} parent=0 // loop_header_branch
    %12 = sbr.rel (%p10) target = $region8
  $region5: #{gpt2_forward.14} parent=0 // loop_body
    %s14 = ssub.s32 %s9, 1
    %s15 = ssub.s32 %s9, 2
    %s25 = sadd.s32 1, %s18
    %p26 = scmp.ge.s32.totalorder %s25, 1
    %s27 = scalar_select %p26, 0, %s25
    %s28 = sadd.s32 1, %s17
    %s29 = scalar_select %p26, %s28, %s17
    %p30 = scmp.ge.s32.totalorder %s29, 1
    %s31 = scalar_select %p30, 0, %s29
    %s32 = sadd.s32 1, %s16
    %s33 = scalar_select %p30, %s32, %s16
    %p34 = scmp.ge.s32.totalorder %s33, 2
    %s35 = scalar_select %p34, 0, %s33
    %s36 = sadd.s32 %s16, %s17
    %s37 = sadd.s32 %s35, %s31
    %s38 = ssub.s32 %s36, %s37
    %p39 = scmp.eq.s32.totalorder %s38, 0
    %s41 = sadd.s32 %s40, 1
    %s42 = scalar_select %p39, %s40, %s41
    %p45 = pneg %p39
    %p46 = scmp.eq.s32.totalorder %s9, 1
    %p47 = por %p45, %p46
    %p48 = scmp.ne.s32.totalorder %s40, %s43
    %p49 = scmp.eq.s32.totalorder %s9, 0
    %p50 = por %p48, %p49
    %p51 = scmp.ne.s32.totalorder %s40, %s43
    %p52 = scmp.eq.s32.totalorder %s14, 1
    %p53 = por %p51, %p52
    %p54 = scmp.ne.s32.totalorder %s43, %s44
    %p55 = scmp.eq.s32.totalorder %s14, 0
    %p56 = por %p54, %p55
    %p57 = scmp.ne.s32.totalorder %s43, %s44
    %p58 = scmp.eq.s32.totalorder %s15, 1
    %p59 = por %p57, %p58
    %p61 = scmp.ne.s32.totalorder %s44, %s60
    %p62 = scmp.eq.s32.totalorder %s15, 0
    %p63 = por %p61, %p62
    %p64 = scmp.lt.s32.totalorder %s18, %s17
    %s65 = scalar_select %p64, %s18, %s17
    %s66 = sadd.s32 %s16, %s65
    %p67 = scmp.lt.s32.totalorder %s27, %s31
    %s68 = scalar_select %p67, %s27, %s31
    %s69 = sadd.s32 %s35, %s68
    %s70 = ssub.s32 %s66, %s69
    %p71 = scmp.eq.s32.totalorder %s70, 0
    %s73 = sadd.s32 %s72, 1
    %s74 = scalar_select %p71, %s72, %s73
    %p77 = pneg %p71
    %p78 = scmp.eq.s32.totalorder %s9, 1
    %p79 = por %p77, %p78
    %p80 = scmp.ne.s32.totalorder %s72, %s75
    %p81 = scmp.eq.s32.totalorder %s9, 0
    %p82 = por %p80, %p81
    %p83 = scmp.ne.s32.totalorder %s72, %s75
    %p84 = scmp.eq.s32.totalorder %s14, 1
    %p85 = por %p83, %p84
    %p86 = scmp.ne.s32.totalorder %s75, %s76
    %p87 = scmp.eq.s32.totalorder %s14, 0
    %p88 = por %p86, %p87
    %p89 = scmp.ne.s32.totalorder %s75, %s76
    %p90 = scmp.eq.s32.totalorder %s15, 1
    %p91 = por %p89, %p90
    %p93 = scmp.ne.s32.totalorder %s76, %s92
    %p94 = scmp.eq.s32.totalorder %s15, 0
    %p95 = por %p93, %p94
    %p96 = scmp.lt.s32.totalorder %s18, %s17
    %s97 = scalar_select %p96, %s18, %s17
    %s98 = sadd.s32 %s16, %s97
    %p99 = scmp.lt.s32.totalorder %s27, %s31
    %s100 = scalar_select %p99, %s27, %s31
    %s101 = sadd.s32 %s35, %s100
    %s102 = ssub.s32 %s98, %s101
    %p103 = scmp.eq.s32.totalorder %s102, 0
    %s105 = sadd.s32 %s104, 1
    %s106 = scalar_select %p103, %s104, %s105
    %p109 = pneg %p103
    %p110 = scmp.eq.s32.totalorder %s9, 1
    %p111 = por %p109, %p110
    %p112 = scmp.ne.s32.totalorder %s104, %s107
    %p113 = scmp.eq.s32.totalorder %s9, 0
    %p114 = por %p112, %p113
    %p115 = scmp.ne.s32.totalorder %s104, %s107
    %p116 = scmp.eq.s32.totalorder %s14, 1
    %p117 = por %p115, %p116
    %p118 = scmp.ne.s32.totalorder %s107, %s108
    %p119 = scmp.eq.s32.totalorder %s14, 0
    %p120 = por %p118, %p119
    %p121 = scmp.ne.s32.totalorder %s107, %s108
    %p122 = scmp.eq.s32.totalorder %s15, 1
    %p123 = por %p121, %p122
    %p125 = scmp.ne.s32.totalorder %s108, %s124
    %p126 = scmp.eq.s32.totalorder %s15, 0
    %p127 = por %p125, %p126
    %s128 = sadd.s32 %s16, %s17
    %s129 = sadd.s32 %s35, %s31
    %s130 = ssub.s32 %s128, %s129
    %p131 = scmp.eq.s32.totalorder %s130, 0
    %s133 = sadd.s32 %s132, 1
    %s134 = scalar_select %p131, %s132, %s133
    %p137 = pneg %p131
    %p138 = scmp.eq.s32.totalorder %s9, 1
    %p139 = por %p137, %p138
    %p140 = scmp.ne.s32.totalorder %s132, %s135
    %p141 = scmp.eq.s32.totalorder %s9, 0
    %p142 = por %p140, %p141
    %p143 = scmp.ne.s32.totalorder %s132, %s135
    %p144 = scmp.eq.s32.totalorder %s14, 1
    %p145 = por %p143, %p144
    %p146 = scmp.ne.s32.totalorder %s135, %s136
    %p147 = scmp.eq.s32.totalorder %s14, 0
    %p148 = por %p146, %p147
    %p149 = scmp.ne.s32.totalorder %s135, %s136
    %p150 = scmp.eq.s32.totalorder %s15, 1
    %p151 = por %p149, %p150
    %p153 = scmp.ne.s32.totalorder %s136, %s152
    %p154 = scmp.eq.s32.totalorder %s15, 0
    %p155 = por %p153, %p154
    %p156 = scmp.le.s32.totalorder 1, %s9
    %p157 = scmp.lt.s32.totalorder %s9, 3
    %p158 = pnand %p156, %p157
    %p159 = pneg %p158
    // Predicated region
    $region9: #{gpt2_forward.14} parent=5 // pred_check
      _
    $region10: #{gpt2_forward.14} parent=5 // pred_check_branch
      %161 = sbr.rel (%p158) target = $region12
    $region11: #{gpt2_forward.14} parent=5 // pred_region
      %s162 = ssub.s32 %s9, 1
    $region12: #{gpt2_forward.14} parent=5 // pred_fallthru
      _
    %p163 = scmp.lt.s32.totalorder %s9, 2
    // Predicated region
    $region13: #{gpt2_forward.14} parent=5 // pred_check
      %p164 = pneg %p163
    $region14: #{gpt2_forward.14} parent=5 // pred_check_branch
      %166 = sbr.rel (%p164) target = $region16
    $region15: #{gpt2_forward.14} parent=5 // pred_region
      // Predicated region
      $region17: #{gpt2_forward.14} parent=15 // pred_check
        %p167 = pneg %p50
      $region18: #{gpt2_forward.14} parent=15 // pred_check_branch
        %169 = sbr.rel (%p167) target = $region20
      $region19: #{gpt2_forward.14} parent=15 // pred_region
        %s170 = sadd.s32 %s16, %s17
        %p171 = scmp.lt.s32.totalorder %s170, 1
        %s172 = scalar_select %p171, %s170, 1
        %s173 = smul.addr %s172, 3
        %s174 = smul.addr %s173, 4
        %s175 = scalar_lea.vmem %s0, %s174
        %s176 = sadd.s32 %s16, %s17
      $region20: #{gpt2_forward.14} parent=15 // pred_fallthru
        _
      // Predicated region
      $region21: #{gpt2_forward.14} parent=15 // pred_check
        %p177 = pneg %p82
      $region22: #{gpt2_forward.14} parent=15 // pred_check_branch
        %179 = sbr.rel (%p177) target = $region24
      $region23: #{gpt2_forward.14} parent=15 // pred_region
        %p180 = scmp.lt.s32.totalorder %s18, %s17
        %s181 = scalar_select %p180, %s18, %s17
        %s182 = sadd.s32 %s16, %s181
        %p183 = scmp.lt.s32.totalorder %s182, 1
        %s184 = scalar_select %p183, %s182, 1
        %s185 = smul.addr %s184, 3
        %s186 = sadd.s32 1, %s185
        %s187 = smul.addr %s186, 4
        %s188 = scalar_lea.vmem %s1, %s187
        %p189 = scmp.lt.s32.totalorder %s18, %s17
        %s190 = scalar_select %p189, %s18, %s17
        %s191 = sadd.s32 %s16, %s190
      $region24: #{gpt2_forward.14} parent=15 // pred_fallthru
        _
      // Predicated region
      $region25: #{gpt2_forward.14} parent=15 // pred_check
        %p192 = pneg %p114
      $region26: #{gpt2_forward.14} parent=15 // pred_check_branch
        %194 = sbr.rel (%p192) target = $region28
      $region27: #{gpt2_forward.14} parent=15 // pred_region
        %p195 = scmp.lt.s32.totalorder %s18, %s17
        %s196 = scalar_select %p195, %s18, %s17
        %s197 = sadd.s32 %s16, %s196
        %p198 = scmp.lt.s32.totalorder %s197, 1
        %s199 = scalar_select %p198, %s197, 1
        %s200 = smul.addr %s199, 3
        %s201 = sadd.s32 2, %s200
        %s202 = smul.addr %s201, 4
        %s203 = scalar_lea.vmem %s2, %s202
        %p204 = scmp.lt.s32.totalorder %s18, %s17
        %s205 = scalar_select %p204, %s18, %s17
        %s206 = sadd.s32 %s16, %s205
      $region28: #{gpt2_forward.14} parent=15 // pred_fallthru
        _
    $region16: #{gpt2_forward.14} parent=5 // pred_fallthru
      _
    %p207 = scmp.le.s32.totalorder 1, %s9
    %p208 = scmp.lt.s32.totalorder %s9, 3
    %p209 = pnand %p207, %p208
    %p210 = pneg %p209
    // Predicated region
    $region29: #{gpt2_forward.14} parent=5 // pred_check
      _
    $region30: #{gpt2_forward.14} parent=5 // pred_check_branch
      %212 = sbr.rel (%p209) target = $region32
    $region31: #{gpt2_forward.14} parent=5 // pred_region
      %s213 = ssub.s32 %s9, 1
      %s214 = sadd.s32 %s19, %s20
      %p215 = scmp.lt.s32.totalorder %s214, 1
      %s216 = scalar_select %p215, %s214, 1
      %s217 = smul.addr %s216, 3
      %s218 = smul.addr %s217, 4
      %s219 = scalar_lea.vmem %s0, %s218
      %p220 = pneg %p56
      %p221 = pneg %p53
      %p222 = scmp.lt.s32.totalorder %s21, %s20
      %s223 = scalar_select %p222, %s21, %s20
      %s224 = sadd.s32 %s19, %s223
      %p225 = scmp.lt.s32.totalorder %s224, 1
      %s226 = scalar_select %p225, %s224, 1
      %s227 = smul.addr %s226, 3
      %s228 = sadd.s32 1, %s227
      %s229 = smul.addr %s228, 4
      %s230 = scalar_lea.vmem %s1, %s229
      %p231 = pneg %p88
      %p232 = pneg %p85
      %p233 = scmp.lt.s32.totalorder %s21, %s20
      %s234 = scalar_select %p233, %s21, %s20
      %s235 = sadd.s32 %s19, %s234
      %p236 = scmp.lt.s32.totalorder %s235, 1
      %s237 = scalar_select %p236, %s235, 1
      %s238 = smul.addr %s237, 3
      %s239 = sadd.s32 2, %s238
      %s240 = smul.addr %s239, 4
      %s241 = scalar_lea.vmem %s2, %s240
      %p242 = pneg %p120
      %p243 = pneg %p117
      %p244 = pneg %p148
      %p245 = pneg %p145
      %s246 = sadd.s32 %s19, %s20
      %p247 = scmp.lt.s32.totalorder %s246, 1
      %s248 = scalar_select %p247, %s246, 1
      %s249 = smul.addr %s248, 4
      %s250 = scalar_lea.vmem %s3, %s249
      %s251 = sadd.s32 %s19, %s20
      %p252 = scmp.lt.s32.totalorder %s251, 1
      %s253 = scalar_select %p252, %s251, 1
      %s254 = smul.addr %s253, 3
      %s255 = smul.addr %s254, 4
      %s256 = scalar_lea.vmem %s0, %s255
      %s257 = sadd.s32 %s19, %s20
      %p258 = scmp.lt.s32.totalorder %s21, %s20
      %s259 = scalar_select %p258, %s21, %s20
      %s260 = sadd.s32 %s19, %s259
      %p261 = scmp.lt.s32.totalorder %s260, 1
      %s262 = scalar_select %p261, %s260, 1
      %s263 = smul.addr %s262, 3
      %s264 = sadd.s32 1, %s263
      %s265 = smul.addr %s264, 4
      %s266 = scalar_lea.vmem %s1, %s265
      %p267 = scmp.lt.s32.totalorder %s21, %s20
      %s268 = scalar_select %p267, %s21, %s20
      %s269 = sadd.s32 %s19, %s268
      %p270 = scmp.lt.s32.totalorder %s21, %s20
      %s271 = scalar_select %p270, %s21, %s20
      %s272 = sadd.s32 %s19, %s271
      %p273 = scmp.lt.s32.totalorder %s272, 1
      %s274 = scalar_select %p273, %s272, 1
      %s275 = smul.addr %s274, 3
      %s276 = sadd.s32 2, %s275
      %s277 = smul.addr %s276, 4
      %s278 = scalar_lea.vmem %s2, %s277
      %p279 = scmp.lt.s32.totalorder %s21, %s20
      %s280 = scalar_select %p279, %s21, %s20
      %s281 = sadd.s32 %s19, %s280
      %s282 = sadd.s32 %s19, %s20
      %p283 = scmp.lt.s32.totalorder %s282, 1
      %s284 = scalar_select %p283, %s282, 1
      %s285 = smul.addr %s284, 4
      %s286 = scalar_lea.vmem %s3, %s285
      %s287 = sadd.s32 %s19, %s20
      %p290 = scmp.eq.s32.totalorder %s21, 0
      // Predicated region
      $region33: #{gpt2_forward.14} parent=31 // pred_check
        %p291 = pneg %p290
      $region34: #{gpt2_forward.14} parent=31 // pred_check_branch
        %293 = sbr.rel (%p291) target = $region36
      $region35: #{gpt2_forward.14} parent=31 // pred_region
        %v294 = vld [vmem:[%s256] sm:$0xf]
        %296 = vrot.lane.b32.xlu0 %v294, 96
        %v297 = vpop.permute.xlu0 %296
        %298 = vrot.lane.b32.xlu0 %v294, 64
        %v299 = vpop.permute.xlu0 %298
        %300 = vrot.lane.b32.xlu0 %v294, 32
        %v301 = vpop.permute.xlu0 %300
        %v304 = vpack.i.b16 %v297, %v294
        %v305 = vshrl.u32 %v294, 16
        %v306 = vshrl.u32 %v297, 16
        %v307 = vpack.i.b16 %v306, %v305
        %v310 = vpack.i.b16 %v301, %v299
        %v311 = vshrl.u32 %v299, 16
        %v312 = vshrl.u32 %v301, 16
        %v313 = vpack.i.b16 %v312, %v311
        %v316 = vunpack.c.l.s4 1983009808
        %v317 = vunpack.c.0.s8 %v316
        %v318 = vlaneseq
        %v319 = vshrl.u32 %v318, 7
        %v320 = vsub.s32 %v317, %v319
        %v321 = vrot.slane %v304, %v320
        %v324 = vunpack.c.l.s4 1983009808
        %v325 = vunpack.c.0.s8 %v324
        %v326 = vlaneseq
        %v327 = vshrl.u32 %v326, 7
        %v328 = vsub.s32 %v325, %v327
        %v329 = vrot.slane %v310, %v328
        %v330 = vcombine.low %v321, %v329
        %v331 = vcombine.high %v321, %v329
        %v333 = vunpack.c.l.s4 1934713408
        %v334 = vunpack.c.0.s8 %v333
        %v335 = vlaneseq
        %v336 = vshrl.u32 %v335, 7
        %v337 = vsub.s32 %v334, %v336
        %v338 = vrot.slane %v330, %v337
        %v340 = vunpack.c.l.s4 1934713408
        %v341 = vunpack.c.0.s8 %v340
        %v342 = vlaneseq
        %v343 = vshrl.u32 %v342, 7
        %v344 = vsub.s32 %v341, %v343
        %v345 = vrot.slane %v331, %v344
        %v346 = vcombine.high %v338, 0
        %v347 = vcombine.high %v345, 0
        %v350 = vunpack.c.l.s4 1983009808
        %v351 = vunpack.c.0.s8 %v350
        %v352 = vlaneseq
        %v353 = vshrl.u32 %v352, 7
        %v354 = vsub.s32 %v351, %v353
        %v355 = vrot.slane %v307, %v354
        %v358 = vunpack.c.l.s4 1983009808
        %v359 = vunpack.c.0.s8 %v358
        %v360 = vlaneseq
        %v361 = vshrl.u32 %v360, 7
        %v362 = vsub.s32 %v359, %v361
        %v363 = vrot.slane %v313, %v362
        %v364 = vcombine.low %v355, %v363
        %v365 = vcombine.high %v355, %v363
        %v367 = vunpack.c.l.s4 1934713408
        %v368 = vunpack.c.0.s8 %v367
        %v369 = vlaneseq
        %v370 = vshrl.u32 %v369, 7
        %v371 = vsub.s32 %v368, %v370
        %v372 = vrot.slane %v364, %v371
        %v374 = vunpack.c.l.s4 1934713408
        %v375 = vunpack.c.0.s8 %v374
        %v376 = vlaneseq
        %v377 = vshrl.u32 %v376, 7
        %v378 = vsub.s32 %v375, %v377
        %v379 = vrot.slane %v365, %v378
        %v380 = vcombine.high %v372, 0
        %v381 = vcombine.high %v379, 0
        %v382 = vcombine.low %v338, %v345
        %v384 = vunpack.c.l.s4 1983009808
        %v385 = vunpack.c.0.s8 %v384
        %v386 = vlaneseq
        %v387 = vshrl.u32 %v386, 7
        %v388 = vsub.s32 %v385, %v387
        %v389 = vrot.slane %v382, %v388
        %v390 = vcombine.low %v346, %v347
        %v392 = vunpack.c.l.s4 1983009808
        %v393 = vunpack.c.0.s8 %v392
        %v394 = vlaneseq
        %v395 = vshrl.u32 %v394, 7
        %v396 = vsub.s32 %v393, %v395
        %v397 = vrot.slane %v390, %v396
        %v398 = vcombine.low %v389, %v397
        %v400 = vunpack.c.l.s4 1934713408
        %v401 = vunpack.c.0.s8 %v400
        %v402 = vlaneseq
        %v403 = vshrl.u32 %v402, 7
        %v404 = vsub.s32 %v401, %v403
        %v405 = vrot.slane %v398, %v404
        %v406 = vcombine.high %v405, 0
        %v407 = vcombine.low %v372, %v379
        %v409 = vunpack.c.l.s4 1983009808
        %v410 = vunpack.c.0.s8 %v409
        %v411 = vlaneseq
        %v412 = vshrl.u32 %v411, 7
        %v413 = vsub.s32 %v410, %v412
        %v414 = vrot.slane %v407, %v413
        %v415 = vcombine.low %v380, %v381
        %v417 = vunpack.c.l.s4 1983009808
        %v418 = vunpack.c.0.s8 %v417
        %v419 = vlaneseq
        %v420 = vshrl.u32 %v419, 7
        %v421 = vsub.s32 %v418, %v420
        %v422 = vrot.slane %v415, %v421
        %v423 = vcombine.low %v414, %v422
        %v425 = vunpack.c.l.s4 1934713408
        %v426 = vunpack.c.0.s8 %v425
        %v427 = vlaneseq
        %v428 = vshrl.u32 %v427, 7
        %v429 = vsub.s32 %v426, %v428
        %v430 = vrot.slane %v423, %v429
        %v431 = vcombine.high %v430, 0
        %v434 = vpack.i.b16 %v430, %v405
        %v436 = vshrl.u32 %v405, 16
        %v437 = vshrl.u32 %v430, 16
        %v438 = vpack.i.b16 %v437, %v436
        %v442 = vpack.i.b16 %v431, %v406
        %v444 = vshrl.u32 %v406, 16
        %v445 = vshrl.u32 %v431, 16
        %v446 = vpack.i.b16 %v445, %v444
        %v448 = vmul.bf16 %v434, 1043676725
        %v449 = vmul.bf16 %v438, 1043676725
        %v450 = vmul.bf16 %v442, 1043676725
        %v451 = vmul.bf16 %v446, 1043676725
        %vm452 = vcmask 257024
        %453 = vst.msk [vmem:[#allocation2] sm:$0xf] %vm452, %v448
        %454 = vst.msk [vmem:[#allocation2 + $0x4] sm:$0xf] %vm452, %v449
        %455 = vst.msk [vmem:[#allocation2 + $0x8] sm:$0xf] %vm452, %v450
        %456 = vst.msk [vmem:[#allocation2 + $0xc] sm:$0xf] %vm452, %v451
        %vm457 = vcmask 7168
        %458 = vst.msk [vmem:[#allocation3] sm:$0xff] %vm457, -inf
        %459 = vst.msk [vmem:[#allocation3 + $0x8] sm:$0xff] %vm457, -inf
        %460 = vst.msk [vmem:[#allocation3 + $0x10] sm:$0xff] %vm457, -inf
        %461 = vst.msk [vmem:[#allocation3 + $0x18] sm:$0xff] %vm457, -inf
        %462 = vst.msk [vmem:[#allocation4] sm:$0xff] %vm457, 0.0
        %463 = vst.msk [vmem:[#allocation4 + $0x8] sm:$0xff] %vm457, 0.0
        %464 = vst.msk [vmem:[#allocation4 + $0x10] sm:$0xff] %vm457, 0.0
        %465 = vst.msk [vmem:[#allocation4 + $0x18] sm:$0xff] %vm457, 0.0
        %vm466 = vcmask 261120
        %467 = vst.msk [vmem:[#allocation5] sm:$0xff] %vm466, 0.0
        %468 = vst.msk [vmem:[#allocation5 + $0x8] sm:$0xff] %vm466, 0.0
        %469 = vst.msk [vmem:[#allocation5 + $0x10] sm:$0xff] %vm466, 0.0
        %470 = vst.msk [vmem:[#allocation5 + $0x18] sm:$0xff] %vm466, 0.0
      $region36: #{gpt2_forward.14} parent=31 // pred_fallthru
        _
      %p471 = scmp.lt.s32.totalorder %s21, %s20
      // Predicated region
      $region37: #{gpt2_forward.14} parent=31 // pred_check
        %p472 = pneg %p471
      $region38: #{gpt2_forward.14} parent=31 // pred_check_branch
        %474 = sbr.rel (%p472) target = $region40
      $region39: #{gpt2_forward.14} parent=31 // pred_region
        %v475 = vld [vmem:[%s266] sm:$0xf]
        %477 = vrot.lane.b32.xlu0 %v475, 96
        %v478 = vpop.permute.xlu0 %477
        %479 = vrot.lane.b32.xlu0 %v475, 64
        %v480 = vpop.permute.xlu0 %479
        %481 = vrot.lane.b32.xlu0 %v475, 32
        %v482 = vpop.permute.xlu0 %481
        %v485 = vpack.i.b16 %v478, %v475
        %v486 = vshrl.u32 %v475, 16
        %v487 = vshrl.u32 %v478, 16
        %v488 = vpack.i.b16 %v487, %v486
        %v491 = vpack.i.b16 %v482, %v480
        %v492 = vshrl.u32 %v480, 16
        %v493 = vshrl.u32 %v482, 16
        %v494 = vpack.i.b16 %v493, %v492
        %v497 = vunpack.c.l.s4 1983009808
        %v498 = vunpack.c.0.s8 %v497
        %v499 = vlaneseq
        %v500 = vshrl.u32 %v499, 7
        %v501 = vsub.s32 %v498, %v500
        %v502 = vrot.slane %v485, %v501
        %v505 = vunpack.c.l.s4 1983009808
        %v506 = vunpack.c.0.s8 %v505
        %v507 = vlaneseq
        %v508 = vshrl.u32 %v507, 7
        %v509 = vsub.s32 %v506, %v508
        %v510 = vrot.slane %v491, %v509
        %v511 = vcombine.low %v502, %v510
        %v512 = vcombine.high %v502, %v510
        %v514 = vunpack.c.l.s4 1934713408
        %v515 = vunpack.c.0.s8 %v514
        %v516 = vlaneseq
        %v517 = vshrl.u32 %v516, 7
        %v518 = vsub.s32 %v515, %v517
        %v519 = vrot.slane %v511, %v518
        %v521 = vunpack.c.l.s4 1934713408
        %v522 = vunpack.c.0.s8 %v521
        %v523 = vlaneseq
        %v524 = vshrl.u32 %v523, 7
        %v525 = vsub.s32 %v522, %v524
        %v526 = vrot.slane %v512, %v525
        %v527 = vcombine.high %v519, 0
        %v528 = vcombine.high %v526, 0
        %v531 = vunpack.c.l.s4 1983009808
        %v532 = vunpack.c.0.s8 %v531
        %v533 = vlaneseq
        %v534 = vshrl.u32 %v533, 7
        %v535 = vsub.s32 %v532, %v534
        %v536 = vrot.slane %v488, %v535
        %v539 = vunpack.c.l.s4 1983009808
        %v540 = vunpack.c.0.s8 %v539
        %v541 = vlaneseq
        %v542 = vshrl.u32 %v541, 7
        %v543 = vsub.s32 %v540, %v542
        %v544 = vrot.slane %v494, %v543
        %v545 = vcombine.low %v536, %v544
        %v546 = vcombine.high %v536, %v544
        %v548 = vunpack.c.l.s4 1934713408
        %v549 = vunpack.c.0.s8 %v548
        %v550 = vlaneseq
        %v551 = vshrl.u32 %v550, 7
        %v552 = vsub.s32 %v549, %v551
        %v553 = vrot.slane %v545, %v552
        %v555 = vunpack.c.l.s4 1934713408
        %v556 = vunpack.c.0.s8 %v555
        %v557 = vlaneseq
        %v558 = vshrl.u32 %v557, 7
        %v559 = vsub.s32 %v556, %v558
        %v560 = vrot.slane %v546, %v559
        %v561 = vcombine.high %v553, 0
        %v562 = vcombine.high %v560, 0
        %v563 = vcombine.low %v519, %v526
        %v565 = vunpack.c.l.s4 1983009808
        %v566 = vunpack.c.0.s8 %v565
        %v567 = vlaneseq
        %v568 = vshrl.u32 %v567, 7
        %v569 = vsub.s32 %v566, %v568
        %v570 = vrot.slane %v563, %v569
        %v571 = vcombine.low %v527, %v528
        %v573 = vunpack.c.l.s4 1983009808
        %v574 = vunpack.c.0.s8 %v573
        %v575 = vlaneseq
        %v576 = vshrl.u32 %v575, 7
        %v577 = vsub.s32 %v574, %v576
        %v578 = vrot.slane %v571, %v577
        %v579 = vcombine.low %v570, %v578
        %v581 = vunpack.c.l.s4 1934713408
        %v582 = vunpack.c.0.s8 %v581
        %v583 = vlaneseq
        %v584 = vshrl.u32 %v583, 7
        %v585 = vsub.s32 %v582, %v584
        %v586 = vrot.slane %v579, %v585
        %v587 = vcombine.high %v586, 0
        %v588 = vcombine.low %v553, %v560
        %v590 = vunpack.c.l.s4 1983009808
        %v591 = vunpack.c.0.s8 %v590
        %v592 = vlaneseq
        %v593 = vshrl.u32 %v592, 7
        %v594 = vsub.s32 %v591, %v593
        %v595 = vrot.slane %v588, %v594
        %v596 = vcombine.low %v561, %v562
        %v598 = vunpack.c.l.s4 1983009808
        %v599 = vunpack.c.0.s8 %v598
        %v600 = vlaneseq
        %v601 = vshrl.u32 %v600, 7
        %v602 = vsub.s32 %v599, %v601
        %v603 = vrot.slane %v596, %v602
        %v604 = vcombine.low %v595, %v603
        %v606 = vunpack.c.l.s4 1934713408
        %v607 = vunpack.c.0.s8 %v606
        %v608 = vlaneseq
        %v609 = vshrl.u32 %v608, 7
        %v610 = vsub.s32 %v607, %v609
        %v611 = vrot.slane %v604, %v610
        %v612 = vcombine.high %v611, 0
        %v615 = vpack.i.b16 %v611, %v586
        %v616 = vshrl.u32 %v586, 16
        %v617 = vshrl.u32 %v611, 16
        %v618 = vpack.i.b16 %v617, %v616
        %v621 = vpack.i.b16 %v612, %v587
        %v622 = vshrl.u32 %v587, 16
        %v623 = vshrl.u32 %v612, 16
        %v624 = vpack.i.b16 %v623, %v622
        %v625 = vld [vmem:[%s278] sm:$0xf]
        %627 = vrot.lane.b32.xlu0 %v625, 96
        %v628 = vpop.permute.xlu0 %627
        %629 = vrot.lane.b32.xlu0 %v625, 64
        %v630 = vpop.permute.xlu0 %629
        %631 = vrot.lane.b32.xlu0 %v625, 32
        %v632 = vpop.permute.xlu0 %631
        %v635 = vpack.i.b16 %v628, %v625
        %v636 = vshrl.u32 %v625, 16
        %v637 = vshrl.u32 %v628, 16
        %v638 = vpack.i.b16 %v637, %v636
        %v641 = vpack.i.b16 %v632, %v630
        %v642 = vshrl.u32 %v630, 16
        %v643 = vshrl.u32 %v632, 16
        %v644 = vpack.i.b16 %v643, %v642
        %v647 = vunpack.c.l.s4 1983009808
        %v648 = vunpack.c.0.s8 %v647
        %v649 = vlaneseq
        %v650 = vshrl.u32 %v649, 7
        %v651 = vsub.s32 %v648, %v650
        %v652 = vrot.slane %v635, %v651
        %v655 = vunpack.c.l.s4 1983009808
        %v656 = vunpack.c.0.s8 %v655
        %v657 = vlaneseq
        %v658 = vshrl.u32 %v657, 7
        %v659 = vsub.s32 %v656, %v658
        %v660 = vrot.slane %v641, %v659
        %v661 = vcombine.low %v652, %v660
        %v662 = vcombine.high %v652, %v660
        %v664 = vunpack.c.l.s4 1934713408
        %v665 = vunpack.c.0.s8 %v664
        %v666 = vlaneseq
        %v667 = vshrl.u32 %v666, 7
        %v668 = vsub.s32 %v665, %v667
        %v669 = vrot.slane %v661, %v668
        %v671 = vunpack.c.l.s4 1934713408
        %v672 = vunpack.c.0.s8 %v671
        %v673 = vlaneseq
        %v674 = vshrl.u32 %v673, 7
        %v675 = vsub.s32 %v672, %v674
        %v676 = vrot.slane %v662, %v675
        %v677 = vcombine.high %v669, 0
        %v678 = vcombine.high %v676, 0
        %v681 = vunpack.c.l.s4 1983009808
        %v682 = vunpack.c.0.s8 %v681
        %v683 = vlaneseq
        %v684 = vshrl.u32 %v683, 7
        %v685 = vsub.s32 %v682, %v684
        %v686 = vrot.slane %v638, %v685
        %v689 = vunpack.c.l.s4 1983009808
        %v690 = vunpack.c.0.s8 %v689
        %v691 = vlaneseq
        %v692 = vshrl.u32 %v691, 7
        %v693 = vsub.s32 %v690, %v692
        %v694 = vrot.slane %v644, %v693
        %v695 = vcombine.low %v686, %v694
        %v696 = vcombine.high %v686, %v694
        %v698 = vunpack.c.l.s4 1934713408
        %v699 = vunpack.c.0.s8 %v698
        %v700 = vlaneseq
        %v701 = vshrl.u32 %v700, 7
        %v702 = vsub.s32 %v699, %v701
        %v703 = vrot.slane %v695, %v702
        %v705 = vunpack.c.l.s4 1934713408
        %v706 = vunpack.c.0.s8 %v705
        %v707 = vlaneseq
        %v708 = vshrl.u32 %v707, 7
        %v709 = vsub.s32 %v706, %v708
        %v710 = vrot.slane %v696, %v709
        %v711 = vcombine.high %v703, 0
        %v712 = vcombine.high %v710, 0
        %v713 = vcombine.low %v669, %v676
        %v715 = vunpack.c.l.s4 1983009808
        %v716 = vunpack.c.0.s8 %v715
        %v717 = vlaneseq
        %v718 = vshrl.u32 %v717, 7
        %v719 = vsub.s32 %v716, %v718
        %v720 = vrot.slane %v713, %v719
        %v721 = vcombine.low %v677, %v678
        %v723 = vunpack.c.l.s4 1983009808
        %v724 = vunpack.c.0.s8 %v723
        %v725 = vlaneseq
        %v726 = vshrl.u32 %v725, 7
        %v727 = vsub.s32 %v724, %v726
        %v728 = vrot.slane %v721, %v727
        %v729 = vcombine.low %v720, %v728
        %v731 = vunpack.c.l.s4 1934713408
        %v732 = vunpack.c.0.s8 %v731
        %v733 = vlaneseq
        %v734 = vshrl.u32 %v733, 7
        %v735 = vsub.s32 %v732, %v734
        %v736 = vrot.slane %v729, %v735
        %v737 = vcombine.high %v736, 0
        %v738 = vcombine.low %v703, %v710
        %v740 = vunpack.c.l.s4 1983009808
        %v741 = vunpack.c.0.s8 %v740
        %v742 = vlaneseq
        %v743 = vshrl.u32 %v742, 7
        %v744 = vsub.s32 %v741, %v743
        %v745 = vrot.slane %v738, %v744
        %v746 = vcombine.low %v711, %v712
        %v748 = vunpack.c.l.s4 1983009808
        %v749 = vunpack.c.0.s8 %v748
        %v750 = vlaneseq
        %v751 = vshrl.u32 %v750, 7
        %v752 = vsub.s32 %v749, %v751
        %v753 = vrot.slane %v746, %v752
        %v754 = vcombine.low %v745, %v753
        %v756 = vunpack.c.l.s4 1934713408
        %v757 = vunpack.c.0.s8 %v756
        %v758 = vlaneseq
        %v759 = vshrl.u32 %v758, 7
        %v760 = vsub.s32 %v757, %v759
        %v761 = vrot.slane %v754, %v760
        %v762 = vcombine.high %v761, 0
        %v765 = vpack.i.b16 %v761, %v736
        %v766 = vshrl.u32 %v736, 16
        %v767 = vshrl.u32 %v761, 16
        %v768 = vpack.i.b16 %v767, %v766
        %v771 = vpack.i.b16 %v762, %v737
        %v772 = vshrl.u32 %v737, 16
        %v773 = vshrl.u32 %v762, 16
        %v774 = vpack.i.b16 %v773, %v772
        %v775 = vld [vmem:[#allocation2] sm:$0xf]
        %v776 = vld [vmem:[#allocation2 + $0x4] sm:$0xf]
        %v777 = vld [vmem:[#allocation2 + $0x8] sm:$0xf]
        %v778 = vld [vmem:[#allocation2 + $0xc] sm:$0xf]
        %vm779 = vcmask 261120
        %v781 = vsel %vm779, %v775, 0
        %v784 = vsel %vm779, %v615, 0
        %786 = vmatprep.subr.bf16.mxu0 0
        %787 = vmatpush1.bf16.xpose.msra.mxu0 %v784
        %788 = vmatprep.subr.bf16.mxu0 0
        %789 = vmatpush1.bf16.xpose.msra.mxu0 0
        %790 = vmatprep.subr.bf16.mxu0 0
        %791 = vmatpush1.bf16.xpose.msra.mxu0 0
        %792 = vmatprep.subr.bf16.mxu0 0
        %793 = vmatpush1.bf16.xpose.msra.mxu0 0
        %794 = vmatprep.subr.bf16.mxu0 0
        %795 = vmatpush1.bf16.xpose.msra.mxu0 0
        %796 = vmatprep.subr.bf16.mxu0 0
        %797 = vmatpush1.bf16.xpose.msra.mxu0 0
        %798 = vmatprep.subr.bf16.mxu0 0
        %799 = vmatpush1.bf16.xpose.msra.mxu0 0
        %800 = vmatprep.subr.bf16.mxu0 0
        %801 = vmatpush1.bf16.xpose.msra.mxu0 0
        %802 = vmatprep.subr.bf16.mxu0 0
        %803 = vmatpush1.bf16.xpose.msra.mxu0 0
        %804 = vmatprep.subr.bf16.mxu0 0
        %805 = vmatpush1.bf16.xpose.msra.mxu0 0
        %806 = vmatprep.subr.bf16.mxu0 0
        %807 = vmatpush1.bf16.xpose.msra.mxu0 0
        %808 = vmatprep.subr.bf16.mxu0 0
        %809 = vmatpush1.bf16.xpose.msra.mxu0 0
        %810 = vmatprep.subr.bf16.mxu0 0
        %811 = vmatpush1.bf16.xpose.msra.mxu0 0
        %812 = vmatprep.subr.bf16.mxu0 0
        %813 = vmatpush1.bf16.xpose.msra.mxu0 0
        %814 = vmatprep.subr.bf16.mxu0 0
        %815 = vmatpush1.bf16.xpose.msra.mxu0 0
        %816 = vmatprep.subr.bf16.mxu0 0
        %817 = vmatpush1.bf16.xpose.msra.mxu0 0
        %818 = vmatprep.mubr.bf16.mxu0 0
        %819 = vmatmul.mubr.bf16.gmra.mrb[0].mxu0 %v781
        %v820 = vpop.f32.mrb[0].mxu0
        %v821 = vadd.f32 0.0, %v820
        %v822 = vpop.f32.mrb[0].mxu0
        %v823 = vpop.f32.mrb[0].mxu0
        %v824 = vpop.f32.mrb[0].mxu0
        %825 = vdwg.mxu0
        %v827 = vsel %vm779, %v776, 0
        %v830 = vsel %vm779, %v618, 0
        %832 = vmatprep.subr.bf16.mxu0 0
        %833 = vmatpush1.bf16.xpose.msra.mxu0 %v830
        %834 = vmatprep.subr.bf16.mxu0 0
        %835 = vmatpush1.bf16.xpose.msra.mxu0 0
        %836 = vmatprep.subr.bf16.mxu0 0
        %837 = vmatpush1.bf16.xpose.msra.mxu0 0
        %838 = vmatprep.subr.bf16.mxu0 0
        %839 = vmatpush1.bf16.xpose.msra.mxu0 0
        %840 = vmatprep.subr.bf16.mxu0 0
        %841 = vmatpush1.bf16.xpose.msra.mxu0 0
        %842 = vmatprep.subr.bf16.mxu0 0
        %843 = vmatpush1.bf16.xpose.msra.mxu0 0
        %844 = vmatprep.subr.bf16.mxu0 0
        %845 = vmatpush1.bf16.xpose.msra.mxu0 0
        %846 = vmatprep.subr.bf16.mxu0 0
        %847 = vmatpush1.bf16.xpose.msra.mxu0 0
        %848 = vmatprep.subr.bf16.mxu0 0
        %849 = vmatpush1.bf16.xpose.msra.mxu0 0
        %850 = vmatprep.subr.bf16.mxu0 0
        %851 = vmatpush1.bf16.xpose.msra.mxu0 0
        %852 = vmatprep.subr.bf16.mxu0 0
        %853 = vmatpush1.bf16.xpose.msra.mxu0 0
        %854 = vmatprep.subr.bf16.mxu0 0
        %855 = vmatpush1.bf16.xpose.msra.mxu0 0
        %856 = vmatprep.subr.bf16.mxu0 0
        %857 = vmatpush1.bf16.xpose.msra.mxu0 0
        %858 = vmatprep.subr.bf16.mxu0 0
        %859 = vmatpush1.bf16.xpose.msra.mxu0 0
        %860 = vmatprep.subr.bf16.mxu0 0
        %861 = vmatpush1.bf16.xpose.msra.mxu0 0
        %862 = vmatprep.subr.bf16.mxu0 0
        %863 = vmatpush1.bf16.xpose.msra.mxu0 0
        %864 = vmatprep.mubr.bf16.mxu0 0
        %865 = vmatmul.mubr.bf16.gmra.mrb[0].mxu0 %v827
        %v866 = vpop.f32.mrb[0].mxu0
        %v867 = vadd.f32 0.0, %v866
        %v868 = vpop.f32.mrb[0].mxu0
        %v869 = vpop.f32.mrb[0].mxu0
        %v870 = vpop.f32.mrb[0].mxu0
        %871 = vdwg.mxu0
        %v873 = vsel %vm779, %v777, 0
        %v876 = vsel %vm779, %v621, 0
        %878 = vmatprep.subr.bf16.mxu0 0
        %879 = vmatpush1.bf16.xpose.msra.mxu0 %v876
        %880 = vmatprep.subr.bf16.mxu0 0
        %881 = vmatpush1.bf16.xpose.msra.mxu0 0
        %882 = vmatprep.subr.bf16.mxu0 0
        %883 = vmatpush1.bf16.xpose.msra.mxu0 0
        %884 = vmatprep.subr.bf16.mxu0 0
        %885 = vmatpush1.bf16.xpose.msra.mxu0 0
        %886 = vmatprep.subr.bf16.mxu0 0
        %887 = vmatpush1.bf16.xpose.msra.mxu0 0
        %888 = vmatprep.subr.bf16.mxu0 0
        %889 = vmatpush1.bf16.xpose.msra.mxu0 0
        %890 = vmatprep.subr.bf16.mxu0 0
        %891 = vmatpush1.bf16.xpose.msra.mxu0 0
        %892 = vmatprep.subr.bf16.mxu0 0
        %893 = vmatpush1.bf16.xpose.msra.mxu0 0
        %894 = vmatprep.subr.bf16.mxu0 0
        %895 = vmatpush1.bf16.xpose.msra.mxu0 0
        %896 = vmatprep.subr.bf16.mxu0 0
        %897 = vmatpush1.bf16.xpose.msra.mxu0 0
        %898 = vmatprep.subr.bf16.mxu0 0
        %899 = vmatpush1.bf16.xpose.msra.mxu0 0
        %900 = vmatprep.subr.bf16.mxu0 0
        %901 = vmatpush1.bf16.xpose.msra.mxu0 0
        %902 = vmatprep.subr.bf16.mxu0 0
        %903 = vmatpush1.bf16.xpose.msra.mxu0 0
        %904 = vmatprep.subr.bf16.mxu0 0
        %905 = vmatpush1.bf16.xpose.msra.mxu0 0
        %906 = vmatprep.subr.bf16.mxu0 0
        %907 = vmatpush1.bf16.xpose.msra.mxu0 0
        %908 = vmatprep.subr.bf16.mxu0 0
        %909 = vmatpush1.bf16.xpose.msra.mxu0 0
        %910 = vmatprep.mubr.bf16.mxu0 0
        %911 = vmatmul.mubr.bf16.gmra.mrb[0].mxu0 %v873
        %v912 = vpop.f32.mrb[0].mxu0
        %v913 = vadd.f32 0.0, %v912
        %v914 = vpop.f32.mrb[0].mxu0
        %v915 = vpop.f32.mrb[0].mxu0
        %v916 = vpop.f32.mrb[0].mxu0
        %917 = vdwg.mxu0
        %v919 = vsel %vm779, %v778, 0
        %v922 = vsel %vm779, %v624, 0
        %924 = vmatprep.subr.bf16.mxu0 0
        %925 = vmatpush1.bf16.xpose.msra.mxu0 %v922
        %926 = vmatprep.subr.bf16.mxu0 0
        %927 = vmatpush1.bf16.xpose.msra.mxu0 0
        %928 = vmatprep.subr.bf16.mxu0 0
        %929 = vmatpush1.bf16.xpose.msra.mxu0 0
        %930 = vmatprep.subr.bf16.mxu0 0
        %931 = vmatpush1.bf16.xpose.msra.mxu0 0
        %932 = vmatprep.subr.bf16.mxu0 0
        %933 = vmatpush1.bf16.xpose.msra.mxu0 0
        %934 = vmatprep.subr.bf16.mxu0 0
        %935 = vmatpush1.bf16.xpose.msra.mxu0 0
        %936 = vmatprep.subr.bf16.mxu0 0
        %937 = vmatpush1.bf16.xpose.msra.mxu0 0
        %938 = vmatprep.subr.bf16.mxu0 0
        %939 = vmatpush1.bf16.xpose.msra.mxu0 0
        %940 = vmatprep.subr.bf16.mxu0 0
        %941 = vmatpush1.bf16.xpose.msra.mxu0 0
        %942 = vmatprep.subr.bf16.mxu0 0
        %943 = vmatpush1.bf16.xpose.msra.mxu0 0
        %944 = vmatprep.subr.bf16.mxu0 0
        %945 = vmatpush1.bf16.xpose.msra.mxu0 0
        %946 = vmatprep.subr.bf16.mxu0 0
        %947 = vmatpush1.bf16.xpose.msra.mxu0 0
        %948 = vmatprep.subr.bf16.mxu0 0
        %949 = vmatpush1.bf16.xpose.msra.mxu0 0
        %950 = vmatprep.subr.bf16.mxu0 0
        %951 = vmatpush1.bf16.xpose.msra.mxu0 0
        %952 = vmatprep.subr.bf16.mxu0 0
        %953 = vmatpush1.bf16.xpose.msra.mxu0 0
        %954 = vmatprep.subr.bf16.mxu0 0
        %955 = vmatpush1.bf16.xpose.msra.mxu0 0
        %956 = vmatprep.mubr.bf16.mxu0 0
        %957 = vmatmul.mubr.bf16.gmra.mrb[0].mxu0 %v919
        %v958 = vpop.f32.mrb[0].mxu0
        %v959 = vadd.f32 0.0, %v958
        %v960 = vpop.f32.mrb[0].mxu0
        %v961 = vpop.f32.mrb[0].mxu0
        %v962 = vpop.f32.mrb[0].mxu0
        %963 = vdwg.mxu0
        %v964 = vld [vmem:[#allocation3] sm:$0xff]
        %v965 = vld [vmem:[#allocation3 + $0x8] sm:$0xff]
        %v966 = vld [vmem:[#allocation3 + $0x10] sm:$0xff]
        %v967 = vld [vmem:[#allocation3 + $0x18] sm:$0xff]
        %vm968 = vcmask 64512
        %v969 = vsel %vm968, %v821, -inf
        %970 = vmax.xlane.f32.xlu0 %v969
        %v971 = vpop.xlane.xlu0 %970
        %v972 = vsel %vm968, %v867, -inf
        %973 = vmax.xlane.f32.xlu0 %v972
        %v974 = vpop.xlane.xlu0 %973
        %v975 = vsel %vm968, %v913, -inf
        %976 = vmax.xlane.f32.xlu0 %v975
        %v977 = vpop.xlane.xlu0 %976
        %v978 = vsel %vm968, %v959, -inf
        %979 = vmax.xlane.f32.xlu0 %v978
        %v980 = vpop.xlane.xlu0 %979
        %v981 = vmax.f32 %v964, %v971
        %v982 = vmax.f32 %v965, %v974
        %v983 = vmax.f32 %v966, %v977
        %v984 = vmax.f32 %v967, %v980
        %v985 = vsub.f32 %v964, %v981
        %v986 = vsub.f32 %v965, %v982
        %v987 = vsub.f32 %v966, %v983
        %v988 = vsub.f32 %v967, %v984
        %v989 = vmul.f32 %v985, 1.442695
        %v990 = vpow.pop %v989
        %v991 = vmul.f32 %v986, 1.442695
        %v992 = vpow.pop %v991
        %v993 = vmul.f32 %v987, 1.442695
        %v994 = vpow.pop %v993
        %v995 = vmul.f32 %v988, 1.442695
        %v996 = vpow.pop %v995
        %998 = vset.pattern.permute.xlu0 0
        %999 = vperm.xlu0 %998, %v981
        %v1000 = vpop.permute.xlu0 %999
        %1003 = vset.pattern.permute.xlu0 0
        %1004 = vperm.xlu0 %1003, %v982
        %v1005 = vpop.permute.xlu0 %1004
        %1008 = vset.pattern.permute.xlu0 0
        %1009 = vperm.xlu0 %1008, %v983
        %v1010 = vpop.permute.xlu0 %1009
        %1013 = vset.pattern.permute.xlu0 0
        %1014 = vperm.xlu0 %1013, %v984
        %v1015 = vpop.permute.xlu0 %1014
        %v1017 = vsub.f32 %v821, %v1000
        %v1018 = vsub.f32 %v867, %v1005
        %v1019 = vsub.f32 %v913, %v1010
        %v1020 = vsub.f32 %v959, %v1015
        %v1021 = vmul.f32 %v1017, 1.442695
        %v1022 = vpow.pop %v1021
        %v1023 = vmul.f32 %v1018, 1.442695
        %v1024 = vpow.pop %v1023
        %v1025 = vmul.f32 %v1019, 1.442695
        %v1026 = vpow.pop %v1025
        %v1027 = vmul.f32 %v1020, 1.442695
        %v1028 = vpow.pop %v1027
        %v1029 = vld [vmem:[#allocation4] sm:$0xff]
        %v1030 = vld [vmem:[#allocation4 + $0x8] sm:$0xff]
        %v1031 = vld [vmem:[#allocation4 + $0x10] sm:$0xff]
        %v1032 = vld [vmem:[#allocation4 + $0x18] sm:$0xff]
        %v1033 = vmul.f32 %v990, %v1029
        %v1034 = vmul.f32 %v992, %v1030
        %v1035 = vmul.f32 %v994, %v1031
        %v1036 = vmul.f32 %v996, %v1032
        %v1037 = vsel %vm968, %v1022, 0.0
        %1038 = vadd.xlane.f32.xlu0 %v1037
        %v1039 = vpop.xlane.xlu0 %1038
        %v1040 = vsel %vm968, %v1024, 0.0
        %1041 = vadd.xlane.f32.xlu0 %v1040
        %v1042 = vpop.xlane.xlu0 %1041
        %v1043 = vsel %vm968, %v1026, 0.0
        %1044 = vadd.xlane.f32.xlu0 %v1043
        %v1045 = vpop.xlane.xlu0 %1044
        %v1046 = vsel %vm968, %v1028, 0.0
        %1047 = vadd.xlane.f32.xlu0 %v1046
        %v1048 = vpop.xlane.xlu0 %1047
        %v1049 = vadd.f32 %v1033, %v1039
        %v1050 = vadd.f32 %v1034, %v1042
        %v1051 = vadd.f32 %v1035, %v1045
        %v1052 = vadd.f32 %v1036, %v1048
        %vm1053 = vcmask 7168
        %1054 = vst.msk [vmem:[#allocation4] sm:$0xff] %vm1053, %v1049
        %1055 = vst.msk [vmem:[#allocation4 + $0x8] sm:$0xff] %vm1053, %v1050
        %1056 = vst.msk [vmem:[#allocation4 + $0x10] sm:$0xff] %vm1053, %v1051
        %1057 = vst.msk [vmem:[#allocation4 + $0x18] sm:$0xff] %vm1053, %v1052
        %v1058 = vld [vmem:[#allocation5] sm:$0xff]
        %v1059 = vld [vmem:[#allocation5 + $0x8] sm:$0xff]
        %v1060 = vld [vmem:[#allocation5 + $0x10] sm:$0xff]
        %v1061 = vld [vmem:[#allocation5 + $0x18] sm:$0xff]
        %1063 = vset.pattern.permute.xlu0 0
        %1064 = vperm.xlu0 %1063, %v990
        %v1065 = vpop.permute.xlu0 %1064
        %1068 = vset.pattern.permute.xlu0 0
        %1069 = vperm.xlu0 %1068, %v992
        %v1070 = vpop.permute.xlu0 %1069
        %1073 = vset.pattern.permute.xlu0 0
        %1074 = vperm.xlu0 %1073, %v994
        %v1075 = vpop.permute.xlu0 %1074
        %1078 = vset.pattern.permute.xlu0 0
        %1079 = vperm.xlu0 %1078, %v996
        %v1080 = vpop.permute.xlu0 %1079
        %v1082 = vmul.f32 %v1065, %v1058
        %v1083 = vmul.f32 %v1070, %v1059
        %v1084 = vmul.f32 %v1075, %v1060
        %v1085 = vmul.f32 %v1080, %v1061
        %v1086 = vpack.c.bf16 %v1022, %v1022
        %v1087 = vpack.c.bf16 %v1024, %v1024
        %v1088 = vpack.c.bf16 %v1026, %v1026
        %v1089 = vpack.c.bf16 %v1028, %v1028
        %v1091 = vsel %vm968, %v1086, 0
        %vm1093 = vcmask 1043456
        %v1095 = vsel %vm1093, %v765, 0
        %1097 = vmatprep.subr.bf16.mxu0 0
        %1098 = vmatpush1.bf16.msra.mxu0 %v1095
        %1099 = vmatprep.subr.bf16.mxu0 0
        %1100 = vmatpush1.bf16.msra.mxu0 0
        %1101 = vmatprep.subr.bf16.mxu0 0
        %1102 = vmatpush1.bf16.msra.mxu0 0
        %1103 = vmatprep.subr.bf16.mxu0 0
        %1104 = vmatpush1.bf16.msra.mxu0 0
        %1105 = vmatprep.subr.bf16.mxu0 0
        %1106 = vmatpush1.bf16.msra.mxu0 0
        %1107 = vmatprep.subr.bf16.mxu0 0
        %1108 = vmatpush1.bf16.msra.mxu0 0
        %1109 = vmatprep.subr.bf16.mxu0 0
        %1110 = vmatpush1.bf16.msra.mxu0 0
        %1111 = vmatprep.subr.bf16.mxu0 0
        %1112 = vmatpush1.bf16.msra.mxu0 0
        %1113 = vmatprep.subr.bf16.mxu0 0
        %1114 = vmatpush1.bf16.msra.mxu0 0
        %1115 = vmatprep.subr.bf16.mxu0 0
        %1116 = vmatpush1.bf16.msra.mxu0 0
        %1117 = vmatprep.subr.bf16.mxu0 0
        %1118 = vmatpush1.bf16.msra.mxu0 0
        %1119 = vmatprep.subr.bf16.mxu0 0
        %1120 = vmatpush1.bf16.msra.mxu0 0
        %1121 = vmatprep.subr.bf16.mxu0 0
        %1122 = vmatpush1.bf16.msra.mxu0 0
        %1123 = vmatprep.subr.bf16.mxu0 0
        %1124 = vmatpush1.bf16.msra.mxu0 0
        %1125 = vmatprep.subr.bf16.mxu0 0
        %1126 = vmatpush1.bf16.msra.mxu0 0
        %1127 = vmatprep.subr.bf16.mxu0 0
        %1128 = vmatpush1.bf16.msra.mxu0 0
        %1129 = vmatprep.mubr.bf16.mxu0 0
        %1130 = vmatmul.mubr.bf16.gmra.mrb[0].mxu0 %v1091
        %v1131 = vpop.f32.mrb[0].mxu0
        %v1132 = vadd.f32 0.0, %v1131
        %v1133 = vpop.f32.mrb[0].mxu0
        %v1134 = vpop.f32.mrb[0].mxu0
        %v1135 = vpop.f32.mrb[0].mxu0
        %1136 = vdwg.mxu0
        %v1138 = vsel %vm968, %v1087, 0
        %v1141 = vsel %vm1093, %v768, 0
        %1143 = vmatprep.subr.bf16.mxu0 0
        %1144 = vmatpush1.bf16.msra.mxu0 %v1141
        %1145 = vmatprep.subr.bf16.mxu0 0
        %1146 = vmatpush1.bf16.msra.mxu0 0
        %1147 = vmatprep.subr.bf16.mxu0 0
        %1148 = vmatpush1.bf16.msra.mxu0 0
        %1149 = vmatprep.subr.bf16.mxu0 0
        %1150 = vmatpush1.bf16.msra.mxu0 0
        %1151 = vmatprep.subr.bf16.mxu0 0
        %1152 = vmatpush1.bf16.msra.mxu0 0
        %1153 = vmatprep.subr.bf16.mxu0 0
        %1154 = vmatpush1.bf16.msra.mxu0 0
        %1155 = vmatprep.subr.bf16.mxu0 0
        %1156 = vmatpush1.bf16.msra.mxu0 0
        %1157 = vmatprep.subr.bf16.mxu0 0
        %1158 = vmatpush1.bf16.msra.mxu0 0
        %1159 = vmatprep.subr.bf16.mxu0 0
        %1160 = vmatpush1.bf16.msra.mxu0 0
        %1161 = vmatprep.subr.bf16.mxu0 0
        %1162 = vmatpush1.bf16.msra.mxu0 0
        %1163 = vmatprep.subr.bf16.mxu0 0
        %1164 = vmatpush1.bf16.msra.mxu0 0
        %1165 = vmatprep.subr.bf16.mxu0 0
        %1166 = vmatpush1.bf16.msra.mxu0 0
        %1167 = vmatprep.subr.bf16.mxu0 0
        %1168 = vmatpush1.bf16.msra.mxu0 0
        %1169 = vmatprep.subr.bf16.mxu0 0
        %1170 = vmatpush1.bf16.msra.mxu0 0
        %1171 = vmatprep.subr.bf16.mxu0 0
        %1172 = vmatpush1.bf16.msra.mxu0 0
        %1173 = vmatprep.subr.bf16.mxu0 0
        %1174 = vmatpush1.bf16.msra.mxu0 0
        %1175 = vmatprep.mubr.bf16.mxu0 0
        %1176 = vmatmul.mubr.bf16.gmra.mrb[0].mxu0 %v1138
        %v1177 = vpop.f32.mrb[0].mxu0
        %v1178 = vadd.f32 0.0, %v1177
        %v1179 = vpop.f32.mrb[0].mxu0
        %v1180 = vpop.f32.mrb[0].mxu0
        %v1181 = vpop.f32.mrb[0].mxu0
        %1182 = vdwg.mxu0
        %v1184 = vsel %vm968, %v1088, 0
        %v1187 = vsel %vm1093, %v771, 0
        %1189 = vmatprep.subr.bf16.mxu0 0
        %1190 = vmatpush1.bf16.msra.mxu0 %v1187
        %1191 = vmatprep.subr.bf16.mxu0 0
        %1192 = vmatpush1.bf16.msra.mxu0 0
        %1193 = vmatprep.subr.bf16.mxu0 0
        %1194 = vmatpush1.bf16.msra.mxu0 0
        %1195 = vmatprep.subr.bf16.mxu0 0
        %1196 = vmatpush1.bf16.msra.mxu0 0
        %1197 = vmatprep.subr.bf16.mxu0 0
        %1198 = vmatpush1.bf16.msra.mxu0 0
        %1199 = vmatprep.subr.bf16.mxu0 0
        %1200 = vmatpush1.bf16.msra.mxu0 0
        %1201 = vmatprep.subr.bf16.mxu0 0
        %1202 = vmatpush1.bf16.msra.mxu0 0
        %1203 = vmatprep.subr.bf16.mxu0 0
        %1204 = vmatpush1.bf16.msra.mxu0 0
        %1205 = vmatprep.subr.bf16.mxu0 0
        %1206 = vmatpush1.bf16.msra.mxu0 0
        %1207 = vmatprep.subr.bf16.mxu0 0
        %1208 = vmatpush1.bf16.msra.mxu0 0
        %1209 = vmatprep.subr.bf16.mxu0 0
        %1210 = vmatpush1.bf16.msra.mxu0 0
        %1211 = vmatprep.subr.bf16.mxu0 0
        %1212 = vmatpush1.bf16.msra.mxu0 0
        %1213 = vmatprep.subr.bf16.mxu0 0
        %1214 = vmatpush1.bf16.msra.mxu0 0
        %1215 = vmatprep.subr.bf16.mxu0 0
        %1216 = vmatpush1.bf16.msra.mxu0 0
        %1217 = vmatprep.subr.bf16.mxu0 0
        %1218 = vmatpush1.bf16.msra.mxu0 0
        %1219 = vmatprep.subr.bf16.mxu0 0
        %1220 = vmatpush1.bf16.msra.mxu0 0
        %1221 = vmatprep.mubr.bf16.mxu0 0
        %1222 = vmatmul.mubr.bf16.gmra.mrb[0].mxu0 %v1184
        %v1223 = vpop.f32.mrb[0].mxu0
        %v1224 = vadd.f32 0.0, %v1223
        %v1225 = vpop.f32.mrb[0].mxu0
        %v1226 = vpop.f32.mrb[0].mxu0
        %v1227 = vpop.f32.mrb[0].mxu0
        %1228 = vdwg.mxu0
        %v1230 = vsel %vm968, %v1089, 0
        %v1233 = vsel %vm1093, %v774, 0
        %1235 = vmatprep.subr.bf16.mxu0 0
        %1236 = vmatpush1.bf16.msra.mxu0 %v1233
        %1237 = vmatprep.subr.bf16.mxu0 0
        %1238 = vmatpush1.bf16.msra.mxu0 0
        %1239 = vmatprep.subr.bf16.mxu0 0
        %1240 = vmatpush1.bf16.msra.mxu0 0
        %1241 = vmatprep.subr.bf16.mxu0 0
        %1242 = vmatpush1.bf16.msra.mxu0 0
        %1243 = vmatprep.subr.bf16.mxu0 0
        %1244 = vmatpush1.bf16.msra.mxu0 0
        %1245 = vmatprep.subr.bf16.mxu0 0
        %1246 = vmatpush1.bf16.msra.mxu0 0
        %1247 = vmatprep.subr.bf16.mxu0 0
        %1248 = vmatpush1.bf16.msra.mxu0 0
        %1249 = vmatprep.subr.bf16.mxu0 0
        %1250 = vmatpush1.bf16.msra.mxu0 0
        %1251 = vmatprep.subr.bf16.mxu0 0
        %1252 = vmatpush1.bf16.msra.mxu0 0
        %1253 = vmatprep.subr.bf16.mxu0 0
        %1254 = vmatpush1.bf16.msra.mxu0 0
        %1255 = vmatprep.subr.bf16.mxu0 0
        %1256 = vmatpush1.bf16.msra.mxu0 0
        %1257 = vmatprep.subr.bf16.mxu0 0
        %1258 = vmatpush1.bf16.msra.mxu0 0
        %1259 = vmatprep.subr.bf16.mxu0 0
        %1260 = vmatpush1.bf16.msra.mxu0 0
        %1261 = vmatprep.subr.bf16.mxu0 0
        %1262 = vmatpush1.bf16.msra.mxu0 0
        %1263 = vmatprep.subr.bf16.mxu0 0
        %1264 = vmatpush1.bf16.msra.mxu0 0
        %1265 = vmatprep.subr.bf16.mxu0 0
        %1266 = vmatpush1.bf16.msra.mxu0 0
        %1267 = vmatprep.mubr.bf16.mxu0 0
        %1268 = vmatmul.mubr.bf16.gmra.mrb[0].mxu0 %v1230
        %v1269 = vpop.f32.mrb[0].mxu0
        %v1270 = vadd.f32 0.0, %v1269
        %v1271 = vpop.f32.mrb[0].mxu0
        %v1272 = vpop.f32.mrb[0].mxu0
        %v1273 = vpop.f32.mrb[0].mxu0
        %1274 = vdwg.mxu0
        %v1275 = vadd.f32 %v1082, %v1132
        %v1276 = vadd.f32 %v1083, %v1178
        %v1277 = vadd.f32 %v1084, %v1224
        %v1278 = vadd.f32 %v1085, %v1270
        %1279 = vst.msk [vmem:[#allocation5] sm:$0xff] %vm779, %v1275
        %1280 = vst.msk [vmem:[#allocation5 + $0x8] sm:$0xff] %vm779, %v1276
        %1281 = vst.msk [vmem:[#allocation5 + $0x10] sm:$0xff] %vm779, %v1277
        %1282 = vst.msk [vmem:[#allocation5 + $0x18] sm:$0xff] %vm779, %v1278
        %1283 = vst.msk [vmem:[#allocation3] sm:$0xff] %vm1053, %v981
        %1284 = vst.msk [vmem:[#allocation3 + $0x8] sm:$0xff] %vm1053, %v982
        %1285 = vst.msk [vmem:[#allocation3 + $0x10] sm:$0xff] %vm1053, %v983
        %1286 = vst.msk [vmem:[#allocation3 + $0x18] sm:$0xff] %vm1053, %v984
      $region40: #{gpt2_forward.14} parent=31 // pred_fallthru
        _
      %p1287 = scmp.eq.s32.totalorder %s21, %s20
      // Predicated region
      $region41: #{gpt2_forward.14} parent=31 // pred_check
        %p1288 = pneg %p1287
      $region42: #{gpt2_forward.14} parent=31 // pred_check_branch
        %1290 = sbr.rel (%p1288) target = $region44
      $region43: #{gpt2_forward.14} parent=31 // pred_region
        %v1291 = vld [vmem:[%s266] sm:$0xf]
        %1293 = vrot.lane.b32.xlu0 %v1291, 96
        %v1294 = vpop.permute.xlu0 %1293
        %1295 = vrot.lane.b32.xlu0 %v1291, 64
        %v1296 = vpop.permute.xlu0 %1295
        %1297 = vrot.lane.b32.xlu0 %v1291, 32
        %v1298 = vpop.permute.xlu0 %1297
        %v1301 = vpack.i.b16 %v1294, %v1291
        %v1302 = vshrl.u32 %v1291, 16
        %v1303 = vshrl.u32 %v1294, 16
        %v1304 = vpack.i.b16 %v1303, %v1302
        %v1307 = vpack.i.b16 %v1298, %v1296
        %v1308 = vshrl.u32 %v1296, 16
        %v1309 = vshrl.u32 %v1298, 16
        %v1310 = vpack.i.b16 %v1309, %v1308
        %v1313 = vunpack.c.l.s4 1983009808
        %v1314 = vunpack.c.0.s8 %v1313
        %v1315 = vlaneseq
        %v1316 = vshrl.u32 %v1315, 7
        %v1317 = vsub.s32 %v1314, %v1316
        %v1318 = vrot.slane %v1301, %v1317
        %v1321 = vunpack.c.l.s4 1983009808
        %v1322 = vunpack.c.0.s8 %v1321
        %v1323 = vlaneseq
        %v1324 = vshrl.u32 %v1323, 7
        %v1325 = vsub.s32 %v1322, %v1324
        %v1326 = vrot.slane %v1307, %v1325
        %v1327 = vcombine.low %v1318, %v1326
        %v1328 = vcombine.high %v1318, %v1326
        %v1330 = vunpack.c.l.s4 1934713408
        %v1331 = vunpack.c.0.s8 %v1330
        %v1332 = vlaneseq
        %v1333 = vshrl.u32 %v1332, 7
        %v1334 = vsub.s32 %v1331, %v1333
        %v1335 = vrot.slane %v1327, %v1334
        %v1337 = vunpack.c.l.s4 1934713408
        %v1338 = vunpack.c.0.s8 %v1337
        %v1339 = vlaneseq
        %v1340 = vshrl.u32 %v1339, 7
        %v1341 = vsub.s32 %v1338, %v1340
        %v1342 = vrot.slane %v1328, %v1341
        %v1343 = vcombine.high %v1335, 0
        %v1344 = vcombine.high %v1342, 0
        %v1347 = vunpack.c.l.s4 1983009808
        %v1348 = vunpack.c.0.s8 %v1347
        %v1349 = vlaneseq
        %v1350 = vshrl.u32 %v1349, 7
        %v1351 = vsub.s32 %v1348, %v1350
        %v1352 = vrot.slane %v1304, %v1351
        %v1355 = vunpack.c.l.s4 1983009808
        %v1356 = vunpack.c.0.s8 %v1355
        %v1357 = vlaneseq
        %v1358 = vshrl.u32 %v1357, 7
        %v1359 = vsub.s32 %v1356, %v1358
        %v1360 = vrot.slane %v1310, %v1359
        %v1361 = vcombine.low %v1352, %v1360
        %v1362 = vcombine.high %v1352, %v1360
        %v1364 = vunpack.c.l.s4 1934713408
        %v1365 = vunpack.c.0.s8 %v1364
        %v1366 = vlaneseq
        %v1367 = vshrl.u32 %v1366, 7
        %v1368 = vsub.s32 %v1365, %v1367
        %v1369 = vrot.slane %v1361, %v1368
        %v1371 = vunpack.c.l.s4 1934713408
        %v1372 = vunpack.c.0.s8 %v1371
        %v1373 = vlaneseq
        %v1374 = vshrl.u32 %v1373, 7
        %v1375 = vsub.s32 %v1372, %v1374
        %v1376 = vrot.slane %v1362, %v1375
        %v1377 = vcombine.high %v1369, 0
        %v1378 = vcombine.high %v1376, 0
        %v1379 = vcombine.low %v1335, %v1342
        %v1381 = vunpack.c.l.s4 1983009808
        %v1382 = vunpack.c.0.s8 %v1381
        %v1383 = vlaneseq
        %v1384 = vshrl.u32 %v1383, 7
        %v1385 = vsub.s32 %v1382, %v1384
        %v1386 = vrot.slane %v1379, %v1385
        %v1387 = vcombine.low %v1343, %v1344
        %v1389 = vunpack.c.l.s4 1983009808
        %v1390 = vunpack.c.0.s8 %v1389
        %v1391 = vlaneseq
        %v1392 = vshrl.u32 %v1391, 7
        %v1393 = vsub.s32 %v1390, %v1392
        %v1394 = vrot.slane %v1387, %v1393
        %v1395 = vcombine.low %v1386, %v1394
        %v1397 = vunpack.c.l.s4 1934713408
        %v1398 = vunpack.c.0.s8 %v1397
        %v1399 = vlaneseq
        %v1400 = vshrl.u32 %v1399, 7
        %v1401 = vsub.s32 %v1398, %v1400
        %v1402 = vrot.slane %v1395, %v1401
        %v1403 = vcombine.high %v1402, 0
        %v1404 = vcombine.low %v1369, %v1376
        %v1406 = vunpack.c.l.s4 1983009808
        %v1407 = vunpack.c.0.s8 %v1406
        %v1408 = vlaneseq
        %v1409 = vshrl.u32 %v1408, 7
        %v1410 = vsub.s32 %v1407, %v1409
        %v1411 = vrot.slane %v1404, %v1410
        %v1412 = vcombine.low %v1377, %v1378
        %v1414 = vunpack.c.l.s4 1983009808
        %v1415 = vunpack.c.0.s8 %v1414
        %v1416 = vlaneseq
        %v1417 = vshrl.u32 %v1416, 7
        %v1418 = vsub.s32 %v1415, %v1417
        %v1419 = vrot.slane %v1412, %v1418
        %v1420 = vcombine.low %v1411, %v1419
        %v1422 = vunpack.c.l.s4 1934713408
        %v1423 = vunpack.c.0.s8 %v1422
        %v1424 = vlaneseq
        %v1425 = vshrl.u32 %v1424, 7
        %v1426 = vsub.s32 %v1423, %v1425
        %v1427 = vrot.slane %v1420, %v1426
        %v1428 = vcombine.high %v1427, 0
        %v1431 = vpack.i.b16 %v1427, %v1402
        %v1432 = vshrl.u32 %v1402, 16
        %v1433 = vshrl.u32 %v1427, 16
        %v1434 = vpack.i.b16 %v1433, %v1432
        %v1437 = vpack.i.b16 %v1428, %v1403
        %v1438 = vshrl.u32 %v1403, 16
        %v1439 = vshrl.u32 %v1428, 16
        %v1440 = vpack.i.b16 %v1439, %v1438
        %v1441 = vld [vmem:[%s278] sm:$0xf]
        %1443 = vrot.lane.b32.xlu0 %v1441, 96
        %v1444 = vpop.permute.xlu0 %1443
        %1445 = vrot.lane.b32.xlu0 %v1441, 64
        %v1446 = vpop.permute.xlu0 %1445
        %1447 = vrot.lane.b32.xlu0 %v1441, 32
        %v1448 = vpop.permute.xlu0 %1447
        %v1451 = vpack.i.b16 %v1444, %v1441
        %v1452 = vshrl.u32 %v1441, 16
        %v1453 = vshrl.u32 %v1444, 16
        %v1454 = vpack.i.b16 %v1453, %v1452
        %v1457 = vpack.i.b16 %v1448, %v1446
        %v1458 = vshrl.u32 %v1446, 16
        %v1459 = vshrl.u32 %v1448, 16
        %v1460 = vpack.i.b16 %v1459, %v1458
        %v1463 = vunpack.c.l.s4 1983009808
        %v1464 = vunpack.c.0.s8 %v1463
        %v1465 = vlaneseq
        %v1466 = vshrl.u32 %v1465, 7
        %v1467 = vsub.s32 %v1464, %v1466
        %v1468 = vrot.slane %v1451, %v1467
        %v1471 = vunpack.c.l.s4 1983009808
        %v1472 = vunpack.c.0.s8 %v1471
        %v1473 = vlaneseq
        %v1474 = vshrl.u32 %v1473, 7
        %v1475 = vsub.s32 %v1472, %v1474
        %v1476 = vrot.slane %v1457, %v1475
        %v1477 = vcombine.low %v1468, %v1476
        %v1478 = vcombine.high %v1468, %v1476
        %v1480 = vunpack.c.l.s4 1934713408
        %v1481 = vunpack.c.0.s8 %v1480
        %v1482 = vlaneseq
        %v1483 = vshrl.u32 %v1482, 7
        %v1484 = vsub.s32 %v1481, %v1483
        %v1485 = vrot.slane %v1477, %v1484
        %v1487 = vunpack.c.l.s4 1934713408
        %v1488 = vunpack.c.0.s8 %v1487
        %v1489 = vlaneseq
        %v1490 = vshrl.u32 %v1489, 7
        %v1491 = vsub.s32 %v1488, %v1490
        %v1492 = vrot.slane %v1478, %v1491
        %v1493 = vcombine.high %v1485, 0
        %v1494 = vcombine.high %v1492, 0
        %v1497 = vunpack.c.l.s4 1983009808
        %v1498 = vunpack.c.0.s8 %v1497
        %v1499 = vlaneseq
        %v1500 = vshrl.u32 %v1499, 7
        %v1501 = vsub.s32 %v1498, %v1500
        %v1502 = vrot.slane %v1454, %v1501
        %v1505 = vunpack.c.l.s4 1983009808
        %v1506 = vunpack.c.0.s8 %v1505
        %v1507 = vlaneseq
        %v1508 = vshrl.u32 %v1507, 7
        %v1509 = vsub.s32 %v1506, %v1508
        %v1510 = vrot.slane %v1460, %v1509
        %v1511 = vcombine.low %v1502, %v1510
        %v1512 = vcombine.high %v1502, %v1510
        %v1514 = vunpack.c.l.s4 1934713408
        %v1515 = vunpack.c.0.s8 %v1514
        %v1516 = vlaneseq
        %v1517 = vshrl.u32 %v1516, 7
        %v1518 = vsub.s32 %v1515, %v1517
        %v1519 = vrot.slane %v1511, %v1518
        %v1521 = vunpack.c.l.s4 1934713408
        %v1522 = vunpack.c.0.s8 %v1521
        %v1523 = vlaneseq
        %v1524 = vshrl.u32 %v1523, 7
        %v1525 = vsub.s32 %v1522, %v1524
        %v1526 = vrot.slane %v1512, %v1525
        %v1527 = vcombine.high %v1519, 0
        %v1528 = vcombine.high %v1526, 0
        %v1529 = vcombine.low %v1485, %v1492
        %v1531 = vunpack.c.l.s4 1983009808
        %v1532 = vunpack.c.0.s8 %v1531
        %v1533 = vlaneseq
        %v1534 = vshrl.u32 %v1533, 7
        %v1535 = vsub.s32 %v1532, %v1534
        %v1536 = vrot.slane %v1529, %v1535
        %v1537 = vcombine.low %v1493, %v1494
        %v1539 = vunpack.c.l.s4 1983009808
        %v1540 = vunpack.c.0.s8 %v1539
        %v1541 = vlaneseq
        %v1542 = vshrl.u32 %v1541, 7
        %v1543 = vsub.s32 %v1540, %v1542
        %v1544 = vrot.slane %v1537, %v1543
        %v1545 = vcombine.low %v1536, %v1544
        %v1547 = vunpack.c.l.s4 1934713408
        %v1548 = vunpack.c.0.s8 %v1547
        %v1549 = vlaneseq
        %v1550 = vshrl.u32 %v1549, 7
        %v1551 = vsub.s32 %v1548, %v1550
        %v1552 = vrot.slane %v1545, %v1551
        %v1553 = vcombine.high %v1552, 0
        %v1554 = vcombine.low %v1519, %v1526
        %v1556 = vunpack.c.l.s4 1983009808
        %v1557 = vunpack.c.0.s8 %v1556
        %v1558 = vlaneseq
        %v1559 = vshrl.u32 %v1558, 7
        %v1560 = vsub.s32 %v1557, %v1559
        %v1561 = vrot.slane %v1554, %v1560
        %v1562 = vcombine.low %v1527, %v1528
        %v1564 = vunpack.c.l.s4 1983009808
        %v1565 = vunpack.c.0.s8 %v1564
        %v1566 = vlaneseq
        %v1567 = vshrl.u32 %v1566, 7
        %v1568 = vsub.s32 %v1565, %v1567
        %v1569 = vrot.slane %v1562, %v1568
        %v1570 = vcombine.low %v1561, %v1569
        %v1572 = vunpack.c.l.s4 1934713408
        %v1573 = vunpack.c.0.s8 %v1572
        %v1574 = vlaneseq
        %v1575 = vshrl.u32 %v1574, 7
        %v1576 = vsub.s32 %v1573, %v1575
        %v1577 = vrot.slane %v1570, %v1576
        %v1578 = vcombine.high %v1577, 0
        %v1581 = vpack.i.b16 %v1577, %v1552
        %v1582 = vshrl.u32 %v1552, 16
        %v1583 = vshrl.u32 %v1577, 16
        %v1584 = vpack.i.b16 %v1583, %v1582
        %v1587 = vpack.i.b16 %v1578, %v1553
        %v1588 = vshrl.u32 %v1553, 16
        %v1589 = vshrl.u32 %v1578, 16
        %v1590 = vpack.i.b16 %v1589, %v1588
        %v1591 = vld [vmem:[#allocation2] sm:$0xf]
        %v1592 = vld [vmem:[#allocation2 + $0x4] sm:$0xf]
        %v1593 = vld [vmem:[#allocation2 + $0x8] sm:$0xf]
        %v1594 = vld [vmem:[#allocation2 + $0xc] sm:$0xf]
        %vm1595 = vcmask 261120
        %v1597 = vsel %vm1595, %v1591, 0
        %v1600 = vsel %vm1595, %v1431, 0
        %1602 = vmatprep.subr.bf16.mxu0 0
        %1603 = vmatpush1.bf16.xpose.msra.mxu0 %v1600
        %1604 = vmatprep.subr.bf16.mxu0 0
        %1605 = vmatpush1.bf16.xpose.msra.mxu0 0
        %1606 = vmatprep.subr.bf16.mxu0 0
        %1607 = vmatpush1.bf16.xpose.msra.mxu0 0
        %1608 = vmatprep.subr.bf16.mxu0 0
        %1609 = vmatpush1.bf16.xpose.msra.mxu0 0
        %1610 = vmatprep.subr.bf16.mxu0 0
        %1611 = vmatpush1.bf16.xpose.msra.mxu0 0
        %1612 = vmatprep.subr.bf16.mxu0 0
        %1613 = vmatpush1.bf16.xpose.msra.mxu0 0
        %1614 = vmatprep.subr.bf16.mxu0 0
        %1615 = vmatpush1.bf16.xpose.msra.mxu0 0
        %1616 = vmatprep.subr.bf16.mxu0 0
        %1617 = vmatpush1.bf16.xpose.msra.mxu0 0
        %1618 = vmatprep.subr.bf16.mxu0 0
        %1619 = vmatpush1.bf16.xpose.msra.mxu0 0
        %1620 = vmatprep.subr.bf16.mxu0 0
        %1621 = vmatpush1.bf16.xpose.msra.mxu0 0
        %1622 = vmatprep.subr.bf16.mxu0 0
        %1623 = vmatpush1.bf16.xpose.msra.mxu0 0
        %1624 = vmatprep.subr.bf16.mxu0 0
        %1625 = vmatpush1.bf16.xpose.msra.mxu0 0
        %1626 = vmatprep.subr.bf16.mxu0 0
        %1627 = vmatpush1.bf16.xpose.msra.mxu0 0
        %1628 = vmatprep.subr.bf16.mxu0 0
        %1629 = vmatpush1.bf16.xpose.msra.mxu0 0
        %1630 = vmatprep.subr.bf16.mxu0 0
        %1631 = vmatpush1.bf16.xpose.msra.mxu0 0
        %1632 = vmatprep.subr.bf16.mxu0 0
        %1633 = vmatpush1.bf16.xpose.msra.mxu0 0
        %1634 = vmatprep.mubr.bf16.mxu0 0
        %1635 = vmatmul.mubr.bf16.gmra.mrb[0].mxu0 %v1597
        %v1636 = vpop.f32.mrb[0].mxu0
        %v1637 = vadd.f32 0.0, %v1636
        %v1638 = vpop.f32.mrb[0].mxu0
        %v1639 = vpop.f32.mrb[0].mxu0
        %v1640 = vpop.f32.mrb[0].mxu0
        %1641 = vdwg.mxu0
        %v1643 = vsel %vm1595, %v1592, 0
        %v1646 = vsel %vm1595, %v1434, 0
        %1648 = vmatprep.subr.bf16.mxu0 0
        %1649 = vmatpush1.bf16.xpose.msra.mxu0 %v1646
        %1650 = vmatprep.subr.bf16.mxu0 0
        %1651 = vmatpush1.bf16.xpose.msra.mxu0 0
        %1652 = vmatprep.subr.bf16.mxu0 0
        %1653 = vmatpush1.bf16.xpose.msra.mxu0 0
        %1654 = vmatprep.subr.bf16.mxu0 0
        %1655 = vmatpush1.bf16.xpose.msra.mxu0 0
        %1656 = vmatprep.subr.bf16.mxu0 0
        %1657 = vmatpush1.bf16.xpose.msra.mxu0 0
        %1658 = vmatprep.subr.bf16.mxu0 0
        %1659 = vmatpush1.bf16.xpose.msra.mxu0 0
        %1660 = vmatprep.subr.bf16.mxu0 0
        %1661 = vmatpush1.bf16.xpose.msra.mxu0 0
        %1662 = vmatprep.subr.bf16.mxu0 0
        %1663 = vmatpush1.bf16.xpose.msra.mxu0 0
        %1664 = vmatprep.subr.bf16.mxu0 0
        %1665 = vmatpush1.bf16.xpose.msra.mxu0 0
        %1666 = vmatprep.subr.bf16.mxu0 0
        %1667 = vmatpush1.bf16.xpose.msra.mxu0 0
        %1668 = vmatprep.subr.bf16.mxu0 0
        %1669 = vmatpush1.bf16.xpose.msra.mxu0 0
        %1670 = vmatprep.subr.bf16.mxu0 0
        %1671 = vmatpush1.bf16.xpose.msra.mxu0 0
        %1672 = vmatprep.subr.bf16.mxu0 0
        %1673 = vmatpush1.bf16.xpose.msra.mxu0 0
        %1674 = vmatprep.subr.bf16.mxu0 0
        %1675 = vmatpush1.bf16.xpose.msra.mxu0 0
        %1676 = vmatprep.subr.bf16.mxu0 0
        %1677 = vmatpush1.bf16.xpose.msra.mxu0 0
        %1678 = vmatprep.subr.bf16.mxu0 0
        %1679 = vmatpush1.bf16.xpose.msra.mxu0 0
        %1680 = vmatprep.mubr.bf16.mxu0 0
        %1681 = vmatmul.mubr.bf16.gmra.mrb[0].mxu0 %v1643
        %v1682 = vpop.f32.mrb[0].mxu0
        %v1683 = vadd.f32 0.0, %v1682
        %v1684 = vpop.f32.mrb[0].mxu0
        %v1685 = vpop.f32.mrb[0].mxu0
        %v1686 = vpop.f32.mrb[0].mxu0
        %1687 = vdwg.mxu0
        %v1689 = vsel %vm1595, %v1593, 0
        %v1692 = vsel %vm1595, %v1437, 0
        %1694 = vmatprep.subr.bf16.mxu0 0
        %1695 = vmatpush1.bf16.xpose.msra.mxu0 %v1692
        %1696 = vmatprep.subr.bf16.mxu0 0
        %1697 = vmatpush1.bf16.xpose.msra.mxu0 0
        %1698 = vmatprep.subr.bf16.mxu0 0
        %1699 = vmatpush1.bf16.xpose.msra.mxu0 0
        %1700 = vmatprep.subr.bf16.mxu0 0
        %1701 = vmatpush1.bf16.xpose.msra.mxu0 0
        %1702 = vmatprep.subr.bf16.mxu0 0
        %1703 = vmatpush1.bf16.xpose.msra.mxu0 0
        %1704 = vmatprep.subr.bf16.mxu0 0
        %1705 = vmatpush1.bf16.xpose.msra.mxu0 0
        %1706 = vmatprep.subr.bf16.mxu0 0
        %1707 = vmatpush1.bf16.xpose.msra.mxu0 0
        %1708 = vmatprep.subr.bf16.mxu0 0
        %1709 = vmatpush1.bf16.xpose.msra.mxu0 0
        %1710 = vmatprep.subr.bf16.mxu0 0
        %1711 = vmatpush1.bf16.xpose.msra.mxu0 0
        %1712 = vmatprep.subr.bf16.mxu0 0
        %1713 = vmatpush1.bf16.xpose.msra.mxu0 0
        %1714 = vmatprep.subr.bf16.mxu0 0
        %1715 = vmatpush1.bf16.xpose.msra.mxu0 0
        %1716 = vmatprep.subr.bf16.mxu0 0
        %1717 = vmatpush1.bf16.xpose.msra.mxu0 0
        %1718 = vmatprep.subr.bf16.mxu0 0
        %1719 = vmatpush1.bf16.xpose.msra.mxu0 0
        %1720 = vmatprep.subr.bf16.mxu0 0
        %1721 = vmatpush1.bf16.xpose.msra.mxu0 0
        %1722 = vmatprep.subr.bf16.mxu0 0
        %1723 = vmatpush1.bf16.xpose.msra.mxu0 0
        %1724 = vmatprep.subr.bf16.mxu0 0
        %1725 = vmatpush1.bf16.xpose.msra.mxu0 0
        %1726 = vmatprep.mubr.bf16.mxu0 0
        %1727 = vmatmul.mubr.bf16.gmra.mrb[0].mxu0 %v1689
        %v1728 = vpop.f32.mrb[0].mxu0
        %v1729 = vadd.f32 0.0, %v1728
        %v1730 = vpop.f32.mrb[0].mxu0
        %v1731 = vpop.f32.mrb[0].mxu0
        %v1732 = vpop.f32.mrb[0].mxu0
        %1733 = vdwg.mxu0
        %v1735 = vsel %vm1595, %v1594, 0
        %v1738 = vsel %vm1595, %v1440, 0
        %1740 = vmatprep.subr.bf16.mxu0 0
        %1741 = vmatpush1.bf16.xpose.msra.mxu0 %v1738
        %1742 = vmatprep.subr.bf16.mxu0 0
        %1743 = vmatpush1.bf16.xpose.msra.mxu0 0
        %1744 = vmatprep.subr.bf16.mxu0 0
        %1745 = vmatpush1.bf16.xpose.msra.mxu0 0
        %1746 = vmatprep.subr.bf16.mxu0 0
        %1747 = vmatpush1.bf16.xpose.msra.mxu0 0
        %1748 = vmatprep.subr.bf16.mxu0 0
        %1749 = vmatpush1.bf16.xpose.msra.mxu0 0
        %1750 = vmatprep.subr.bf16.mxu0 0
        %1751 = vmatpush1.bf16.xpose.msra.mxu0 0
        %1752 = vmatprep.subr.bf16.mxu0 0
        %1753 = vmatpush1.bf16.xpose.msra.mxu0 0
        %1754 = vmatprep.subr.bf16.mxu0 0
        %1755 = vmatpush1.bf16.xpose.msra.mxu0 0
        %1756 = vmatprep.subr.bf16.mxu0 0
        %1757 = vmatpush1.bf16.xpose.msra.mxu0 0
        %1758 = vmatprep.subr.bf16.mxu0 0
        %1759 = vmatpush1.bf16.xpose.msra.mxu0 0
        %1760 = vmatprep.subr.bf16.mxu0 0
        %1761 = vmatpush1.bf16.xpose.msra.mxu0 0
        %1762 = vmatprep.subr.bf16.mxu0 0
        %1763 = vmatpush1.bf16.xpose.msra.mxu0 0
        %1764 = vmatprep.subr.bf16.mxu0 0
        %1765 = vmatpush1.bf16.xpose.msra.mxu0 0
        %1766 = vmatprep.subr.bf16.mxu0 0
        %1767 = vmatpush1.bf16.xpose.msra.mxu0 0
        %1768 = vmatprep.subr.bf16.mxu0 0
        %1769 = vmatpush1.bf16.xpose.msra.mxu0 0
        %1770 = vmatprep.subr.bf16.mxu0 0
        %1771 = vmatpush1.bf16.xpose.msra.mxu0 0
        %1772 = vmatprep.mubr.bf16.mxu0 0
        %1773 = vmatmul.mubr.bf16.gmra.mrb[0].mxu0 %v1735
        %v1774 = vpop.f32.mrb[0].mxu0
        %v1775 = vadd.f32 0.0, %v1774
        %v1776 = vpop.f32.mrb[0].mxu0
        %v1777 = vpop.f32.mrb[0].mxu0
        %v1778 = vpop.f32.mrb[0].mxu0
        %1779 = vdwg.mxu0
        %v1780 = vlaneseq
        %v1781 = vshrl.u32 %v1780, 7
        %v1782 = vlaneseq
        %v1783 = vand.u32 %v1782, 127
        %vm1784 = vcmp.ge.s32.totalorder %v1781, %v1783
        %v1785 = vsel %vm1784, %v1637, -10000.0
        %v1786 = vsel %vm1784, %v1683, -10000.0
        %v1787 = vsel %vm1784, %v1729, -10000.0
        %v1788 = vsel %vm1784, %v1775, -10000.0
        %v1789 = vld [vmem:[#allocation3] sm:$0xff]
        %v1790 = vld [vmem:[#allocation3 + $0x8] sm:$0xff]
        %v1791 = vld [vmem:[#allocation3 + $0x10] sm:$0xff]
        %v1792 = vld [vmem:[#allocation3 + $0x18] sm:$0xff]
        %vm1793 = vcmask 64512
        %v1794 = vsel %vm1793, %v1785, -inf
        %1795 = vmax.xlane.f32.xlu0 %v1794
        %v1796 = vpop.xlane.xlu0 %1795
        %v1797 = vsel %vm1793, %v1786, -inf
        %1798 = vmax.xlane.f32.xlu0 %v1797
        %v1799 = vpop.xlane.xlu0 %1798
        %v1800 = vsel %vm1793, %v1787, -inf
        %1801 = vmax.xlane.f32.xlu0 %v1800
        %v1802 = vpop.xlane.xlu0 %1801
        %v1803 = vsel %vm1793, %v1788, -inf
        %1804 = vmax.xlane.f32.xlu0 %v1803
        %v1805 = vpop.xlane.xlu0 %1804
        %v1806 = vmax.f32 %v1789, %v1796
        %v1807 = vmax.f32 %v1790, %v1799
        %v1808 = vmax.f32 %v1791, %v1802
        %v1809 = vmax.f32 %v1792, %v1805
        %v1810 = vsub.f32 %v1789, %v1806
        %v1811 = vsub.f32 %v1790, %v1807
        %v1812 = vsub.f32 %v1791, %v1808
        %v1813 = vsub.f32 %v1792, %v1809
        %v1814 = vmul.f32 %v1810, 1.442695
        %v1815 = vpow.pop %v1814
        %v1816 = vmul.f32 %v1811, 1.442695
        %v1817 = vpow.pop %v1816
        %v1818 = vmul.f32 %v1812, 1.442695
        %v1819 = vpow.pop %v1818
        %v1820 = vmul.f32 %v1813, 1.442695
        %v1821 = vpow.pop %v1820
        %1823 = vset.pattern.permute.xlu0 0
        %1824 = vperm.xlu0 %1823, %v1806
        %v1825 = vpop.permute.xlu0 %1824
        %1828 = vset.pattern.permute.xlu0 0
        %1829 = vperm.xlu0 %1828, %v1807
        %v1830 = vpop.permute.xlu0 %1829
        %1833 = vset.pattern.permute.xlu0 0
        %1834 = vperm.xlu0 %1833, %v1808
        %v1835 = vpop.permute.xlu0 %1834
        %1838 = vset.pattern.permute.xlu0 0
        %1839 = vperm.xlu0 %1838, %v1809
        %v1840 = vpop.permute.xlu0 %1839
        %v1842 = vsub.f32 %v1785, %v1825
        %v1843 = vsub.f32 %v1786, %v1830
        %v1844 = vsub.f32 %v1787, %v1835
        %v1845 = vsub.f32 %v1788, %v1840
        %v1846 = vmul.f32 %v1842, 1.442695
        %v1847 = vpow.pop %v1846
        %v1848 = vmul.f32 %v1843, 1.442695
        %v1849 = vpow.pop %v1848
        %v1850 = vmul.f32 %v1844, 1.442695
        %v1851 = vpow.pop %v1850
        %v1852 = vmul.f32 %v1845, 1.442695
        %v1853 = vpow.pop %v1852
        %v1854 = vld [vmem:[#allocation4] sm:$0xff]
        %v1855 = vld [vmem:[#allocation4 + $0x8] sm:$0xff]
        %v1856 = vld [vmem:[#allocation4 + $0x10] sm:$0xff]
        %v1857 = vld [vmem:[#allocation4 + $0x18] sm:$0xff]
        %v1858 = vmul.f32 %v1815, %v1854
        %v1859 = vmul.f32 %v1817, %v1855
        %v1860 = vmul.f32 %v1819, %v1856
        %v1861 = vmul.f32 %v1821, %v1857
        %v1862 = vsel %vm1793, %v1847, 0.0
        %1863 = vadd.xlane.f32.xlu0 %v1862
        %v1864 = vpop.xlane.xlu0 %1863
        %v1865 = vsel %vm1793, %v1849, 0.0
        %1866 = vadd.xlane.f32.xlu0 %v1865
        %v1867 = vpop.xlane.xlu0 %1866
        %v1868 = vsel %vm1793, %v1851, 0.0
        %1869 = vadd.xlane.f32.xlu0 %v1868
        %v1870 = vpop.xlane.xlu0 %1869
        %v1871 = vsel %vm1793, %v1853, 0.0
        %1872 = vadd.xlane.f32.xlu0 %v1871
        %v1873 = vpop.xlane.xlu0 %1872
        %v1874 = vadd.f32 %v1858, %v1864
        %v1875 = vadd.f32 %v1859, %v1867
        %v1876 = vadd.f32 %v1860, %v1870
        %v1877 = vadd.f32 %v1861, %v1873
        %vm1878 = vcmask 7168
        %1879 = vst.msk [vmem:[#allocation4] sm:$0xff] %vm1878, %v1874
        %1880 = vst.msk [vmem:[#allocation4 + $0x8] sm:$0xff] %vm1878, %v1875
        %1881 = vst.msk [vmem:[#allocation4 + $0x10] sm:$0xff] %vm1878, %v1876
        %1882 = vst.msk [vmem:[#allocation4 + $0x18] sm:$0xff] %vm1878, %v1877
        %v1883 = vld [vmem:[#allocation5] sm:$0xff]
        %v1884 = vld [vmem:[#allocation5 + $0x8] sm:$0xff]
        %v1885 = vld [vmem:[#allocation5 + $0x10] sm:$0xff]
        %v1886 = vld [vmem:[#allocation5 + $0x18] sm:$0xff]
        %1888 = vset.pattern.permute.xlu0 0
        %1889 = vperm.xlu0 %1888, %v1815
        %v1890 = vpop.permute.xlu0 %1889
        %1893 = vset.pattern.permute.xlu0 0
        %1894 = vperm.xlu0 %1893, %v1817
        %v1895 = vpop.permute.xlu0 %1894
        %1898 = vset.pattern.permute.xlu0 0
        %1899 = vperm.xlu0 %1898, %v1819
        %v1900 = vpop.permute.xlu0 %1899
        %1903 = vset.pattern.permute.xlu0 0
        %1904 = vperm.xlu0 %1903, %v1821
        %v1905 = vpop.permute.xlu0 %1904
        %v1907 = vmul.f32 %v1890, %v1883
        %v1908 = vmul.f32 %v1895, %v1884
        %v1909 = vmul.f32 %v1900, %v1885
        %v1910 = vmul.f32 %v1905, %v1886
        %v1911 = vpack.c.bf16 %v1847, %v1847
        %v1912 = vpack.c.bf16 %v1849, %v1849
        %v1913 = vpack.c.bf16 %v1851, %v1851
        %v1914 = vpack.c.bf16 %v1853, %v1853
        %v1916 = vsel %vm1793, %v1911, 0
        %vm1918 = vcmask 1043456
        %v1920 = vsel %vm1918, %v1581, 0
        %1922 = vmatprep.subr.bf16.mxu0 0
        %1923 = vmatpush1.bf16.msra.mxu0 %v1920
        %1924 = vmatprep.subr.bf16.mxu0 0
        %1925 = vmatpush1.bf16.msra.mxu0 0
        %1926 = vmatprep.subr.bf16.mxu0 0
        %1927 = vmatpush1.bf16.msra.mxu0 0
        %1928 = vmatprep.subr.bf16.mxu0 0
        %1929 = vmatpush1.bf16.msra.mxu0 0
        %1930 = vmatprep.subr.bf16.mxu0 0
        %1931 = vmatpush1.bf16.msra.mxu0 0
        %1932 = vmatprep.subr.bf16.mxu0 0
        %1933 = vmatpush1.bf16.msra.mxu0 0
        %1934 = vmatprep.subr.bf16.mxu0 0
        %1935 = vmatpush1.bf16.msra.mxu0 0
        %1936 = vmatprep.subr.bf16.mxu0 0
        %1937 = vmatpush1.bf16.msra.mxu0 0
        %1938 = vmatprep.subr.bf16.mxu0 0
        %1939 = vmatpush1.bf16.msra.mxu0 0
        %1940 = vmatprep.subr.bf16.mxu0 0
        %1941 = vmatpush1.bf16.msra.mxu0 0
        %1942 = vmatprep.subr.bf16.mxu0 0
        %1943 = vmatpush1.bf16.msra.mxu0 0
        %1944 = vmatprep.subr.bf16.mxu0 0
        %1945 = vmatpush1.bf16.msra.mxu0 0
        %1946 = vmatprep.subr.bf16.mxu0 0
        %1947 = vmatpush1.bf16.msra.mxu0 0
        %1948 = vmatprep.subr.bf16.mxu0 0
        %1949 = vmatpush1.bf16.msra.mxu0 0
        %1950 = vmatprep.subr.bf16.mxu0 0
        %1951 = vmatpush1.bf16.msra.mxu0 0
        %1952 = vmatprep.subr.bf16.mxu0 0
        %1953 = vmatpush1.bf16.msra.mxu0 0
        %1954 = vmatprep.mubr.bf16.mxu0 0
        %1955 = vmatmul.mubr.bf16.gmra.mrb[0].mxu0 %v1916
        %v1956 = vpop.f32.mrb[0].mxu0
        %v1957 = vadd.f32 0.0, %v1956
        %v1958 = vpop.f32.mrb[0].mxu0
        %v1959 = vpop.f32.mrb[0].mxu0
        %v1960 = vpop.f32.mrb[0].mxu0
        %1961 = vdwg.mxu0
        %v1963 = vsel %vm1793, %v1912, 0
        %v1966 = vsel %vm1918, %v1584, 0
        %1968 = vmatprep.subr.bf16.mxu0 0
        %1969 = vmatpush1.bf16.msra.mxu0 %v1966
        %1970 = vmatprep.subr.bf16.mxu0 0
        %1971 = vmatpush1.bf16.msra.mxu0 0
        %1972 = vmatprep.subr.bf16.mxu0 0
        %1973 = vmatpush1.bf16.msra.mxu0 0
        %1974 = vmatprep.subr.bf16.mxu0 0
        %1975 = vmatpush1.bf16.msra.mxu0 0
        %1976 = vmatprep.subr.bf16.mxu0 0
        %1977 = vmatpush1.bf16.msra.mxu0 0
        %1978 = vmatprep.subr.bf16.mxu0 0
        %1979 = vmatpush1.bf16.msra.mxu0 0
        %1980 = vmatprep.subr.bf16.mxu0 0
        %1981 = vmatpush1.bf16.msra.mxu0 0
        %1982 = vmatprep.subr.bf16.mxu0 0
        %1983 = vmatpush1.bf16.msra.mxu0 0
        %1984 = vmatprep.subr.bf16.mxu0 0
        %1985 = vmatpush1.bf16.msra.mxu0 0
        %1986 = vmatprep.subr.bf16.mxu0 0
        %1987 = vmatpush1.bf16.msra.mxu0 0
        %1988 = vmatprep.subr.bf16.mxu0 0
        %1989 = vmatpush1.bf16.msra.mxu0 0
        %1990 = vmatprep.subr.bf16.mxu0 0
        %1991 = vmatpush1.bf16.msra.mxu0 0
        %1992 = vmatprep.subr.bf16.mxu0 0
        %1993 = vmatpush1.bf16.msra.mxu0 0
        %1994 = vmatprep.subr.bf16.mxu0 0
        %1995 = vmatpush1.bf16.msra.mxu0 0
        %1996 = vmatprep.subr.bf16.mxu0 0
        %1997 = vmatpush1.bf16.msra.mxu0 0
        %1998 = vmatprep.subr.bf16.mxu0 0
        %1999 = vmatpush1.bf16.msra.mxu0 0
        %2000 = vmatprep.mubr.bf16.mxu0 0
        %2001 = vmatmul.mubr.bf16.gmra.mrb[0].mxu0 %v1963
        %v2002 = vpop.f32.mrb[0].mxu0
        %v2003 = vadd.f32 0.0, %v2002
        %v2004 = vpop.f32.mrb[0].mxu0
        %v2005 = vpop.f32.mrb[0].mxu0
        %v2006 = vpop.f32.mrb[0].mxu0
        %2007 = vdwg.mxu0
        %v2009 = vsel %vm1793, %v1913, 0
        %v2012 = vsel %vm1918, %v1587, 0
        %2014 = vmatprep.subr.bf16.mxu0 0
        %2015 = vmatpush1.bf16.msra.mxu0 %v2012
        %2016 = vmatprep.subr.bf16.mxu0 0
        %2017 = vmatpush1.bf16.msra.mxu0 0
        %2018 = vmatprep.subr.bf16.mxu0 0
        %2019 = vmatpush1.bf16.msra.mxu0 0
        %2020 = vmatprep.subr.bf16.mxu0 0
        %2021 = vmatpush1.bf16.msra.mxu0 0
        %2022 = vmatprep.subr.bf16.mxu0 0
        %2023 = vmatpush1.bf16.msra.mxu0 0
        %2024 = vmatprep.subr.bf16.mxu0 0
        %2025 = vmatpush1.bf16.msra.mxu0 0
        %2026 = vmatprep.subr.bf16.mxu0 0
        %2027 = vmatpush1.bf16.msra.mxu0 0
        %2028 = vmatprep.subr.bf16.mxu0 0
        %2029 = vmatpush1.bf16.msra.mxu0 0
        %2030 = vmatprep.subr.bf16.mxu0 0
        %2031 = vmatpush1.bf16.msra.mxu0 0
        %2032 = vmatprep.subr.bf16.mxu0 0
        %2033 = vmatpush1.bf16.msra.mxu0 0
        %2034 = vmatprep.subr.bf16.mxu0 0
        %2035 = vmatpush1.bf16.msra.mxu0 0
        %2036 = vmatprep.subr.bf16.mxu0 0
        %2037 = vmatpush1.bf16.msra.mxu0 0
        %2038 = vmatprep.subr.bf16.mxu0 0
        %2039 = vmatpush1.bf16.msra.mxu0 0
        %2040 = vmatprep.subr.bf16.mxu0 0
        %2041 = vmatpush1.bf16.msra.mxu0 0
        %2042 = vmatprep.subr.bf16.mxu0 0
        %2043 = vmatpush1.bf16.msra.mxu0 0
        %2044 = vmatprep.subr.bf16.mxu0 0
        %2045 = vmatpush1.bf16.msra.mxu0 0
        %2046 = vmatprep.mubr.bf16.mxu0 0
        %2047 = vmatmul.mubr.bf16.gmra.mrb[0].mxu0 %v2009
        %v2048 = vpop.f32.mrb[0].mxu0
        %v2049 = vadd.f32 0.0, %v2048
        %v2050 = vpop.f32.mrb[0].mxu0
        %v2051 = vpop.f32.mrb[0].mxu0
        %v2052 = vpop.f32.mrb[0].mxu0
        %2053 = vdwg.mxu0
        %v2055 = vsel %vm1793, %v1914, 0
        %v2058 = vsel %vm1918, %v1590, 0
        %2060 = vmatprep.subr.bf16.mxu0 0
        %2061 = vmatpush1.bf16.msra.mxu0 %v2058
        %2062 = vmatprep.subr.bf16.mxu0 0
        %2063 = vmatpush1.bf16.msra.mxu0 0
        %2064 = vmatprep.subr.bf16.mxu0 0
        %2065 = vmatpush1.bf16.msra.mxu0 0
        %2066 = vmatprep.subr.bf16.mxu0 0
        %2067 = vmatpush1.bf16.msra.mxu0 0
        %2068 = vmatprep.subr.bf16.mxu0 0
        %2069 = vmatpush1.bf16.msra.mxu0 0
        %2070 = vmatprep.subr.bf16.mxu0 0
        %2071 = vmatpush1.bf16.msra.mxu0 0
        %2072 = vmatprep.subr.bf16.mxu0 0
        %2073 = vmatpush1.bf16.msra.mxu0 0
        %2074 = vmatprep.subr.bf16.mxu0 0
        %2075 = vmatpush1.bf16.msra.mxu0 0
        %2076 = vmatprep.subr.bf16.mxu0 0
        %2077 = vmatpush1.bf16.msra.mxu0 0
        %2078 = vmatprep.subr.bf16.mxu0 0
        %2079 = vmatpush1.bf16.msra.mxu0 0
        %2080 = vmatprep.subr.bf16.mxu0 0
        %2081 = vmatpush1.bf16.msra.mxu0 0
        %2082 = vmatprep.subr.bf16.mxu0 0
        %2083 = vmatpush1.bf16.msra.mxu0 0
        %2084 = vmatprep.subr.bf16.mxu0 0
        %2085 = vmatpush1.bf16.msra.mxu0 0
        %2086 = vmatprep.subr.bf16.mxu0 0
        %2087 = vmatpush1.bf16.msra.mxu0 0
        %2088 = vmatprep.subr.bf16.mxu0 0
        %2089 = vmatpush1.bf16.msra.mxu0 0
        %2090 = vmatprep.subr.bf16.mxu0 0
        %2091 = vmatpush1.bf16.msra.mxu0 0
        %2092 = vmatprep.mubr.bf16.mxu0 0
        %2093 = vmatmul.mubr.bf16.gmra.mrb[0].mxu0 %v2055
        %v2094 = vpop.f32.mrb[0].mxu0
        %v2095 = vadd.f32 0.0, %v2094
        %v2096 = vpop.f32.mrb[0].mxu0
        %v2097 = vpop.f32.mrb[0].mxu0
        %v2098 = vpop.f32.mrb[0].mxu0
        %2099 = vdwg.mxu0
        %v2100 = vadd.f32 %v1907, %v1957
        %v2101 = vadd.f32 %v1908, %v2003
        %v2102 = vadd.f32 %v1909, %v2049
        %v2103 = vadd.f32 %v1910, %v2095
        %2104 = vst.msk [vmem:[#allocation5] sm:$0xff] %vm1595, %v2100
        %2105 = vst.msk [vmem:[#allocation5 + $0x8] sm:$0xff] %vm1595, %v2101
        %2106 = vst.msk [vmem:[#allocation5 + $0x10] sm:$0xff] %vm1595, %v2102
        %2107 = vst.msk [vmem:[#allocation5 + $0x18] sm:$0xff] %vm1595, %v2103
        %2108 = vst.msk [vmem:[#allocation3] sm:$0xff] %vm1878, %v1806
        %2109 = vst.msk [vmem:[#allocation3 + $0x8] sm:$0xff] %vm1878, %v1807
        %2110 = vst.msk [vmem:[#allocation3 + $0x10] sm:$0xff] %vm1878, %v1808
        %2111 = vst.msk [vmem:[#allocation3 + $0x18] sm:$0xff] %vm1878, %v1809
        %v2112 = vld [vmem:[#allocation5] sm:$0xff]
        %v2113 = vld [vmem:[#allocation5 + $0x8] sm:$0xff]
        %v2114 = vld [vmem:[#allocation5 + $0x10] sm:$0xff]
        %v2115 = vld [vmem:[#allocation5 + $0x18] sm:$0xff]
        %v2116 = vld [vmem:[#allocation4] sm:$0xff]
        %v2117 = vld [vmem:[#allocation4 + $0x8] sm:$0xff]
        %v2118 = vld [vmem:[#allocation4 + $0x10] sm:$0xff]
        %v2119 = vld [vmem:[#allocation4 + $0x18] sm:$0xff]
        %v2120 = vrcp.pop %v2116
        %v2121 = vrcp.pop %v2117
        %v2122 = vrcp.pop %v2118
        %v2123 = vrcp.pop %v2119
        %2125 = vset.pattern.permute.xlu0 0
        %2126 = vperm.xlu0 %2125, %v2120
        %v2127 = vpop.permute.xlu0 %2126
        %2130 = vset.pattern.permute.xlu0 0
        %2131 = vperm.xlu0 %2130, %v2121
        %v2132 = vpop.permute.xlu0 %2131
        %2135 = vset.pattern.permute.xlu0 0
        %2136 = vperm.xlu0 %2135, %v2122
        %v2137 = vpop.permute.xlu0 %2136
        %2140 = vset.pattern.permute.xlu0 0
        %2141 = vperm.xlu0 %2140, %v2123
        %v2142 = vpop.permute.xlu0 %2141
        %v2144 = vmul.f32 %v2112, %v2127
        %v2145 = vmul.f32 %v2113, %v2132
        %v2146 = vmul.f32 %v2114, %v2137
        %v2147 = vmul.f32 %v2115, %v2142
        %v2148 = vcombine.low %v2144, %v2146
        %v2149 = vcombine.high %v2144, %v2146
        %v2151 = vunpack.c.l.s4 1983009808
        %v2152 = vunpack.c.0.s8 %v2151
        %v2153 = vlaneseq
        %v2154 = vshrl.u32 %v2153, 7
        %v2155 = vsub.s32 %v2152, %v2154
        %v2156 = vrot.slane %v2148, %v2155
        %v2158 = vunpack.c.l.s4 1983009808
        %v2159 = vunpack.c.0.s8 %v2158
        %v2160 = vlaneseq
        %v2161 = vshrl.u32 %v2160, 7
        %v2162 = vsub.s32 %v2159, %v2161
        %v2163 = vrot.slane %v2149, %v2162
        %v2164 = vcombine.low %v2145, %v2147
        %v2165 = vcombine.high %v2145, %v2147
        %v2167 = vunpack.c.l.s4 1983009808
        %v2168 = vunpack.c.0.s8 %v2167
        %v2169 = vlaneseq
        %v2170 = vshrl.u32 %v2169, 7
        %v2171 = vsub.s32 %v2168, %v2170
        %v2172 = vrot.slane %v2164, %v2171
        %v2174 = vunpack.c.l.s4 1983009808
        %v2175 = vunpack.c.0.s8 %v2174
        %v2176 = vlaneseq
        %v2177 = vshrl.u32 %v2176, 7
        %v2178 = vsub.s32 %v2175, %v2177
        %v2179 = vrot.slane %v2165, %v2178
        %v2180 = vcombine.low %v2156, %v2172
        %v2181 = vcombine.high %v2156, %v2172
        %v2183 = vunpack.c.l.s4 1934713408
        %v2184 = vunpack.c.0.s8 %v2183
        %v2185 = vlaneseq
        %v2186 = vshrl.u32 %v2185, 7
        %v2187 = vsub.s32 %v2184, %v2186
        %v2188 = vrot.slane %v2180, %v2187
        %v2190 = vunpack.c.l.s4 1934713408
        %v2191 = vunpack.c.0.s8 %v2190
        %v2192 = vlaneseq
        %v2193 = vshrl.u32 %v2192, 7
        %v2194 = vsub.s32 %v2191, %v2193
        %v2195 = vrot.slane %v2181, %v2194
        %v2196 = vcombine.low %v2163, %v2179
        %v2197 = vcombine.high %v2163, %v2179
        %v2199 = vunpack.c.l.s4 1934713408
        %v2200 = vunpack.c.0.s8 %v2199
        %v2201 = vlaneseq
        %v2202 = vshrl.u32 %v2201, 7
        %v2203 = vsub.s32 %v2200, %v2202
        %v2204 = vrot.slane %v2196, %v2203
        %v2206 = vunpack.c.l.s4 1934713408
        %v2207 = vunpack.c.0.s8 %v2206
        %v2208 = vlaneseq
        %v2209 = vshrl.u32 %v2208, 7
        %v2210 = vsub.s32 %v2207, %v2209
        %v2211 = vrot.slane %v2197, %v2210
        %v2212 = vcombine.high %v2188, 0.0
        %v2213 = vcombine.high %v2195, 0.0
        %v2214 = vcombine.high %v2204, 0.0
        %v2215 = vcombine.high %v2211, 0.0
        %v2216 = vcombine.low %v2188, %v2195
        %v2218 = vunpack.c.l.s4 1983009808
        %v2219 = vunpack.c.0.s8 %v2218
        %v2220 = vlaneseq
        %v2221 = vshrl.u32 %v2220, 7
        %v2222 = vsub.s32 %v2219, %v2221
        %v2223 = vrot.slane %v2216, %v2222
        %v2224 = vcombine.low %v2212, %v2213
        %v2226 = vunpack.c.l.s4 1983009808
        %v2227 = vunpack.c.0.s8 %v2226
        %v2228 = vlaneseq
        %v2229 = vshrl.u32 %v2228, 7
        %v2230 = vsub.s32 %v2227, %v2229
        %v2231 = vrot.slane %v2224, %v2230
        %v2232 = vcombine.low %v2204, %v2211
        %v2234 = vunpack.c.l.s4 1983009808
        %v2235 = vunpack.c.0.s8 %v2234
        %v2236 = vlaneseq
        %v2237 = vshrl.u32 %v2236, 7
        %v2238 = vsub.s32 %v2235, %v2237
        %v2239 = vrot.slane %v2232, %v2238
        %v2240 = vcombine.low %v2214, %v2215
        %v2242 = vunpack.c.l.s4 1983009808
        %v2243 = vunpack.c.0.s8 %v2242
        %v2244 = vlaneseq
        %v2245 = vshrl.u32 %v2244, 7
        %v2246 = vsub.s32 %v2243, %v2245
        %v2247 = vrot.slane %v2240, %v2246
        %v2248 = vcombine.low %v2223, %v2231
        %v2249 = vcombine.high %v2223, %v2231
        %v2251 = vunpack.c.l.s4 1934713408
        %v2252 = vunpack.c.0.s8 %v2251
        %v2253 = vlaneseq
        %v2254 = vshrl.u32 %v2253, 7
        %v2255 = vsub.s32 %v2252, %v2254
        %v2256 = vrot.slane %v2248, %v2255
        %v2258 = vunpack.c.l.s4 1934713408
        %v2259 = vunpack.c.0.s8 %v2258
        %v2260 = vlaneseq
        %v2261 = vshrl.u32 %v2260, 7
        %v2262 = vsub.s32 %v2259, %v2261
        %v2263 = vrot.slane %v2249, %v2262
        %v2264 = vcombine.low %v2239, %v2247
        %v2265 = vcombine.high %v2239, %v2247
        %v2267 = vunpack.c.l.s4 1934713408
        %v2268 = vunpack.c.0.s8 %v2267
        %v2269 = vlaneseq
        %v2270 = vshrl.u32 %v2269, 7
        %v2271 = vsub.s32 %v2268, %v2270
        %v2272 = vrot.slane %v2264, %v2271
        %v2274 = vunpack.c.l.s4 1934713408
        %v2275 = vunpack.c.0.s8 %v2274
        %v2276 = vlaneseq
        %v2277 = vshrl.u32 %v2276, 7
        %v2278 = vsub.s32 %v2275, %v2277
        %v2279 = vrot.slane %v2265, %v2278
        %v2280 = vcombine.low %v2256, %v2272
        %v2281 = vcombine.high %v2256, %v2272
        %v2282 = vcombine.low %v2263, %v2279
        %v2283 = vcombine.high %v2263, %v2279
        %2285 = vrot.lane.b32.xlu0 %v2281, 32
        %v2286 = vpop.permute.xlu0 %2285
        %2289 = vrot.lane.b32.xlu0 %v2282, 64
        %v2290 = vpop.permute.xlu0 %2289
        %2293 = vrot.lane.b32.xlu0 %v2283, 96
        %v2294 = vpop.permute.xlu0 %2293
        %v2296 = vsel %vm1595, %v2280, %v2286
        %vm2297 = vcmask 523264
        %v2298 = vsel %vm2297, %v2296, %v2290
        %vm2299 = vcmask 785408
        %v2300 = vsel %vm2299, %v2298, %v2294
        %v2301 = vpack.c.bf16 %v2300, %v2300
        %2302 = vst [vmem:[%s286] sm:$0xf] %v2301
      $region44: #{gpt2_forward.14} parent=31 // pred_fallthru
        _
      %s2303 = sadd.s32 %s19, %s20
      %p2304 = scmp.lt.s32.totalorder %s2303, 1
      %s2305 = scalar_select %p2304, %s2303, 1
      %s2306 = smul.addr %s2305, 4
      %s2307 = scalar_lea.vmem %s3, %s2306
      // Predicated region
      $region45: #{gpt2_forward.14} parent=31 // pred_check
        %p2308 = pneg %p145
      $region46: #{gpt2_forward.14} parent=31 // pred_check_branch
        %2310 = sbr.rel (%p2308) target = $region48
      $region47: #{gpt2_forward.14} parent=31 // pred_region
        %s2311 = sadd.s32 %s19, %s20
      $region48: #{gpt2_forward.14} parent=31 // pred_fallthru
        _
    $region32: #{gpt2_forward.14} parent=5 // pred_fallthru
      _
    %p2312 = scmp.le.s32.totalorder 2, %s9
    // Predicated region
    $region49: #{gpt2_forward.14} parent=5 // pred_check
      %p2313 = pneg %p2312
    $region50: #{gpt2_forward.14} parent=5 // pred_check_branch
      %2315 = sbr.rel (%p2313) target = $region52
    $region51: #{gpt2_forward.14} parent=5 // pred_region
      %s2316 = ssub.s32 %s9, 2
      // Predicated region
      $region53: #{gpt2_forward.14} parent=51 // pred_check
        %p2317 = pneg %p151
      $region54: #{gpt2_forward.14} parent=51 // pred_check_branch
        %2319 = sbr.rel (%p2317) target = $region56
      $region55: #{gpt2_forward.14} parent=51 // pred_region
        %s2320 = sadd.s32 %s22, %s23
        %p2321 = scmp.lt.s32.totalorder %s2320, 1
        %s2322 = scalar_select %p2321, %s2320, 1
        %s2323 = smul.addr %s2322, 4
        %s2324 = scalar_lea.vmem %s3, %s2323
      $region56: #{gpt2_forward.14} parent=51 // pred_fallthru
        _
    $region52: #{gpt2_forward.14} parent=5 // pred_fallthru
      _
  $region6: #{gpt2_forward.14} parent=0 // loop_footer
    %s13 = sadd.s32 1, %s9
  $region7: #{gpt2_forward.14} parent=0 // loop_footer_branch
    %8 = sbr.rel target = $region3
  $region8: #{gpt2_forward.14} parent=0 // loop_exit
    _

// kernel: gpt2_forward.17
$region0: #{gpt2_forward.17}
  #allocation0 [shape = 'u32[]', space=smem, size = 0x4, offset = 0x4, fixed_abs, tag = 'smem constant byte address 0x4 - core index']
  #allocation1 [shape = 'u32[144,128]{1,0:T(1,128)}', space=vmem, size = 0x12000, scoped, tag = 'internal scratch']
  #allocation2 [shape = 'f32[16,128]{1,0:T(8,128)}', space=vmem, size = 0x2000, scoped, tag = 'scratch operand']
  %s0 = inlined_call_operand.vmem [shape: bf16[16,512], index: 0, kind: input, shape index: {}]
  %s1 = inlined_call_operand.vmem [shape: bf16[512,128], index: 1, kind: input, shape index: {}]
  %s2 = inlined_call_operand.vmem [shape: f32[1,128], index: 2, kind: input, shape index: {}]
  %s3 = inlined_call_operand.vmem [shape: f32[16,128], index: 3, kind: input, shape index: {}]
  %s4 = inlined_call_operand.vmem [shape: f32[1,128], index: 4, kind: input, shape index: {}]
  %s5 = inlined_call_operand.vmem [shape: f32[1,128], index: 5, kind: input, shape index: {}]
  %s6 = inlined_call_operand.vmem [shape: f32[16,128], index: 6, kind: output, shape index: {0}]
  %s7 = inlined_call_operand.vmem [shape: bf16[16,128], index: 7, kind: output, shape index: {1}]
  %8 = xla_tuple %s6, %s7
  %s9 = sld [smem:[#allocation0]]
  $region50: #{gpt2_forward.17} parent=0
    _
  %s11 = ssub.s32 1, %s9
  %s12 = scalar_select 0, %s11, %s9
  // Predicated region
  $region2: #{gpt2_forward.17} parent=0 // pred_check
    _
  $region3: #{gpt2_forward.17} parent=0 // pred_check_branch
    %14 = sbr.rel (0) target = $region5
  $region4: #{gpt2_forward.17} parent=0 // pred_region
    _
  $region5: #{gpt2_forward.17} parent=0 // pred_fallthru
    _
  // Predicated region
  $region6: #{gpt2_forward.17} parent=0 // pred_check
    _
  $region7: #{gpt2_forward.17} parent=0 // pred_check_branch
    %16 = sbr.rel (0) target = $region9
  $region8: #{gpt2_forward.17} parent=0 // pred_region
    _
  $region9: #{gpt2_forward.17} parent=0 // pred_fallthru
    _
  // Predicated region
  $region10: #{gpt2_forward.17} parent=0 // pred_check
    _
  $region11: #{gpt2_forward.17} parent=0 // pred_check_branch
    %18 = sbr.rel (0) target = $region13
  $region12: #{gpt2_forward.17} parent=0 // pred_region
    _
  $region13: #{gpt2_forward.17} parent=0 // pred_fallthru
    _
  // Predicated region
  $region14: #{gpt2_forward.17} parent=0 // pred_check
    _
  $region15: #{gpt2_forward.17} parent=0 // pred_check_branch
    %20 = sbr.rel (0) target = $region17
  $region16: #{gpt2_forward.17} parent=0 // pred_region
    _
  $region17: #{gpt2_forward.17} parent=0 // pred_fallthru
    _
  // Predicated region
  $region18: #{gpt2_forward.17} parent=0 // pred_check
    _
  $region19: #{gpt2_forward.17} parent=0 // pred_check_branch
    %22 = sbr.rel (0) target = $region21
  $region20: #{gpt2_forward.17} parent=0 // pred_region
    _
  $region21: #{gpt2_forward.17} parent=0 // pred_fallthru
    _
  // Predicated region
  $region22: #{gpt2_forward.17} parent=0 // pred_check
    _
  $region23: #{gpt2_forward.17} parent=0 // pred_check_branch
    %24 = sbr.rel (0) target = $region25
  $region24: #{gpt2_forward.17} parent=0 // pred_region
    _
  $region25: #{gpt2_forward.17} parent=0 // pred_fallthru
    _
  %p26 = scmp.eq.s32.totalorder 0, 0
  // Predicated region
  $region26: #{gpt2_forward.17} parent=0 // pred_check
    %p27 = pneg %p26
  $region27: #{gpt2_forward.17} parent=0 // pred_check_branch
    %29 = sbr.rel (%p27) target = $region29
  $region28: #{gpt2_forward.17} parent=0 // pred_region
    %30 = vst [vmem:[#allocation2] sm:$0xff] 0.0
    %31 = vst [vmem:[#allocation2 + $0x8] sm:$0xff] 0.0
  $region29: #{gpt2_forward.17} parent=0 // pred_fallthru
    _
  %v32 = vld [vmem:[#allocation2] sm:$0xff]
  %v33 = vld [vmem:[#allocation2 + $0x8] sm:$0xff]
  %v34 = vld [vmem:[%s0] sm:$0xff]
  %v35 = vld [vmem:[%s0 + $0x8] sm:$0xff]
  %v36 = vld [vmem:[%s0 + $0x10] sm:$0xff]
  %v37 = vld [vmem:[%s0 + $0x18] sm:$0xff]
  %v38 = vld [vmem:[%s1] sm:$0xf]
  %v39 = vld [vmem:[%s1 + $0x4] sm:$0xf]
  %v40 = vld [vmem:[%s1 + $0x8] sm:$0xf]
  %v41 = vld [vmem:[%s1 + $0xc] sm:$0xf]
  %v42 = vld [vmem:[%s1 + $0x10] sm:$0xf]
  %v43 = vld [vmem:[%s1 + $0x14] sm:$0xf]
  %v44 = vld [vmem:[%s1 + $0x18] sm:$0xf]
  %v45 = vld [vmem:[%s1 + $0x1c] sm:$0xf]
  %v46 = vld [vmem:[%s1 + $0x20] sm:$0xf]
  %v47 = vld [vmem:[%s1 + $0x24] sm:$0xf]
  %v48 = vld [vmem:[%s1 + $0x28] sm:$0xf]
  %v49 = vld [vmem:[%s1 + $0x2c] sm:$0xf]
  %v50 = vld [vmem:[%s1 + $0x30] sm:$0xf]
  %v51 = vld [vmem:[%s1 + $0x34] sm:$0xf]
  %v52 = vld [vmem:[%s1 + $0x38] sm:$0xf]
  %v53 = vld [vmem:[%s1 + $0x3c] sm:$0xf]
  %v54 = vld [vmem:[%s1 + $0x40] sm:$0xf]
  %v55 = vld [vmem:[%s1 + $0x44] sm:$0xf]
  %v56 = vld [vmem:[%s1 + $0x48] sm:$0xf]
  %v57 = vld [vmem:[%s1 + $0x4c] sm:$0xf]
  %v58 = vld [vmem:[%s1 + $0x50] sm:$0xf]
  %v59 = vld [vmem:[%s1 + $0x54] sm:$0xf]
  %v60 = vld [vmem:[%s1 + $0x58] sm:$0xf]
  %v61 = vld [vmem:[%s1 + $0x5c] sm:$0xf]
  %v62 = vld [vmem:[%s1 + $0x60] sm:$0xf]
  %v63 = vld [vmem:[%s1 + $0x64] sm:$0xf]
  %v64 = vld [vmem:[%s1 + $0x68] sm:$0xf]
  %v65 = vld [vmem:[%s1 + $0x6c] sm:$0xf]
  %v66 = vld [vmem:[%s1 + $0x70] sm:$0xf]
  %v67 = vld [vmem:[%s1 + $0x74] sm:$0xf]
  %v68 = vld [vmem:[%s1 + $0x78] sm:$0xf]
  %v69 = vld [vmem:[%s1 + $0x7c] sm:$0xf]
  %v70 = vld [vmem:[%s1 + $0x80] sm:$0xf]
  %v71 = vld [vmem:[%s1 + $0x84] sm:$0xf]
  %v72 = vld [vmem:[%s1 + $0x88] sm:$0xf]
  %v73 = vld [vmem:[%s1 + $0x8c] sm:$0xf]
  %v74 = vld [vmem:[%s1 + $0x90] sm:$0xf]
  %v75 = vld [vmem:[%s1 + $0x94] sm:$0xf]
  %v76 = vld [vmem:[%s1 + $0x98] sm:$0xf]
  %v77 = vld [vmem:[%s1 + $0x9c] sm:$0xf]
  %v78 = vld [vmem:[%s1 + $0xa0] sm:$0xf]
  %v79 = vld [vmem:[%s1 + $0xa4] sm:$0xf]
  %v80 = vld [vmem:[%s1 + $0xa8] sm:$0xf]
  %v81 = vld [vmem:[%s1 + $0xac] sm:$0xf]
  %v82 = vld [vmem:[%s1 + $0xb0] sm:$0xf]
  %v83 = vld [vmem:[%s1 + $0xb4] sm:$0xf]
  %v84 = vld [vmem:[%s1 + $0xb8] sm:$0xf]
  %v85 = vld [vmem:[%s1 + $0xbc] sm:$0xf]
  %v86 = vld [vmem:[%s1 + $0xc0] sm:$0xf]
  %v87 = vld [vmem:[%s1 + $0xc4] sm:$0xf]
  %v88 = vld [vmem:[%s1 + $0xc8] sm:$0xf]
  %v89 = vld [vmem:[%s1 + $0xcc] sm:$0xf]
  %v90 = vld [vmem:[%s1 + $0xd0] sm:$0xf]
  %v91 = vld [vmem:[%s1 + $0xd4] sm:$0xf]
  %v92 = vld [vmem:[%s1 + $0xd8] sm:$0xf]
  %v93 = vld [vmem:[%s1 + $0xdc] sm:$0xf]
  %v94 = vld [vmem:[%s1 + $0xe0] sm:$0xf]
  %v95 = vld [vmem:[%s1 + $0xe4] sm:$0xf]
  %v96 = vld [vmem:[%s1 + $0xe8] sm:$0xf]
  %v97 = vld [vmem:[%s1 + $0xec] sm:$0xf]
  %v98 = vld [vmem:[%s1 + $0xf0] sm:$0xf]
  %v99 = vld [vmem:[%s1 + $0xf4] sm:$0xf]
  %v100 = vld [vmem:[%s1 + $0xf8] sm:$0xf]
  %v101 = vld [vmem:[%s1 + $0xfc] sm:$0xf]
  %v106 = vunpack.c.l.b16 %v34
  %v107 = vunpack.c.h.b16 %v34
  %v108 = vunpack.c.l.b16 %v35
  %v109 = vunpack.c.h.b16 %v35
  %v110 = vunpack.c.l.b16 %v36
  %v111 = vunpack.c.h.b16 %v36
  %v112 = vunpack.c.l.b16 %v37
  %v113 = vunpack.c.h.b16 %v37
  %v114 = vpack.c.b16 %v110, %v106
  %v115 = vpack.c.b16 %v111, %v107
  %v116 = vpack.c.b16 %v112, %v108
  %v117 = vpack.c.b16 %v113, %v109
  %v186 = vunpack.c.l.b16 %v38
  %v187 = vunpack.c.l.b16 %v39
  %v188 = vunpack.c.l.b16 %v40
  %v189 = vunpack.c.l.b16 %v41
  %v190 = vunpack.c.l.b16 %v42
  %v191 = vunpack.c.l.b16 %v43
  %v192 = vunpack.c.l.b16 %v44
  %v193 = vunpack.c.l.b16 %v45
  %v194 = vunpack.c.l.b16 %v46
  %v195 = vunpack.c.l.b16 %v47
  %v196 = vunpack.c.l.b16 %v48
  %v197 = vunpack.c.l.b16 %v49
  %v198 = vunpack.c.l.b16 %v50
  %v199 = vunpack.c.l.b16 %v51
  %v200 = vunpack.c.l.b16 %v52
  %v201 = vunpack.c.l.b16 %v53
  %v202 = vunpack.c.l.b16 %v54
  %v203 = vunpack.c.l.b16 %v55
  %v204 = vunpack.c.l.b16 %v56
  %v205 = vunpack.c.l.b16 %v57
  %v206 = vunpack.c.l.b16 %v58
  %v207 = vunpack.c.l.b16 %v59
  %v208 = vunpack.c.l.b16 %v60
  %v209 = vunpack.c.l.b16 %v61
  %v210 = vunpack.c.l.b16 %v62
  %v211 = vunpack.c.l.b16 %v63
  %v212 = vunpack.c.l.b16 %v64
  %v213 = vunpack.c.l.b16 %v65
  %v214 = vunpack.c.l.b16 %v66
  %v215 = vunpack.c.l.b16 %v67
  %v216 = vunpack.c.l.b16 %v68
  %v217 = vunpack.c.l.b16 %v69
  %v218 = vunpack.c.l.b16 %v70
  %v219 = vunpack.c.l.b16 %v71
  %v220 = vunpack.c.l.b16 %v72
  %v221 = vunpack.c.l.b16 %v73
  %v222 = vunpack.c.l.b16 %v74
  %v223 = vunpack.c.l.b16 %v75
  %v224 = vunpack.c.l.b16 %v76
  %v225 = vunpack.c.l.b16 %v77
  %v226 = vunpack.c.l.b16 %v78
  %v227 = vunpack.c.l.b16 %v79
  %v228 = vunpack.c.l.b16 %v80
  %v229 = vunpack.c.l.b16 %v81
  %v230 = vunpack.c.l.b16 %v82
  %v231 = vunpack.c.l.b16 %v83
  %v232 = vunpack.c.l.b16 %v84
  %v233 = vunpack.c.l.b16 %v85
  %v234 = vunpack.c.l.b16 %v86
  %v235 = vunpack.c.l.b16 %v87
  %v236 = vunpack.c.l.b16 %v88
  %v237 = vunpack.c.l.b16 %v89
  %v238 = vunpack.c.l.b16 %v90
  %v239 = vunpack.c.l.b16 %v91
  %v240 = vunpack.c.l.b16 %v92
  %v241 = vunpack.c.l.b16 %v93
  %v242 = vunpack.c.l.b16 %v94
  %v243 = vunpack.c.l.b16 %v95
  %v244 = vunpack.c.l.b16 %v96
  %v245 = vunpack.c.l.b16 %v97
  %v246 = vunpack.c.l.b16 %v98
  %v247 = vunpack.c.l.b16 %v99
  %v248 = vunpack.c.l.b16 %v100
  %v249 = vunpack.c.l.b16 %v101
  %v250 = vpack.c.b16 %v187, %v186
  %v251 = vpack.c.b16 %v189, %v188
  %v252 = vpack.c.b16 %v191, %v190
  %v253 = vpack.c.b16 %v193, %v192
  %v254 = vpack.c.b16 %v195, %v194
  %v255 = vpack.c.b16 %v197, %v196
  %v256 = vpack.c.b16 %v199, %v198
  %v257 = vpack.c.b16 %v201, %v200
  %v258 = vpack.c.b16 %v203, %v202
  %v259 = vpack.c.b16 %v205, %v204
  %v260 = vpack.c.b16 %v207, %v206
  %v261 = vpack.c.b16 %v209, %v208
  %v262 = vpack.c.b16 %v211, %v210
  %v263 = vpack.c.b16 %v213, %v212
  %v264 = vpack.c.b16 %v215, %v214
  %v265 = vpack.c.b16 %v217, %v216
  %v266 = vpack.c.b16 %v219, %v218
  %v267 = vpack.c.b16 %v221, %v220
  %v268 = vpack.c.b16 %v223, %v222
  %v269 = vpack.c.b16 %v225, %v224
  %v270 = vpack.c.b16 %v227, %v226
  %v271 = vpack.c.b16 %v229, %v228
  %v272 = vpack.c.b16 %v231, %v230
  %v273 = vpack.c.b16 %v233, %v232
  %v274 = vpack.c.b16 %v235, %v234
  %v275 = vpack.c.b16 %v237, %v236
  %v276 = vpack.c.b16 %v239, %v238
  %v277 = vpack.c.b16 %v241, %v240
  %v278 = vpack.c.b16 %v243, %v242
  %v279 = vpack.c.b16 %v245, %v244
  %v280 = vpack.c.b16 %v247, %v246
  %v281 = vpack.c.b16 %v249, %v248
  %314 = vmatprep.subr.bf16.mxu0 0
  %315 = vmatpush1.bf16.msra.mxu0 %v250
  %316 = vmatprep.subr.bf16.mxu0 0
  %317 = vmatpush1.bf16.msra.mxu0 %v251
  %318 = vmatprep.subr.bf16.mxu0 0
  %319 = vmatpush1.bf16.msra.mxu0 %v252
  %320 = vmatprep.subr.bf16.mxu0 0
  %321 = vmatpush1.bf16.msra.mxu0 %v253
  %322 = vmatprep.subr.bf16.mxu0 0
  %323 = vmatpush1.bf16.msra.mxu0 %v254
  %324 = vmatprep.subr.bf16.mxu0 0
  %325 = vmatpush1.bf16.msra.mxu0 %v255
  %326 = vmatprep.subr.bf16.mxu0 0
  %327 = vmatpush1.bf16.msra.mxu0 %v256
  %328 = vmatprep.subr.bf16.mxu0 0
  %329 = vmatpush1.bf16.msra.mxu0 %v257
  %330 = vmatprep.subr.bf16.mxu0 0
  %331 = vmatpush1.bf16.msra.mxu0 %v258
  %332 = vmatprep.subr.bf16.mxu0 0
  %333 = vmatpush1.bf16.msra.mxu0 %v259
  %334 = vmatprep.subr.bf16.mxu0 0
  %335 = vmatpush1.bf16.msra.mxu0 %v260
  %336 = vmatprep.subr.bf16.mxu0 0
  %337 = vmatpush1.bf16.msra.mxu0 %v261
  %338 = vmatprep.subr.bf16.mxu0 0
  %339 = vmatpush1.bf16.msra.mxu0 %v262
  %340 = vmatprep.subr.bf16.mxu0 0
  %341 = vmatpush1.bf16.msra.mxu0 %v263
  %342 = vmatprep.subr.bf16.mxu0 0
  %343 = vmatpush1.bf16.msra.mxu0 %v264
  %344 = vmatprep.subr.bf16.mxu0 0
  %345 = vmatpush1.bf16.msra.mxu0 %v265
  %346 = vmatprep.mubr.bf16.mxu0 %v115
  %347 = vmatmul.mubr.bf16.gmra.mrb[0].mxu0 %v114
  %v348 = vpop.f32.mrb[0].mxu0
  %v349 = vadd.f32 0.0, %v348
  %v350 = vpop.f32.mrb[0].mxu0
  %v351 = vpop.f32.mrb[0].mxu0
  %v352 = vadd.f32 0.0, %v351
  %v353 = vpop.f32.mrb[0].mxu0
  %354 = vdwg.mxu0
  %355 = vmatprep.subr.bf16.mxu0 0
  %356 = vmatpush1.bf16.msra.mxu0 %v266
  %357 = vmatprep.subr.bf16.mxu0 0
  %358 = vmatpush1.bf16.msra.mxu0 %v267
  %359 = vmatprep.subr.bf16.mxu0 0
  %360 = vmatpush1.bf16.msra.mxu0 %v268
  %361 = vmatprep.subr.bf16.mxu0 0
  %362 = vmatpush1.bf16.msra.mxu0 %v269
  %363 = vmatprep.subr.bf16.mxu0 0
  %364 = vmatpush1.bf16.msra.mxu0 %v270
  %365 = vmatprep.subr.bf16.mxu0 0
  %366 = vmatpush1.bf16.msra.mxu0 %v271
  %367 = vmatprep.subr.bf16.mxu0 0
  %368 = vmatpush1.bf16.msra.mxu0 %v272
  %369 = vmatprep.subr.bf16.mxu0 0
  %370 = vmatpush1.bf16.msra.mxu0 %v273
  %371 = vmatprep.subr.bf16.mxu0 0
  %372 = vmatpush1.bf16.msra.mxu0 %v274
  %373 = vmatprep.subr.bf16.mxu0 0
  %374 = vmatpush1.bf16.msra.mxu0 %v275
  %375 = vmatprep.subr.bf16.mxu0 0
  %376 = vmatpush1.bf16.msra.mxu0 %v276
  %377 = vmatprep.subr.bf16.mxu0 0
  %378 = vmatpush1.bf16.msra.mxu0 %v277
  %379 = vmatprep.subr.bf16.mxu0 0
  %380 = vmatpush1.bf16.msra.mxu0 %v278
  %381 = vmatprep.subr.bf16.mxu0 0
  %382 = vmatpush1.bf16.msra.mxu0 %v279
  %383 = vmatprep.subr.bf16.mxu0 0
  %384 = vmatpush1.bf16.msra.mxu0 %v280
  %385 = vmatprep.subr.bf16.mxu0 0
  %386 = vmatpush1.bf16.msra.mxu0 %v281
  %387 = vmatprep.mubr.bf16.mxu0 %v117
  %388 = vmatmul.mubr.bf16.gmra.mrb[0].mxu0 %v116
  %v389 = vpop.f32.mrb[0].mxu0
  %v390 = vadd.f32 %v349, %v389
  %v391 = vpop.f32.mrb[0].mxu0
  %v392 = vpop.f32.mrb[0].mxu0
  %v393 = vadd.f32 %v352, %v392
  %v394 = vpop.f32.mrb[0].mxu0
  %395 = vdwg.mxu0
  %v396 = vadd.f32 %v32, %v390
  %v397 = vadd.f32 %v33, %v393
  %398 = vst [vmem:[#allocation2] sm:$0xff] %v396
  %399 = vst [vmem:[#allocation2 + $0x8] sm:$0xff] %v397
  // Predicated region
  $region30: #{gpt2_forward.17} parent=0 // pred_check
    %p400 = pneg %p26
  $region31: #{gpt2_forward.17} parent=0 // pred_check_branch
    %402 = sbr.rel (%p400) target = $region33
  $region32: #{gpt2_forward.17} parent=0 // pred_region
    %v403 = vld [vmem:[#allocation2] sm:$0xff]
    %v404 = vld [vmem:[#allocation2 + $0x8] sm:$0xff]
    %v405 = vld [vmem:[%s2] sm:$0x1]
    %v407 = vlaneseq
    %v408 = vshrl.u32 %v407, 7
    %v409 = vsub.s32 0, %v408
    %v410 = vrot.slane %v405, %v409
    %v412 = vadd.f32 %v403, %v410
    %v413 = vadd.f32 %v404, %v410
    %v414 = vld [vmem:[%s3] sm:$0xff]
    %v415 = vld [vmem:[%s3 + $0x8] sm:$0xff]
    %v416 = vadd.f32 %v412, %v414
    %v417 = vadd.f32 %v413, %v415
    %418 = vst [vmem:[%s6] sm:$0xff] %v416
    %419 = vst [vmem:[%s6 + $0x8] sm:$0xff] %v417
    %420 = vadd.xlane.f32.xlu0 %v416
    %v421 = vpop.xlane.xlu0 %420
    %422 = vadd.xlane.f32.xlu0 %v417
    %v423 = vpop.xlane.xlu0 %422
    %v424 = vrcp.pop 128.0
    %v425 = vmul.f32 %v421, %v424
    %v426 = vmul.f32 %v423, %v424
    %v427 = vsub.f32 %v416, %v425
    %v428 = vsub.f32 %v417, %v426
    %v429 = vmul.f32 %v427, %v427
    %v430 = vmul.f32 %v428, %v428
    %431 = vadd.xlane.f32.xlu0 %v429
    %v432 = vpop.xlane.xlu0 %431
    %433 = vadd.xlane.f32.xlu0 %v430
    %v434 = vpop.xlane.xlu0 %433
    %v435 = vmul.f32 %v432, %v424
    %v436 = vmul.f32 %v434, %v424
    %v437 = vadd.f32 %v435, 1e-05
    %v438 = vadd.f32 %v436, 1e-05
    %v439 = vrsqrt.pop %v437
    %v440 = vrsqrt.pop %v438
    %v441 = vmul.f32 %v427, %v439
    %v442 = vmul.f32 %v428, %v440
    %v443 = vld [vmem:[%s4] sm:$0x1]
    %v445 = vlaneseq
    %v446 = vshrl.u32 %v445, 7
    %v447 = vsub.s32 0, %v446
    %v448 = vrot.slane %v443, %v447
    %v450 = vmul.f32 %v441, %v448
    %v451 = vmul.f32 %v442, %v448
    %v452 = vld [vmem:[%s5] sm:$0x1]
    %v454 = vlaneseq
    %v455 = vshrl.u32 %v454, 7
    %v456 = vsub.s32 0, %v455
    %v457 = vrot.slane %v452, %v456
    %v459 = vadd.f32 %v450, %v457
    %v460 = vadd.f32 %v451, %v457
    %v461 = vpack.c.bf16 %v460, %v459
    %v463 = vunpack.c.l.b16 %v461
    %v464 = vunpack.c.h.b16 %v461
    %v465 = vpack.c.b16 %v463, %v463
    %v466 = vpack.c.b16 %v464, %v464
    %469 = vst [vmem:[%s7] sm:$0xf] %v465
    %470 = vst [vmem:[%s7 + $0x4] sm:$0xf] %v466
  $region33: #{gpt2_forward.17} parent=0 // pred_fallthru
    _
  // Predicated region
  $region34: #{gpt2_forward.17} parent=0 // pred_check
    _
  $region35: #{gpt2_forward.17} parent=0 // pred_check_branch
    %472 = sbr.rel (0) target = $region37
  $region36: #{gpt2_forward.17} parent=0 // pred_region
    _
  $region37: #{gpt2_forward.17} parent=0 // pred_fallthru
    _
  // Predicated region
  $region38: #{gpt2_forward.17} parent=0 // pred_check
    _
  $region39: #{gpt2_forward.17} parent=0 // pred_check_branch
    %474 = sbr.rel (0) target = $region41
  $region40: #{gpt2_forward.17} parent=0 // pred_region
    _
  $region41: #{gpt2_forward.17} parent=0 // pred_fallthru
    _
  // Predicated region
  $region42: #{gpt2_forward.17} parent=0 // pred_check
    _
  $region43: #{gpt2_forward.17} parent=0 // pred_check_branch
    %476 = sbr.rel (0) target = $region45
  $region44: #{gpt2_forward.17} parent=0 // pred_region
    _
  $region45: #{gpt2_forward.17} parent=0 // pred_fallthru
    _
  // Predicated region
  $region46: #{gpt2_forward.17} parent=0 // pred_check
    _
  $region47: #{gpt2_forward.17} parent=0 // pred_check_branch
    %478 = sbr.rel (0) target = $region49
  $region48: #{gpt2_forward.17} parent=0 // pred_region
    _
  $region49: #{gpt2_forward.17} parent=0 // pred_fallthru
    _

// kernel: gpt2_forward.22
$region0: #{gpt2_forward.22}
  #allocation0 [shape = 'u32[]', space=smem, size = 0x4, offset = 0x4, fixed_abs, tag = 'smem constant byte address 0x4 - core index']
  #allocation1 [shape = 'u32[144,128]{1,0:T(1,128)}', space=vmem, size = 0x12000, scoped, tag = 'internal scratch']
  #allocation2 [shape = 'f32[16,128]{1,0:T(8,128)}', space=vmem, size = 0x2000, scoped, tag = 'scratch operand']
  %s0 = inlined_call_operand.vmem [shape: bf16[16,512], index: 0, kind: input, shape index: {}]
  %s1 = inlined_call_operand.vmem [shape: bf16[512,128], index: 1, kind: input, shape index: {}]
  %s2 = inlined_call_operand.vmem [shape: f32[1,128], index: 2, kind: input, shape index: {}]
  %s3 = inlined_call_operand.vmem [shape: f32[16,128], index: 3, kind: input, shape index: {}]
  %s4 = inlined_call_operand.vmem [shape: f32[1,128], index: 4, kind: input, shape index: {}]
  %s5 = inlined_call_operand.vmem [shape: f32[1,128], index: 5, kind: input, shape index: {}]
  %s6 = inlined_call_operand.hbm [shape: f32[16,128], index: 6, kind: output, shape index: {0}]
  %s7 = inlined_call_operand.vmem [shape: bf16[16,128], index: 7, kind: output, shape index: {1}]
  %8 = xla_tuple %s6, %s7
  %s9 = sld [smem:[#allocation0]]
  $region50: #{gpt2_forward.22} parent=0
    _
  %s11 = ssub.s32 1, %s9
  %s12 = scalar_select 0, %s11, %s9
  $region1: #{gpt2_forward.22} parent=0
    #allocation3 [shape = 'u8[8192]{0}', space=vmem, size = 0x2000, scoped, tag = 'output window, operand 0, single buffered']
    #allocation4 [shape = 's32[1]{0}', space=sflag, size = 0x4, scoped, tag = 'scoped memory for gpt2_forward.22']
    %13 = vsyncpa [#allocation4], 0
    // Predicated region
    $region2: #{gpt2_forward.22} parent=1 // pred_check
      _
    $region3: #{gpt2_forward.22} parent=1 // pred_check_branch
      %15 = sbr.rel (0) target = $region5
    $region4: #{gpt2_forward.22} parent=1 // pred_region
      _
    $region5: #{gpt2_forward.22} parent=1 // pred_fallthru
      _
    // Predicated region
    $region6: #{gpt2_forward.22} parent=1 // pred_check
      _
    $region7: #{gpt2_forward.22} parent=1 // pred_check_branch
      %17 = sbr.rel (0) target = $region9
    $region8: #{gpt2_forward.22} parent=1 // pred_region
      _
    $region9: #{gpt2_forward.22} parent=1 // pred_fallthru
      _
    // Predicated region
    $region10: #{gpt2_forward.22} parent=1 // pred_check
      _
    $region11: #{gpt2_forward.22} parent=1 // pred_check_branch
      %19 = sbr.rel (0) target = $region13
    $region12: #{gpt2_forward.22} parent=1 // pred_region
      _
    $region13: #{gpt2_forward.22} parent=1 // pred_fallthru
      _
    // Predicated region
    $region14: #{gpt2_forward.22} parent=1 // pred_check
      _
    $region15: #{gpt2_forward.22} parent=1 // pred_check_branch
      %21 = sbr.rel (0) target = $region17
    $region16: #{gpt2_forward.22} parent=1 // pred_region
      _
    $region17: #{gpt2_forward.22} parent=1 // pred_fallthru
      _
    // Predicated region
    $region18: #{gpt2_forward.22} parent=1 // pred_check
      _
    $region19: #{gpt2_forward.22} parent=1 // pred_check_branch
      %23 = sbr.rel (0) target = $region21
    $region20: #{gpt2_forward.22} parent=1 // pred_region
      _
    $region21: #{gpt2_forward.22} parent=1 // pred_fallthru
      _
    // Predicated region
    $region22: #{gpt2_forward.22} parent=1 // pred_check
      _
    $region23: #{gpt2_forward.22} parent=1 // pred_check_branch
      %25 = sbr.rel (0) target = $region25
    $region24: #{gpt2_forward.22} parent=1 // pred_region
      _
    $region25: #{gpt2_forward.22} parent=1 // pred_fallthru
      _
    %p27 = scmp.eq.s32.totalorder 0, 0
    // Predicated region
    $region26: #{gpt2_forward.22} parent=1 // pred_check
      %p28 = pneg %p27
    $region27: #{gpt2_forward.22} parent=1 // pred_check_branch
      %30 = sbr.rel (%p28) target = $region29
    $region28: #{gpt2_forward.22} parent=1 // pred_region
      %31 = vst [vmem:[#allocation2] sm:$0xff] 0.0
      %32 = vst [vmem:[#allocation2 + $0x8] sm:$0xff] 0.0
    $region29: #{gpt2_forward.22} parent=1 // pred_fallthru
      _
    %v33 = vld [vmem:[#allocation2] sm:$0xff]
    %v34 = vld [vmem:[#allocation2 + $0x8] sm:$0xff]
    %v35 = vld [vmem:[%s0] sm:$0xff]
    %v36 = vld [vmem:[%s0 + $0x8] sm:$0xff]
    %v37 = vld [vmem:[%s0 + $0x10] sm:$0xff]
    %v38 = vld [vmem:[%s0 + $0x18] sm:$0xff]
    %v39 = vld [vmem:[%s1] sm:$0xf]
    %v40 = vld [vmem:[%s1 + $0x4] sm:$0xf]
    %v41 = vld [vmem:[%s1 + $0x8] sm:$0xf]
    %v42 = vld [vmem:[%s1 + $0xc] sm:$0xf]
    %v43 = vld [vmem:[%s1 + $0x10] sm:$0xf]
    %v44 = vld [vmem:[%s1 + $0x14] sm:$0xf]
    %v45 = vld [vmem:[%s1 + $0x18] sm:$0xf]
    %v46 = vld [vmem:[%s1 + $0x1c] sm:$0xf]
    %v47 = vld [vmem:[%s1 + $0x20] sm:$0xf]
    %v48 = vld [vmem:[%s1 + $0x24] sm:$0xf]
    %v49 = vld [vmem:[%s1 + $0x28] sm:$0xf]
    %v50 = vld [vmem:[%s1 + $0x2c] sm:$0xf]
    %v51 = vld [vmem:[%s1 + $0x30] sm:$0xf]
    %v52 = vld [vmem:[%s1 + $0x34] sm:$0xf]
    %v53 = vld [vmem:[%s1 + $0x38] sm:$0xf]
    %v54 = vld [vmem:[%s1 + $0x3c] sm:$0xf]
    %v55 = vld [vmem:[%s1 + $0x40] sm:$0xf]
    %v56 = vld [vmem:[%s1 + $0x44] sm:$0xf]
    %v57 = vld [vmem:[%s1 + $0x48] sm:$0xf]
    %v58 = vld [vmem:[%s1 + $0x4c] sm:$0xf]
    %v59 = vld [vmem:[%s1 + $0x50] sm:$0xf]
    %v60 = vld [vmem:[%s1 + $0x54] sm:$0xf]
    %v61 = vld [vmem:[%s1 + $0x58] sm:$0xf]
    %v62 = vld [vmem:[%s1 + $0x5c] sm:$0xf]
    %v63 = vld [vmem:[%s1 + $0x60] sm:$0xf]
    %v64 = vld [vmem:[%s1 + $0x64] sm:$0xf]
    %v65 = vld [vmem:[%s1 + $0x68] sm:$0xf]
    %v66 = vld [vmem:[%s1 + $0x6c] sm:$0xf]
    %v67 = vld [vmem:[%s1 + $0x70] sm:$0xf]
    %v68 = vld [vmem:[%s1 + $0x74] sm:$0xf]
    %v69 = vld [vmem:[%s1 + $0x78] sm:$0xf]
    %v70 = vld [vmem:[%s1 + $0x7c] sm:$0xf]
    %v71 = vld [vmem:[%s1 + $0x80] sm:$0xf]
    %v72 = vld [vmem:[%s1 + $0x84] sm:$0xf]
    %v73 = vld [vmem:[%s1 + $0x88] sm:$0xf]
    %v74 = vld [vmem:[%s1 + $0x8c] sm:$0xf]
    %v75 = vld [vmem:[%s1 + $0x90] sm:$0xf]
    %v76 = vld [vmem:[%s1 + $0x94] sm:$0xf]
    %v77 = vld [vmem:[%s1 + $0x98] sm:$0xf]
    %v78 = vld [vmem:[%s1 + $0x9c] sm:$0xf]
    %v79 = vld [vmem:[%s1 + $0xa0] sm:$0xf]
    %v80 = vld [vmem:[%s1 + $0xa4] sm:$0xf]
    %v81 = vld [vmem:[%s1 + $0xa8] sm:$0xf]
    %v82 = vld [vmem:[%s1 + $0xac] sm:$0xf]
    %v83 = vld [vmem:[%s1 + $0xb0] sm:$0xf]
    %v84 = vld [vmem:[%s1 + $0xb4] sm:$0xf]
    %v85 = vld [vmem:[%s1 + $0xb8] sm:$0xf]
    %v86 = vld [vmem:[%s1 + $0xbc] sm:$0xf]
    %v87 = vld [vmem:[%s1 + $0xc0] sm:$0xf]
    %v88 = vld [vmem:[%s1 + $0xc4] sm:$0xf]
    %v89 = vld [vmem:[%s1 + $0xc8] sm:$0xf]
    %v90 = vld [vmem:[%s1 + $0xcc] sm:$0xf]
    %v91 = vld [vmem:[%s1 + $0xd0] sm:$0xf]
    %v92 = vld [vmem:[%s1 + $0xd4] sm:$0xf]
    %v93 = vld [vmem:[%s1 + $0xd8] sm:$0xf]
    %v94 = vld [vmem:[%s1 + $0xdc] sm:$0xf]
    %v95 = vld [vmem:[%s1 + $0xe0] sm:$0xf]
    %v96 = vld [vmem:[%s1 + $0xe4] sm:$0xf]
    %v97 = vld [vmem:[%s1 + $0xe8] sm:$0xf]
    %v98 = vld [vmem:[%s1 + $0xec] sm:$0xf]
    %v99 = vld [vmem:[%s1 + $0xf0] sm:$0xf]
    %v100 = vld [vmem:[%s1 + $0xf4] sm:$0xf]
    %v101 = vld [vmem:[%s1 + $0xf8] sm:$0xf]
    %v102 = vld [vmem:[%s1 + $0xfc] sm:$0xf]
    %v107 = vunpack.c.l.b16 %v35
    %v108 = vunpack.c.h.b16 %v35
    %v109 = vunpack.c.l.b16 %v36
    %v110 = vunpack.c.h.b16 %v36
    %v111 = vunpack.c.l.b16 %v37
    %v112 = vunpack.c.h.b16 %v37
    %v113 = vunpack.c.l.b16 %v38
    %v114 = vunpack.c.h.b16 %v38
    %v115 = vpack.c.b16 %v111, %v107
    %v116 = vpack.c.b16 %v112, %v108
    %v117 = vpack.c.b16 %v113, %v109
    %v118 = vpack.c.b16 %v114, %v110
    %v187 = vunpack.c.l.b16 %v39
    %v188 = vunpack.c.l.b16 %v40
    %v189 = vunpack.c.l.b16 %v41
    %v190 = vunpack.c.l.b16 %v42
    %v191 = vunpack.c.l.b16 %v43
    %v192 = vunpack.c.l.b16 %v44
    %v193 = vunpack.c.l.b16 %v45
    %v194 = vunpack.c.l.b16 %v46
    %v195 = vunpack.c.l.b16 %v47
    %v196 = vunpack.c.l.b16 %v48
    %v197 = vunpack.c.l.b16 %v49
    %v198 = vunpack.c.l.b16 %v50
    %v199 = vunpack.c.l.b16 %v51
    %v200 = vunpack.c.l.b16 %v52
    %v201 = vunpack.c.l.b16 %v53
    %v202 = vunpack.c.l.b16 %v54
    %v203 = vunpack.c.l.b16 %v55
    %v204 = vunpack.c.l.b16 %v56
    %v205 = vunpack.c.l.b16 %v57
    %v206 = vunpack.c.l.b16 %v58
    %v207 = vunpack.c.l.b16 %v59
    %v208 = vunpack.c.l.b16 %v60
    %v209 = vunpack.c.l.b16 %v61
    %v210 = vunpack.c.l.b16 %v62
    %v211 = vunpack.c.l.b16 %v63
    %v212 = vunpack.c.l.b16 %v64
    %v213 = vunpack.c.l.b16 %v65
    %v214 = vunpack.c.l.b16 %v66
    %v215 = vunpack.c.l.b16 %v67
    %v216 = vunpack.c.l.b16 %v68
    %v217 = vunpack.c.l.b16 %v69
    %v218 = vunpack.c.l.b16 %v70
    %v219 = vunpack.c.l.b16 %v71
    %v220 = vunpack.c.l.b16 %v72
    %v221 = vunpack.c.l.b16 %v73
    %v222 = vunpack.c.l.b16 %v74
    %v223 = vunpack.c.l.b16 %v75
    %v224 = vunpack.c.l.b16 %v76
    %v225 = vunpack.c.l.b16 %v77
    %v226 = vunpack.c.l.b16 %v78
    %v227 = vunpack.c.l.b16 %v79
    %v228 = vunpack.c.l.b16 %v80
    %v229 = vunpack.c.l.b16 %v81
    %v230 = vunpack.c.l.b16 %v82
    %v231 = vunpack.c.l.b16 %v83
    %v232 = vunpack.c.l.b16 %v84
    %v233 = vunpack.c.l.b16 %v85
    %v234 = vunpack.c.l.b16 %v86
    %v235 = vunpack.c.l.b16 %v87
    %v236 = vunpack.c.l.b16 %v88
    %v237 = vunpack.c.l.b16 %v89
    %v238 = vunpack.c.l.b16 %v90
    %v239 = vunpack.c.l.b16 %v91
    %v240 = vunpack.c.l.b16 %v92
    %v241 = vunpack.c.l.b16 %v93
    %v242 = vunpack.c.l.b16 %v94
    %v243 = vunpack.c.l.b16 %v95
    %v244 = vunpack.c.l.b16 %v96
    %v245 = vunpack.c.l.b16 %v97
    %v246 = vunpack.c.l.b16 %v98
    %v247 = vunpack.c.l.b16 %v99
    %v248 = vunpack.c.l.b16 %v100
    %v249 = vunpack.c.l.b16 %v101
    %v250 = vunpack.c.l.b16 %v102
    %v251 = vpack.c.b16 %v188, %v187
    %v252 = vpack.c.b16 %v190, %v189
    %v253 = vpack.c.b16 %v192, %v191
    %v254 = vpack.c.b16 %v194, %v193
    %v255 = vpack.c.b16 %v196, %v195
    %v256 = vpack.c.b16 %v198, %v197
    %v257 = vpack.c.b16 %v200, %v199
    %v258 = vpack.c.b16 %v202, %v201
    %v259 = vpack.c.b16 %v204, %v203
    %v260 = vpack.c.b16 %v206, %v205
    %v261 = vpack.c.b16 %v208, %v207
    %v262 = vpack.c.b16 %v210, %v209
    %v263 = vpack.c.b16 %v212, %v211
    %v264 = vpack.c.b16 %v214, %v213
    %v265 = vpack.c.b16 %v216, %v215
    %v266 = vpack.c.b16 %v218, %v217
    %v267 = vpack.c.b16 %v220, %v219
    %v268 = vpack.c.b16 %v222, %v221
    %v269 = vpack.c.b16 %v224, %v223
    %v270 = vpack.c.b16 %v226, %v225
    %v271 = vpack.c.b16 %v228, %v227
    %v272 = vpack.c.b16 %v230, %v229
    %v273 = vpack.c.b16 %v232, %v231
    %v274 = vpack.c.b16 %v234, %v233
    %v275 = vpack.c.b16 %v236, %v235
    %v276 = vpack.c.b16 %v238, %v237
    %v277 = vpack.c.b16 %v240, %v239
    %v278 = vpack.c.b16 %v242, %v241
    %v279 = vpack.c.b16 %v244, %v243
    %v280 = vpack.c.b16 %v246, %v245
    %v281 = vpack.c.b16 %v248, %v247
    %v282 = vpack.c.b16 %v250, %v249
    %315 = vmatprep.subr.bf16.mxu0 0
    %316 = vmatpush1.bf16.msra.mxu0 %v251
    %317 = vmatprep.subr.bf16.mxu0 0
    %318 = vmatpush1.bf16.msra.mxu0 %v252
    %319 = vmatprep.subr.bf16.mxu0 0
    %320 = vmatpush1.bf16.msra.mxu0 %v253
    %321 = vmatprep.subr.bf16.mxu0 0
    %322 = vmatpush1.bf16.msra.mxu0 %v254
    %323 = vmatprep.subr.bf16.mxu0 0
    %324 = vmatpush1.bf16.msra.mxu0 %v255
    %325 = vmatprep.subr.bf16.mxu0 0
    %326 = vmatpush1.bf16.msra.mxu0 %v256
    %327 = vmatprep.subr.bf16.mxu0 0
    %328 = vmatpush1.bf16.msra.mxu0 %v257
    %329 = vmatprep.subr.bf16.mxu0 0
    %330 = vmatpush1.bf16.msra.mxu0 %v258
    %331 = vmatprep.subr.bf16.mxu0 0
    %332 = vmatpush1.bf16.msra.mxu0 %v259
    %333 = vmatprep.subr.bf16.mxu0 0
    %334 = vmatpush1.bf16.msra.mxu0 %v260
    %335 = vmatprep.subr.bf16.mxu0 0
    %336 = vmatpush1.bf16.msra.mxu0 %v261
    %337 = vmatprep.subr.bf16.mxu0 0
    %338 = vmatpush1.bf16.msra.mxu0 %v262
    %339 = vmatprep.subr.bf16.mxu0 0
    %340 = vmatpush1.bf16.msra.mxu0 %v263
    %341 = vmatprep.subr.bf16.mxu0 0
    %342 = vmatpush1.bf16.msra.mxu0 %v264
    %343 = vmatprep.subr.bf16.mxu0 0
    %344 = vmatpush1.bf16.msra.mxu0 %v265
    %345 = vmatprep.subr.bf16.mxu0 0
    %346 = vmatpush1.bf16.msra.mxu0 %v266
    %347 = vmatprep.mubr.bf16.mxu0 %v116
    %348 = vmatmul.mubr.bf16.gmra.mrb[0].mxu0 %v115
    %v349 = vpop.f32.mrb[0].mxu0
    %v350 = vadd.f32 0.0, %v349
    %v351 = vpop.f32.mrb[0].mxu0
    %v352 = vpop.f32.mrb[0].mxu0
    %v353 = vadd.f32 0.0, %v352
    %v354 = vpop.f32.mrb[0].mxu0
    %355 = vdwg.mxu0
    %356 = vmatprep.subr.bf16.mxu0 0
    %357 = vmatpush1.bf16.msra.mxu0 %v267
    %358 = vmatprep.subr.bf16.mxu0 0
    %359 = vmatpush1.bf16.msra.mxu0 %v268
    %360 = vmatprep.subr.bf16.mxu0 0
    %361 = vmatpush1.bf16.msra.mxu0 %v269
    %362 = vmatprep.subr.bf16.mxu0 0
    %363 = vmatpush1.bf16.msra.mxu0 %v270
    %364 = vmatprep.subr.bf16.mxu0 0
    %365 = vmatpush1.bf16.msra.mxu0 %v271
    %366 = vmatprep.subr.bf16.mxu0 0
    %367 = vmatpush1.bf16.msra.mxu0 %v272
    %368 = vmatprep.subr.bf16.mxu0 0
    %369 = vmatpush1.bf16.msra.mxu0 %v273
    %370 = vmatprep.subr.bf16.mxu0 0
    %371 = vmatpush1.bf16.msra.mxu0 %v274
    %372 = vmatprep.subr.bf16.mxu0 0
    %373 = vmatpush1.bf16.msra.mxu0 %v275
    %374 = vmatprep.subr.bf16.mxu0 0
    %375 = vmatpush1.bf16.msra.mxu0 %v276
    %376 = vmatprep.subr.bf16.mxu0 0
    %377 = vmatpush1.bf16.msra.mxu0 %v277
    %378 = vmatprep.subr.bf16.mxu0 0
    %379 = vmatpush1.bf16.msra.mxu0 %v278
    %380 = vmatprep.subr.bf16.mxu0 0
    %381 = vmatpush1.bf16.msra.mxu0 %v279
    %382 = vmatprep.subr.bf16.mxu0 0
    %383 = vmatpush1.bf16.msra.mxu0 %v280
    %384 = vmatprep.subr.bf16.mxu0 0
    %385 = vmatpush1.bf16.msra.mxu0 %v281
    %386 = vmatprep.subr.bf16.mxu0 0
    %387 = vmatpush1.bf16.msra.mxu0 %v282
    %388 = vmatprep.mubr.bf16.mxu0 %v118
    %389 = vmatmul.mubr.bf16.gmra.mrb[0].mxu0 %v117
    %v390 = vpop.f32.mrb[0].mxu0
    %v391 = vadd.f32 %v350, %v390
    %v392 = vpop.f32.mrb[0].mxu0
    %v393 = vpop.f32.mrb[0].mxu0
    %v394 = vadd.f32 %v353, %v393
    %v395 = vpop.f32.mrb[0].mxu0
    %396 = vdwg.mxu0
    %v397 = vadd.f32 %v33, %v391
    %v398 = vadd.f32 %v34, %v394
    %399 = vst [vmem:[#allocation2] sm:$0xff] %v397
    %400 = vst [vmem:[#allocation2 + $0x8] sm:$0xff] %v398
    // Predicated region
    $region30: #{gpt2_forward.22} parent=1 // pred_check
      %p401 = pneg %p27
    $region31: #{gpt2_forward.22} parent=1 // pred_check_branch
      %403 = sbr.rel (%p401) target = $region33
    $region32: #{gpt2_forward.22} parent=1 // pred_region
      %v404 = vld [vmem:[#allocation2] sm:$0xff]
      %v405 = vld [vmem:[#allocation2 + $0x8] sm:$0xff]
      %v406 = vld [vmem:[%s2] sm:$0x1]
      %v408 = vlaneseq
      %v409 = vshrl.u32 %v408, 7
      %v410 = vsub.s32 0, %v409
      %v411 = vrot.slane %v406, %v410
      %v413 = vadd.f32 %v404, %v411
      %v414 = vadd.f32 %v405, %v411
      %v415 = vld [vmem:[%s3] sm:$0xff]
      %v416 = vld [vmem:[%s3 + $0x8] sm:$0xff]
      %v417 = vadd.f32 %v413, %v415
      %v418 = vadd.f32 %v414, %v416
      %419 = vst [vmem:[#allocation3] sm:$0xff] %v417
      %420 = vst [vmem:[#allocation3 + $0x8] sm:$0xff] %v418
      %421 = vadd.xlane.f32.xlu0 %v417
      %v422 = vpop.xlane.xlu0 %421
      %423 = vadd.xlane.f32.xlu0 %v418
      %v424 = vpop.xlane.xlu0 %423
      %v425 = vrcp.pop 128.0
      %v426 = vmul.f32 %v422, %v425
      %v427 = vmul.f32 %v424, %v425
      %v428 = vsub.f32 %v417, %v426
      %v429 = vsub.f32 %v418, %v427
      %v430 = vmul.f32 %v428, %v428
      %v431 = vmul.f32 %v429, %v429
      %432 = vadd.xlane.f32.xlu0 %v430
      %v433 = vpop.xlane.xlu0 %432
      %434 = vadd.xlane.f32.xlu0 %v431
      %v435 = vpop.xlane.xlu0 %434
      %v436 = vmul.f32 %v433, %v425
      %v437 = vmul.f32 %v435, %v425
      %v438 = vadd.f32 %v436, 1e-05
      %v439 = vadd.f32 %v437, 1e-05
      %v440 = vrsqrt.pop %v438
      %v441 = vrsqrt.pop %v439
      %v442 = vmul.f32 %v428, %v440
      %v443 = vmul.f32 %v429, %v441
      %v444 = vld [vmem:[%s4] sm:$0x1]
      %v446 = vlaneseq
      %v447 = vshrl.u32 %v446, 7
      %v448 = vsub.s32 0, %v447
      %v449 = vrot.slane %v444, %v448
      %v451 = vmul.f32 %v442, %v449
      %v452 = vmul.f32 %v443, %v449
      %v453 = vld [vmem:[%s5] sm:$0x1]
      %v455 = vlaneseq
      %v456 = vshrl.u32 %v455, 7
      %v457 = vsub.s32 0, %v456
      %v458 = vrot.slane %v453, %v457
      %v460 = vadd.f32 %v451, %v458
      %v461 = vadd.f32 %v452, %v458
      %v462 = vpack.c.bf16 %v461, %v460
      %v464 = vunpack.c.l.b16 %v462
      %v465 = vunpack.c.h.b16 %v462
      %v466 = vpack.c.b16 %v464, %v464
      %v467 = vpack.c.b16 %v465, %v465
      %470 = vst [vmem:[%s7] sm:$0xf] %v466
      %471 = vst [vmem:[%s7 + $0x4] sm:$0xf] %v467
    $region33: #{gpt2_forward.22} parent=1 // pred_fallthru
      _
    // Predicated region
    $region34: #{gpt2_forward.22} parent=1 // pred_check
      _
    $region35: #{gpt2_forward.22} parent=1 // pred_check_branch
      %473 = sbr.rel (0) target = $region37
    $region36: #{gpt2_forward.22} parent=1 // pred_region
      %s475 = ssub.s32 256, 256
      %476 = vsyncadd [#allocation4], %s475
      %s477 = sshll.u32 [#allocation3], 4
      %s478 = int_to_ptr.vmem [resolvable:$true] %s477
      %483 = dma.vmem_to_hbm [thread:$0]  %s478, 256, %s6, [#allocation4], 128, 128, 8
    $region37: #{gpt2_forward.22} parent=1 // pred_fallthru
      _
    // Predicated region
    $region38: #{gpt2_forward.22} parent=1 // pred_check
      _
    $region39: #{gpt2_forward.22} parent=1 // pred_check_branch
      %485 = sbr.rel (0) target = $region41
    $region40: #{gpt2_forward.22} parent=1 // pred_region
      _
    $region41: #{gpt2_forward.22} parent=1 // pred_fallthru
      _
    // Predicated region
    $region42: #{gpt2_forward.22} parent=1 // pred_check
      _
    $region43: #{gpt2_forward.22} parent=1 // pred_check_branch
      %487 = sbr.rel (0) target = $region45
    $region44: #{gpt2_forward.22} parent=1 // pred_region
      %488 = dma.done [#allocation4], 256
    $region45: #{gpt2_forward.22} parent=1 // pred_fallthru
      _
    // Predicated region
    $region46: #{gpt2_forward.22} parent=1 // pred_check
      _
    $region47: #{gpt2_forward.22} parent=1 // pred_check_branch
      %490 = sbr.rel (0) target = $region49
    $region48: #{gpt2_forward.22} parent=1 // pred_region
      _
    $region49: #{gpt2_forward.22} parent=1 // pred_fallthru
      _
    %491 = vsyncpa [#allocation4], 1

// kernel: gpt2_forward.23
$region0: #{gpt2_forward.23}
  #allocation0 [shape = 'u32[]', space=smem, size = 0x4, offset = 0x4, fixed_abs, tag = 'smem constant byte address 0x4 - core index']
  #allocation1 [shape = 'u32[144,128]{1,0:T(1,128)}', space=vmem, size = 0x12000, scoped, tag = 'internal scratch']
  #allocation2 [shape = 'f32[16,512]{1,0:T(8,128)}', space=vmem, size = 0x8000, scoped, tag = 'scratch operand']
  %s0 = inlined_call_operand.vmem [shape: bf16[16,128], index: 0, kind: input, shape index: {}]
  %s1 = inlined_call_operand.vmem [shape: bf16[128,512], index: 1, kind: input, shape index: {}]
  %s2 = inlined_call_operand.vmem [shape: f32[1,512], index: 2, kind: input, shape index: {}]
  %s3 = inlined_call_operand.hbm [shape: f32[16,512], index: 3, kind: output, shape index: {}]
  %s4 = sld [smem:[#allocation0]]
  $region30: #{gpt2_forward.23} parent=0
    _
  %s6 = ssub.s32 1, %s4
  %s7 = scalar_select 0, %s6, %s4
  $region1: #{gpt2_forward.23} parent=0
    #allocation3 [shape = 'u8[32768]{0}', space=vmem, size = 0x8000, scoped, tag = 'output window, operand 0, single buffered']
    #allocation4 [shape = 's32[1]{0}', space=sflag, size = 0x4, scoped, tag = 'scoped memory for gpt2_forward.23']
    %8 = vsyncpa [#allocation4], 0
    // Predicated region
    $region2: #{gpt2_forward.23} parent=1 // pred_check
      _
    $region3: #{gpt2_forward.23} parent=1 // pred_check_branch
      %10 = sbr.rel (0) target = $region5
    $region4: #{gpt2_forward.23} parent=1 // pred_region
      _
    $region5: #{gpt2_forward.23} parent=1 // pred_fallthru
      _
    // Predicated region
    $region6: #{gpt2_forward.23} parent=1 // pred_check
      _
    $region7: #{gpt2_forward.23} parent=1 // pred_check_branch
      %12 = sbr.rel (0) target = $region9
    $region8: #{gpt2_forward.23} parent=1 // pred_region
      _
    $region9: #{gpt2_forward.23} parent=1 // pred_fallthru
      _
    // Predicated region
    $region10: #{gpt2_forward.23} parent=1 // pred_check
      _
    $region11: #{gpt2_forward.23} parent=1 // pred_check_branch
      %14 = sbr.rel (0) target = $region13
    $region12: #{gpt2_forward.23} parent=1 // pred_region
      _
    $region13: #{gpt2_forward.23} parent=1 // pred_fallthru
      _
    %p16 = scmp.eq.s32.totalorder 0, 0
    // Predicated region
    $region14: #{gpt2_forward.23} parent=1 // pred_check
      %p17 = pneg %p16
    $region15: #{gpt2_forward.23} parent=1 // pred_check_branch
      %19 = sbr.rel (%p17) target = $region17
    $region16: #{gpt2_forward.23} parent=1 // pred_region
      %20 = vst [vmem:[#allocation2] sm:$0xff] 0.0
      %21 = vst [vmem:[#allocation2 + $0x8] sm:$0xff] 0.0
      %22 = vst [vmem:[#allocation2 + $0x10] sm:$0xff] 0.0
      %23 = vst [vmem:[#allocation2 + $0x18] sm:$0xff] 0.0
      %24 = vst [vmem:[#allocation2 + $0x20] sm:$0xff] 0.0
      %25 = vst [vmem:[#allocation2 + $0x28] sm:$0xff] 0.0
      %26 = vst [vmem:[#allocation2 + $0x30] sm:$0xff] 0.0
      %27 = vst [vmem:[#allocation2 + $0x38] sm:$0xff] 0.0
    $region17: #{gpt2_forward.23} parent=1 // pred_fallthru
      _
    %v28 = vld [vmem:[#allocation2] sm:$0xff]
    %v29 = vld [vmem:[#allocation2 + $0x8] sm:$0xff]
    %v30 = vld [vmem:[#allocation2 + $0x10] sm:$0xff]
    %v31 = vld [vmem:[#allocation2 + $0x18] sm:$0xff]
    %v32 = vld [vmem:[#allocation2 + $0x20] sm:$0xff]
    %v33 = vld [vmem:[#allocation2 + $0x28] sm:$0xff]
    %v34 = vld [vmem:[#allocation2 + $0x30] sm:$0xff]
    %v35 = vld [vmem:[#allocation2 + $0x38] sm:$0xff]
    %v36 = vld [vmem:[%s0] sm:$0xf]
    %v37 = vld [vmem:[%s0 + $0x4] sm:$0xf]
    %v38 = vld [vmem:[%s1] sm:$0xff]
    %v39 = vld [vmem:[%s1 + $0x8] sm:$0xff]
    %v40 = vld [vmem:[%s1 + $0x10] sm:$0xff]
    %v41 = vld [vmem:[%s1 + $0x18] sm:$0xff]
    %v42 = vld [vmem:[%s1 + $0x20] sm:$0xff]
    %v43 = vld [vmem:[%s1 + $0x28] sm:$0xff]
    %v44 = vld [vmem:[%s1 + $0x30] sm:$0xff]
    %v45 = vld [vmem:[%s1 + $0x38] sm:$0xff]
    %v46 = vld [vmem:[%s1 + $0x40] sm:$0xff]
    %v47 = vld [vmem:[%s1 + $0x48] sm:$0xff]
    %v48 = vld [vmem:[%s1 + $0x50] sm:$0xff]
    %v49 = vld [vmem:[%s1 + $0x58] sm:$0xff]
    %v50 = vld [vmem:[%s1 + $0x60] sm:$0xff]
    %v51 = vld [vmem:[%s1 + $0x68] sm:$0xff]
    %v52 = vld [vmem:[%s1 + $0x70] sm:$0xff]
    %v53 = vld [vmem:[%s1 + $0x78] sm:$0xff]
    %v54 = vld [vmem:[%s1 + $0x80] sm:$0xff]
    %v55 = vld [vmem:[%s1 + $0x88] sm:$0xff]
    %v56 = vld [vmem:[%s1 + $0x90] sm:$0xff]
    %v57 = vld [vmem:[%s1 + $0x98] sm:$0xff]
    %v58 = vld [vmem:[%s1 + $0xa0] sm:$0xff]
    %v59 = vld [vmem:[%s1 + $0xa8] sm:$0xff]
    %v60 = vld [vmem:[%s1 + $0xb0] sm:$0xff]
    %v61 = vld [vmem:[%s1 + $0xb8] sm:$0xff]
    %v62 = vld [vmem:[%s1 + $0xc0] sm:$0xff]
    %v63 = vld [vmem:[%s1 + $0xc8] sm:$0xff]
    %v64 = vld [vmem:[%s1 + $0xd0] sm:$0xff]
    %v65 = vld [vmem:[%s1 + $0xd8] sm:$0xff]
    %v66 = vld [vmem:[%s1 + $0xe0] sm:$0xff]
    %v67 = vld [vmem:[%s1 + $0xe8] sm:$0xff]
    %v68 = vld [vmem:[%s1 + $0xf0] sm:$0xff]
    %v69 = vld [vmem:[%s1 + $0xf8] sm:$0xff]
    %v72 = vunpack.c.l.b16 %v36
    %v73 = vunpack.c.l.b16 %v37
    %v74 = vpack.c.b16 %v73, %v72
    %v108 = vunpack.c.l.b16 %v38
    %v109 = vunpack.c.h.b16 %v38
    %v110 = vunpack.c.l.b16 %v39
    %v111 = vunpack.c.h.b16 %v39
    %v112 = vunpack.c.l.b16 %v40
    %v113 = vunpack.c.h.b16 %v40
    %v114 = vunpack.c.l.b16 %v41
    %v115 = vunpack.c.h.b16 %v41
    %v116 = vunpack.c.l.b16 %v42
    %v117 = vunpack.c.h.b16 %v42
    %v118 = vunpack.c.l.b16 %v43
    %v119 = vunpack.c.h.b16 %v43
    %v120 = vunpack.c.l.b16 %v44
    %v121 = vunpack.c.h.b16 %v44
    %v122 = vunpack.c.l.b16 %v45
    %v123 = vunpack.c.h.b16 %v45
    %v124 = vunpack.c.l.b16 %v46
    %v125 = vunpack.c.h.b16 %v46
    %v126 = vunpack.c.l.b16 %v47
    %v127 = vunpack.c.h.b16 %v47
    %v128 = vunpack.c.l.b16 %v48
    %v129 = vunpack.c.h.b16 %v48
    %v130 = vunpack.c.l.b16 %v49
    %v131 = vunpack.c.h.b16 %v49
    %v132 = vunpack.c.l.b16 %v50
    %v133 = vunpack.c.h.b16 %v50
    %v134 = vunpack.c.l.b16 %v51
    %v135 = vunpack.c.h.b16 %v51
    %v136 = vunpack.c.l.b16 %v52
    %v137 = vunpack.c.h.b16 %v52
    %v138 = vunpack.c.l.b16 %v53
    %v139 = vunpack.c.h.b16 %v53
    %v140 = vunpack.c.l.b16 %v54
    %v141 = vunpack.c.h.b16 %v54
    %v142 = vunpack.c.l.b16 %v55
    %v143 = vunpack.c.h.b16 %v55
    %v144 = vunpack.c.l.b16 %v56
    %v145 = vunpack.c.h.b16 %v56
    %v146 = vunpack.c.l.b16 %v57
    %v147 = vunpack.c.h.b16 %v57
    %v148 = vunpack.c.l.b16 %v58
    %v149 = vunpack.c.h.b16 %v58
    %v150 = vunpack.c.l.b16 %v59
    %v151 = vunpack.c.h.b16 %v59
    %v152 = vunpack.c.l.b16 %v60
    %v153 = vunpack.c.h.b16 %v60
    %v154 = vunpack.c.l.b16 %v61
    %v155 = vunpack.c.h.b16 %v61
    %v156 = vunpack.c.l.b16 %v62
    %v157 = vunpack.c.h.b16 %v62
    %v158 = vunpack.c.l.b16 %v63
    %v159 = vunpack.c.h.b16 %v63
    %v160 = vunpack.c.l.b16 %v64
    %v161 = vunpack.c.h.b16 %v64
    %v162 = vunpack.c.l.b16 %v65
    %v163 = vunpack.c.h.b16 %v65
    %v164 = vunpack.c.l.b16 %v66
    %v165 = vunpack.c.h.b16 %v66
    %v166 = vunpack.c.l.b16 %v67
    %v167 = vunpack.c.h.b16 %v67
    %v168 = vunpack.c.l.b16 %v68
    %v169 = vunpack.c.h.b16 %v68
    %v170 = vunpack.c.l.b16 %v69
    %v171 = vunpack.c.h.b16 %v69
    %v172 = vpack.c.b16 %v112, %v108
    %v173 = vpack.c.b16 %v113, %v109
    %v174 = vpack.c.b16 %v114, %v110
    %v175 = vpack.c.b16 %v115, %v111
    %v176 = vpack.c.b16 %v120, %v116
    %v177 = vpack.c.b16 %v121, %v117
    %v178 = vpack.c.b16 %v122, %v118
    %v179 = vpack.c.b16 %v123, %v119
    %v180 = vpack.c.b16 %v128, %v124
    %v181 = vpack.c.b16 %v129, %v125
    %v182 = vpack.c.b16 %v130, %v126
    %v183 = vpack.c.b16 %v131, %v127
    %v184 = vpack.c.b16 %v136, %v132
    %v185 = vpack.c.b16 %v137, %v133
    %v186 = vpack.c.b16 %v138, %v134
    %v187 = vpack.c.b16 %v139, %v135
    %v188 = vpack.c.b16 %v144, %v140
    %v189 = vpack.c.b16 %v145, %v141
    %v190 = vpack.c.b16 %v146, %v142
    %v191 = vpack.c.b16 %v147, %v143
    %v192 = vpack.c.b16 %v152, %v148
    %v193 = vpack.c.b16 %v153, %v149
    %v194 = vpack.c.b16 %v154, %v150
    %v195 = vpack.c.b16 %v155, %v151
    %v196 = vpack.c.b16 %v160, %v156
    %v197 = vpack.c.b16 %v161, %v157
    %v198 = vpack.c.b16 %v162, %v158
    %v199 = vpack.c.b16 %v163, %v159
    %v200 = vpack.c.b16 %v168, %v164
    %v201 = vpack.c.b16 %v169, %v165
    %v202 = vpack.c.b16 %v170, %v166
    %v203 = vpack.c.b16 %v171, %v167
    %236 = vmatprep.subr.bf16.mxu0 %v173
    %237 = vmatpush1.bf16.msra.mxu0 %v172
    %238 = vmatprep.subr.bf16.mxu0 %v177
    %239 = vmatpush1.bf16.msra.mxu0 %v176
    %240 = vmatprep.subr.bf16.mxu0 %v181
    %241 = vmatpush1.bf16.msra.mxu0 %v180
    %242 = vmatprep.subr.bf16.mxu0 %v185
    %243 = vmatpush1.bf16.msra.mxu0 %v184
    %244 = vmatprep.subr.bf16.mxu0 %v189
    %245 = vmatpush1.bf16.msra.mxu0 %v188
    %246 = vmatprep.subr.bf16.mxu0 %v193
    %247 = vmatpush1.bf16.msra.mxu0 %v192
    %248 = vmatprep.subr.bf16.mxu0 %v197
    %249 = vmatpush1.bf16.msra.mxu0 %v196
    %250 = vmatprep.subr.bf16.mxu0 %v201
    %251 = vmatpush1.bf16.msra.mxu0 %v200
    %252 = vmatprep.subr.bf16.mxu0 0
    %253 = vmatpush1.bf16.msra.mxu0 0
    %254 = vmatprep.subr.bf16.mxu0 0
    %255 = vmatpush1.bf16.msra.mxu0 0
    %256 = vmatprep.subr.bf16.mxu0 0
    %257 = vmatpush1.bf16.msra.mxu0 0
    %258 = vmatprep.subr.bf16.mxu0 0
    %259 = vmatpush1.bf16.msra.mxu0 0
    %260 = vmatprep.subr.bf16.mxu0 0
    %261 = vmatpush1.bf16.msra.mxu0 0
    %262 = vmatprep.subr.bf16.mxu0 0
    %263 = vmatpush1.bf16.msra.mxu0 0
    %264 = vmatprep.subr.bf16.mxu0 0
    %265 = vmatpush1.bf16.msra.mxu0 0
    %266 = vmatprep.subr.bf16.mxu0 0
    %267 = vmatpush1.bf16.msra.mxu0 0
    %268 = vmatprep.mubr.bf16.mxu0 0
    %269 = vmatmul.mubr.bf16.gmra.mrb[0].mxu0 %v74
    %v270 = vpop.f32.mrb[0].mxu0
    %v271 = vadd.f32 0.0, %v270
    %v272 = vpop.f32.mrb[0].mxu0
    %v273 = vadd.f32 0.0, %v272
    %v274 = vpop.f32.mrb[0].mxu0
    %v275 = vadd.f32 0.0, %v274
    %v276 = vpop.f32.mrb[0].mxu0
    %v277 = vadd.f32 0.0, %v276
    %278 = vdwg.mxu0
    %279 = vmatprep.subr.bf16.mxu0 %v175
    %280 = vmatpush1.bf16.msra.mxu0 %v174
    %281 = vmatprep.subr.bf16.mxu0 %v179
    %282 = vmatpush1.bf16.msra.mxu0 %v178
    %283 = vmatprep.subr.bf16.mxu0 %v183
    %284 = vmatpush1.bf16.msra.mxu0 %v182
    %285 = vmatprep.subr.bf16.mxu0 %v187
    %286 = vmatpush1.bf16.msra.mxu0 %v186
    %287 = vmatprep.subr.bf16.mxu0 %v191
    %288 = vmatpush1.bf16.msra.mxu0 %v190
    %289 = vmatprep.subr.bf16.mxu0 %v195
    %290 = vmatpush1.bf16.msra.mxu0 %v194
    %291 = vmatprep.subr.bf16.mxu0 %v199
    %292 = vmatpush1.bf16.msra.mxu0 %v198
    %293 = vmatprep.subr.bf16.mxu0 %v203
    %294 = vmatpush1.bf16.msra.mxu0 %v202
    %295 = vmatprep.subr.bf16.mxu0 0
    %296 = vmatpush1.bf16.msra.mxu0 0
    %297 = vmatprep.subr.bf16.mxu0 0
    %298 = vmatpush1.bf16.msra.mxu0 0
    %299 = vmatprep.subr.bf16.mxu0 0
    %300 = vmatpush1.bf16.msra.mxu0 0
    %301 = vmatprep.subr.bf16.mxu0 0
    %302 = vmatpush1.bf16.msra.mxu0 0
    %303 = vmatprep.subr.bf16.mxu0 0
    %304 = vmatpush1.bf16.msra.mxu0 0
    %305 = vmatprep.subr.bf16.mxu0 0
    %306 = vmatpush1.bf16.msra.mxu0 0
    %307 = vmatprep.subr.bf16.mxu0 0
    %308 = vmatpush1.bf16.msra.mxu0 0
    %309 = vmatprep.subr.bf16.mxu0 0
    %310 = vmatpush1.bf16.msra.mxu0 0
    %311 = vmatprep.mubr.bf16.mxu0 0
    %312 = vmatmul.mubr.bf16.gmra.mrb[0].mxu0 %v74
    %v313 = vpop.f32.mrb[0].mxu0
    %v314 = vadd.f32 0.0, %v313
    %v315 = vpop.f32.mrb[0].mxu0
    %v316 = vadd.f32 0.0, %v315
    %v317 = vpop.f32.mrb[0].mxu0
    %v318 = vadd.f32 0.0, %v317
    %v319 = vpop.f32.mrb[0].mxu0
    %v320 = vadd.f32 0.0, %v319
    %321 = vdwg.mxu0
    %v322 = vadd.f32 %v28, %v271
    %v323 = vadd.f32 %v29, %v273
    %v324 = vadd.f32 %v30, %v314
    %v325 = vadd.f32 %v31, %v316
    %v326 = vadd.f32 %v32, %v275
    %v327 = vadd.f32 %v33, %v277
    %v328 = vadd.f32 %v34, %v318
    %v329 = vadd.f32 %v35, %v320
    %330 = vst [vmem:[#allocation2] sm:$0xff] %v322
    %331 = vst [vmem:[#allocation2 + $0x8] sm:$0xff] %v323
    %332 = vst [vmem:[#allocation2 + $0x10] sm:$0xff] %v324
    %333 = vst [vmem:[#allocation2 + $0x18] sm:$0xff] %v325
    %334 = vst [vmem:[#allocation2 + $0x20] sm:$0xff] %v326
    %335 = vst [vmem:[#allocation2 + $0x28] sm:$0xff] %v327
    %336 = vst [vmem:[#allocation2 + $0x30] sm:$0xff] %v328
    %337 = vst [vmem:[#allocation2 + $0x38] sm:$0xff] %v329
    // Predicated region
    $region18: #{gpt2_forward.23} parent=1 // pred_check
      %p338 = pneg %p16
    $region19: #{gpt2_forward.23} parent=1 // pred_check_branch
      %340 = sbr.rel (%p338) target = $region21
    $region20: #{gpt2_forward.23} parent=1 // pred_region
      %v341 = vld [vmem:[#allocation2] sm:$0xff]
      %v342 = vld [vmem:[#allocation2 + $0x8] sm:$0xff]
      %v343 = vld [vmem:[#allocation2 + $0x10] sm:$0xff]
      %v344 = vld [vmem:[#allocation2 + $0x18] sm:$0xff]
      %v345 = vld [vmem:[#allocation2 + $0x20] sm:$0xff]
      %v346 = vld [vmem:[#allocation2 + $0x28] sm:$0xff]
      %v347 = vld [vmem:[#allocation2 + $0x30] sm:$0xff]
      %v348 = vld [vmem:[#allocation2 + $0x38] sm:$0xff]
      %v349 = vld [vmem:[%s2] sm:$0xf]
      %v351 = vlaneseq
      %v352 = vshrl.u32 %v351, 7
      %v353 = vsub.s32 0, %v352
      %v354 = vrot.slane %v349, %v353
      %v355 = vlaneseq
      %v356 = vshrl.u32 %v355, 7
      %v357 = vsub.s32 1, %v356
      %v358 = vrot.slane %v349, %v357
      %v359 = vlaneseq
      %v360 = vshrl.u32 %v359, 7
      %v361 = vsub.s32 2, %v360
      %v362 = vrot.slane %v349, %v361
      %v363 = vlaneseq
      %v364 = vshrl.u32 %v363, 7
      %v365 = vsub.s32 3, %v364
      %v366 = vrot.slane %v349, %v365
      %v371 = vadd.f32 %v341, %v354
      %v372 = vadd.f32 %v342, %v358
      %v373 = vadd.f32 %v343, %v362
      %v374 = vadd.f32 %v344, %v366
      %v375 = vadd.f32 %v345, %v354
      %v376 = vadd.f32 %v346, %v358
      %v377 = vadd.f32 %v347, %v362
      %v378 = vadd.f32 %v348, %v366
      %379 = vst [vmem:[#allocation3] sm:$0xff] %v371
      %380 = vst [vmem:[#allocation3 + $0x8] sm:$0xff] %v372
      %381 = vst [vmem:[#allocation3 + $0x10] sm:$0xff] %v373
      %382 = vst [vmem:[#allocation3 + $0x18] sm:$0xff] %v374
      %383 = vst [vmem:[#allocation3 + $0x20] sm:$0xff] %v375
      %384 = vst [vmem:[#allocation3 + $0x28] sm:$0xff] %v376
      %385 = vst [vmem:[#allocation3 + $0x30] sm:$0xff] %v377
      %386 = vst [vmem:[#allocation3 + $0x38] sm:$0xff] %v378
    $region21: #{gpt2_forward.23} parent=1 // pred_fallthru
      _
    // Predicated region
    $region22: #{gpt2_forward.23} parent=1 // pred_check
      _
    $region23: #{gpt2_forward.23} parent=1 // pred_check_branch
      %388 = sbr.rel (0) target = $region25
    $region24: #{gpt2_forward.23} parent=1 // pred_region
      %s390 = ssub.s32 1024, 1024
      %391 = vsyncadd [#allocation4], %s390
      %s392 = sshll.u32 [#allocation3], 4
      %s393 = int_to_ptr.vmem [resolvable:$true] %s392
      %398 = dma.vmem_to_hbm [thread:$0]  %s393, 1024, %s3, [#allocation4], 512, 512, 32
    $region25: #{gpt2_forward.23} parent=1 // pred_fallthru
      _
    // Predicated region
    $region26: #{gpt2_forward.23} parent=1 // pred_check
      _
    $region27: #{gpt2_forward.23} parent=1 // pred_check_branch
      %400 = sbr.rel (0) target = $region29
    $region28: #{gpt2_forward.23} parent=1 // pred_region
      %401 = dma.done [#allocation4], 1024
    $region29: #{gpt2_forward.23} parent=1 // pred_fallthru
      _
    %402 = vsyncpa [#allocation4], 1

</llo_original>
